<compile_context>
chip_gen: v7x
topology: tpu7x:2x2x1
jax: 0.10.0
libtpu: 0.0.40
codegen_flags: <defaults>
</compile_context>

<pallas_src>
import jax
import jax.numpy as jnp
from jax import lax
from jax.experimental import pallas as pl
from jax.experimental.pallas import tpu as pltpu


# ----------------------------------------------------------------------------
# Kernel factory (S, H, Sc are static Python ints baked into the closure)
# ----------------------------------------------------------------------------
def _make_kernel(S, H, Sc):
    H2, H3 = 2 * H, 3 * H
    nc = S // Sc                                  # Sc always divides S

    def kernel(x_ref,                             # (S, Bb, E)   bf16
               wi_all_ref,                        # (E, 6H)      bf16  [fwd r|z|n , bwd r|z|n]
               wh_bd_ref,                         # (2H, 6H)     bf16  block-diag [Whh_f^T 0; 0 Whh_b^T]
               gbias_ref,                         # (1, 6H)      f32   (b_ih+b_hh for r,z ; b_in for n)
               bhn_ref,                           # (1, 2H)      f32   [b_hn fwd | b_hn bwd]
               w_word_f_ref, w_word_b_ref,        # (H, 2H)      bf16  split rows of W_word
               b_word_ref,                        # (1, 2H)      f32
               proj_ref,                          # (1, 2H)      f32
               out_ref,                           # (1, Bb, 2H)  f32
               gx_f_scr, gx_b_scr,                # (S, Bb, 3H)  f32   hoisted input projections
               out_f_scr, out_b_scr,              # (S, Bb, H)   bf16  per-step hidden states
               logits_scr):                       # (S, Bb)      f32
        Bb = x_ref.shape[1]
        E = x_ref.shape[2]

        # ---- hoisted input-to-hidden projection, both directions, S-chunked
        def proj_body(c, carry):
            s0 = pl.multiple_of(c * Sc, Sc)
            xc = x_ref[pl.ds(s0, Sc)].reshape(Sc * Bb, E)                 # bf16
            gx = jnp.dot(xc, wi_all_ref[...],
                         preferred_element_type=jnp.float32) + gbias_ref[...]
            gx_f_scr[pl.ds(s0, Sc)] = gx[:, :H3].reshape(Sc, Bb, H3)
            gx_b_scr[pl.ds(s0, Sc)] = gx[:, H3:].reshape(Sc, Bb, H3)
            return carry

        lax.fori_loop(0, nc, proj_body, 0, unroll=(nc <= 4))

        # ---- bidirectional GRU recurrence: ONE fused MXU push per step -----
        bhn = bhn_ref[...]
        bhn_f = bhn[:, :H]
        bhn_b = bhn[:, H:]

        def gru_body(t, h):                       # h: (Bb, 2H) f32 = [h_f | h_b]
            gx_f = gx_f_scr[t]                    # gates for input position t        (Bb, 3H)
            gx_b = gx_b_scr[S - 1 - t]            # gates for input position S-1-t    (Bb, 3H)
            gh = jnp.dot(h.astype(jnp.bfloat16), wh_bd_ref[...],
                         preferred_element_type=jnp.float32)              # (Bb, 6H)
            gh_f = gh[:, :H3]
            gh_b = gh[:, H3:]
            rz_f = jax.nn.sigmoid(gx_f[:, :H2] + gh_f[:, :H2])
            rz_b = jax.nn.sigmoid(gx_b[:, :H2] + gh_b[:, :H2])
            n_f = jnp.tanh(gx_f[:, H2:] + rz_f[:, :H] * (gh_f[:, H2:] + bhn_f))
            n_b = jnp.tanh(gx_b[:, H2:] + rz_b[:, :H] * (gh_b[:, H2:] + bhn_b))
            z_f = rz_f[:, H:]
            z_b = rz_b[:, H:]
            h_f = (1.0 - z_f) * n_f + z_f * h[:, :H]
            h_b = (1.0 - z_b) * n_b + z_b * h[:, H:]
            out_f_scr[t] = h_f.astype(jnp.bfloat16)
            out_b_scr[S - 1 - t] = h_b.astype(jnp.bfloat16)
            return jnp.concatenate([h_f, h_b], axis=-1)

        h0 = jnp.zeros((Bb, H2), jnp.float32)
        lax.fori_loop(0, S, gru_body, h0, unroll=(S if S <= 16 else 8))

        # ---- attention logits: tanh([h_f|h_b] @ W + b) . proj, S-chunked ---
        def logit_body(c, carry):
            s0 = pl.multiple_of(c * Sc, Sc)
            hf = out_f_scr[pl.ds(s0, Sc)].reshape(Sc * Bb, H)             # bf16
            hb = out_b_scr[pl.ds(s0, Sc)].reshape(Sc * Bb, H)
            pre = (jnp.dot(hf, w_word_f_ref[...],
                           preferred_element_type=jnp.float32)
                   + jnp.dot(hb, w_word_b_ref[...],
                             preferred_element_type=jnp.float32)
                   + b_word_ref[...])
            squish = jnp.tanh(pre)                                        # (Sc*Bb, 2H)
            logits_scr[pl.ds(s0, Sc)] = jnp.sum(
                squish * proj_ref[...], axis=-1).reshape(Sc, Bb)
            return carry

        lax.fori_loop(0, nc, logit_body, 0, unroll=(nc <= 4))

        # ---- softmax over the sequence axis (small (S, Bb) tensor) ---------
        logits = logits_scr[...]
        m = jnp.max(logits, axis=0, keepdims=True)
        e = jnp.exp(logits - m)
        denom = jnp.sum(e, axis=0, keepdims=True)
        logits_scr[...] = e * pl.reciprocal(denom, approx=True)           # alpha (S, Bb)

        # ---- attention-weighted sum of the GRU outputs, S-chunked ----------
        def wsum_body(c, acc):
            vec_f, vec_b = acc
            s0 = pl.multiple_of(c * Sc, Sc)
            a = logits_scr[pl.ds(s0, Sc)][:, :, None]                     # (Sc, Bb, 1)
            hf = out_f_scr[pl.ds(s0, Sc)].astype(jnp.float32)
            hb = out_b_scr[pl.ds(s0, Sc)].astype(jnp.float32)
            vec_f = vec_f + jnp.sum(hf * a, axis=0)
            vec_b = vec_b + jnp.sum(hb * a, axis=0)
            return (vec_f, vec_b)

        zero_vec = jnp.zeros((Bb, H), jnp.float32)
        vec_f, vec_b = lax.fori_loop(0, nc, wsum_body, (zero_vec, zero_vec),
                                     unroll=(nc <= 4))
        out_ref[0, :, :H] = vec_f
        out_ref[0, :, H:] = vec_b

    return kernel


# ----------------------------------------------------------------------------
# Static tiling plan (chip-aware VMEM budget)
# ----------------------------------------------------------------------------
def _largest_divisor_leq(n, cap):
    cap = max(1, min(n, int(cap)))
    for d in range(cap, 0, -1):
        if n % d == 0:
            return d
    return 1


def _plan_tiling(S, B, E, H):
    try:
        info = pltpu.get_tpu_info()
        vmem_cap = int(getattr(info, "vmem_capacity_bytes", 64 * 1024 * 1024))
    except Exception:
        vmem_cap = 64 * 1024 * 1024                     # conservative: safe on every gen
    budget = (vmem_cap * 25) // 32                      # ~100 MiB @128, ~50 MiB @64
    # a 64 MiB-per-core part is the 2-TensorCore generation -> want >=2 tiles
    two_core_hint = vmem_cap <= 80 * 1024 * 1024

    # fixed weight bytes (bf16 mats + f32 bias rows), x2 for pipeline buffers
    fixed = 2 * (12 * E * H + 32 * H * H + 48 * H)
    # per batch-row bytes: gx f32 (2*3H*4) + out bf16 (2*H*2) + bf16 input x2 buffers
    per_row = S * (24 * H + 4 * H + 4 * E) + 64 * H
    slack = 4 * 1024 * 1024
    avail = max(8 * per_row, budget - fixed - slack)

    rows_fit = max(8, int(avail // per_row))
    two_tiles = two_core_hint and B >= 16
    if B <= rows_fit and not two_tiles:
        block_b = B                                     # one full-batch tile
    else:
        bb = min(B, rows_fit)
        if two_tiles:
            bb = min(bb, ((-(-B // 2) + 7) // 8) * 8)   # ~half the batch, mult of 8
        block_b = max(8, (bb // 8) * 8)
        block_b = min(block_b, max(8, (B // 8) * 8))

    # S-chunk for the projection / attention passes (must divide S)
    chunk_bytes = 2 * 1024 * 1024
    row_chunk_bytes = max(1, block_b * (24 * H + 2 * E + 8 * H))
    Sc = _largest_divisor_leq(S, chunk_bytes // row_chunk_bytes)

    est_use = fixed + block_b * per_row + slack
    vmem_limit = int(min(max(vmem_cap - 8 * 1024 * 1024, 32 * 1024 * 1024),
                         max(budget, est_use)))
    return int(block_b), int(Sc), vmem_limit


# ----------------------------------------------------------------------------
# Wrapper: parameter re-layout (once) + pallas_call
# ----------------------------------------------------------------------------
@jax.jit
def attention_word_rnn(embedded,
                       w_ih_f, w_hh_f, b_ih_f, b_hh_f,
                       w_ih_b, w_hh_b, b_ih_b, b_hh_b,
                       w_word, b_word, proj):
    S, B, E = embedded.shape
    H = w_hh_f.shape[1]
    H2, H3, H6 = 2 * H, 3 * H, 6 * H

    block_b, Sc, vmem_limit = _plan_tiling(S, B, E, H)

    # ---- parameter re-layout ------------------------------------------------
    wi_all = jnp.concatenate([w_ih_f.T, w_ih_b.T], axis=1).astype(jnp.bfloat16)   # (E, 6H)

    zeros_h3 = jnp.zeros((H, H3), w_hh_f.dtype)
    wh_bd = jnp.concatenate(
        [jnp.concatenate([w_hh_f.T, zeros_h3], axis=1),
         jnp.concatenate([zeros_h3, w_hh_b.T], axis=1)],
        axis=0).astype(jnp.bfloat16)                                              # (2H, 6H)

    def _gate_bias(b_ih, b_hh):
        # fold b_ih + b_hh for r,z ; n keeps only b_in (b_hn is gated by r)
        return jnp.concatenate([b_ih[:H2] + b_hh[:H2], b_ih[H2:]])

    gbias = jnp.concatenate([_gate_bias(b_ih_f, b_hh_f),
                             _gate_bias(b_ih_b, b_hh_b)]).reshape(1, H6)
    gbias = gbias.astype(jnp.float32)
    bhn = jnp.concatenate([b_hh_f[H2:], b_hh_b[H2:]]).reshape(1, H2).astype(jnp.float32)

    w_word_f = w_word[:H].astype(jnp.bfloat16)                                    # (H, 2H)
    w_word_b = w_word[H:].astype(jnp.bfloat16)
    b_word2 = b_word.reshape(1, H2).astype(jnp.float32)
    proj2 = proj.reshape(1, H2).astype(jnp.float32)

    x = embedded if embedded.dtype == jnp.bfloat16 else embedded.astype(jnp.bfloat16)

    grid = (pl.cdiv(B, block_b),)

    def _w(shape):
        return pl.BlockSpec(shape, lambda b: (0,) * len(shape))

    kernel = _make_kernel(S, H, Sc)

    return pl.pallas_call(
        kernel,
        out_shape=jax.ShapeDtypeStruct((1, B, H2), jnp.float32),
        grid=grid,
        in_specs=[
            pl.BlockSpec((S, block_b, E), lambda b: (0, b, 0)),    # embedded batch tile
            _w((E, H6)),                                           # wi_all
            _w((H2, H6)),                                          # wh_bd (block-diag)
            _w((1, H6)),                                           # gbias
            _w((1, H2)),                                           # bhn
            _w((H, H2)), _w((H, H2)),                              # w_word halves
            _w((1, H2)),                                           # b_word
            _w((1, H2)),                                           # proj (row)
        ],
        out_specs=pl.BlockSpec((1, block_b, H2), lambda b: (0, b, 0)),
        scratch_shapes=[pltpu.VMEM((S, block_b, H3), jnp.float32),
                        pltpu.VMEM((S, block_b, H3), jnp.float32),
                        pltpu.VMEM((S, block_b, H), jnp.bfloat16),
                        pltpu.VMEM((S, block_b, H), jnp.bfloat16),
                        pltpu.VMEM((S, block_b), jnp.float32)],
        compiler_params=pltpu.CompilerParams(
            dimension_semantics=("parallel",),
            vmem_limit_bytes=vmem_limit),
    )(x, wi_all, wh_bd, gbias, bhn, w_word_f, w_word_b, b_word2, proj2)


# ----------------------------------------------------------------------------
# Pure-JAX f32 reference (mirrors the PyTorch forward) for verification
# ----------------------------------------------------------------------------
def reference_forward(emb,
                      w_ih_f, w_hh_f, b_ih_f, b_hh_f,
                      w_ih_b, w_hh_b, b_ih_b, b_hh_b,
                      w_word, b_word, proj):
    H = w_hh_f.shape[1]

    def gru_dir(x, wih, whh, bih, bhh):
        def step(h, x_t):
            gx = x_t @ wih.T + bih
            gh = h @ whh.T + bhh
            r = jax.nn.sigmoid(gx[:, :H] + gh[:, :H])
            z = jax.nn.sigmoid(gx[:, H:2 * H] + gh[:, H:2 * H])
            n = jnp.tanh(gx[:, 2 * H:] + r * gh[:, 2 * H:])
            h_new = (1.0 - z) * n + z * h
            return h_new, h_new
        h0 = jnp.zeros((x.shape[1], H), jnp.float32)
        return lax.scan(step, h0, x)[1]

    out_f = gru_dir(emb, w_ih_f, w_hh_f, b_ih_f, b_hh_f)
    out_b = gru_dir(emb[::-1], w_ih_b, w_hh_b, b_ih_b, b_hh_b)[::-1]
    out = jnp.concatenate([out_f, out_b], axis=-1)           # (S, B, 2H)
    squish = jnp.tanh(out @ w_word + b_word)                 # (S, B, 2H)
    logits = (squish @ proj)[..., 0]                         # (S, B)
    alpha = jax.nn.softmax(logits, axis=0)                   # softmax over seq
    return jnp.sum(out * alpha[:, :, None], axis=0)[None]    # (1, B, 2H)


# ----------------------------------------------------------------------------
if __name__ == "__main__":
    # small shapes consistent with the module
    num_vocab, embed_size, hidden = 50, 32, 32   # word_gru_hidden = 32, bidirectional
    S, B = 8, 4                                  # seq_len, batch

    key = jax.random.PRNGKey(0)
    ks = jax.random.split(key, 16)

    lookup_table = 0.1 * jax.random.normal(ks[0], (num_vocab, embed_size), jnp.float32)
    token_ids = jax.random.randint(ks[1], (S, B), 0, num_vocab)

    gscale = 1.0 / jnp.sqrt(jnp.float32(hidden))

    def gu(k, shape):
        return jax.random.uniform(k, shape, jnp.float32, -gscale, gscale)

    # GRU parameters (PyTorch layout): forward and backward directions
    w_ih_f = gu(ks[2], (3 * hidden, embed_size))
    w_hh_f = gu(ks[3], (3 * hidden, hidden))
    b_ih_f = gu(ks[4], (3 * hidden,))
    b_hh_f = gu(ks[5], (3 * hidden,))
    w_ih_b = gu(ks[6], (3 * hidden, embed_size))
    w_hh_b = gu(ks[7], (3 * hidden, hidden))
    b_ih_b = gu(ks[8], (3 * hidden,))
    b_hh_b = gu(ks[9], (3 * hidden,))

    # attention parameters (uniform(-0.01, 0.01) as in the module __init__)
    w_word = jax.random.uniform(ks[10], (2 * hidden, 2 * hidden), jnp.float32, -0.01, 0.01)
    b_word = jax.random.uniform(ks[11], (2 * hidden,), jnp.float32, -0.01, 0.01)
    proj = jax.random.uniform(ks[12], (2 * hidden, 1), jnp.float32, -0.01, 0.01)

    # TODO(synk): embedding lookup (gather) kept as plain-JAX glue
    embedded_bf16 = lookup_table.astype(jnp.bfloat16)[token_ids]   # kernel input (bf16 gather)
    embedded_f32 = lookup_table[token_ids]                         # reference input (f32)

    out = attention_word_rnn(embedded_bf16,
                             w_ih_f, w_hh_f, b_ih_f, b_hh_f,
                             w_ih_b, w_hh_b, b_ih_b, b_hh_b,
                             w_word, b_word, proj)
    out = jax.block_until_ready(out)

    ref = reference_forward(embedded_f32,
                            w_ih_f, w_hh_f, b_ih_f, b_hh_f,
                            w_ih_b, w_hh_b, b_ih_b, b_hh_b,
                            w_word, b_word, proj)

    assert out.shape == (1, B, 2 * hidden), out.shape
    # bf16 MXU matmuls / bf16 hidden-state scratch -> slightly looser tolerance
    assert jnp.allclose(out, ref, atol=2e-2, rtol=2e-2), (out, ref)
    print("KERNEL_OK")
</pallas_src>

<mosaic_0001>
module attributes {stable_mosaic.version = 11 : i64} {
  func.func @kernel(%arg0: i32, %arg1: memref<8x4x32xbf16, #tpu.memory_space<vmem>>, %arg2: memref<32x192xbf16, #tpu.memory_space<vmem>>, %arg3: memref<64x192xbf16, #tpu.memory_space<vmem>>, %arg4: memref<1x192xf32, #tpu.memory_space<vmem>>, %arg5: memref<1x64xf32, #tpu.memory_space<vmem>>, %arg6: memref<32x64xbf16, #tpu.memory_space<vmem>>, %arg7: memref<32x64xbf16, #tpu.memory_space<vmem>>, %arg8: memref<1x64xf32, #tpu.memory_space<vmem>>, %arg9: memref<1x64xf32, #tpu.memory_space<vmem>>, %arg10: memref<1x4x64xf32, #tpu.memory_space<vmem>>, %arg11: memref<8x4x96xf32, #tpu.memory_space<vmem>>, %arg12: memref<8x4x96xf32, #tpu.memory_space<vmem>>, %arg13: memref<8x4x32xbf16, #tpu.memory_space<vmem>>, %arg14: memref<8x4x32xbf16, #tpu.memory_space<vmem>>, %arg15: memref<8x4xf32, #tpu.memory_space<vmem>>) attributes {dimension_semantics = [#tpu.dimension_semantics<parallel>], iteration_bounds = array<i64: 1>, scalar_prefetch = 0 : i64, scratch_operands = 5 : i64, tpu.core_type = #tpu.core_type<tc>, window_params = [{transform_indices = @transform_0, window_bounds = array<i64: 8, 4, 32>}, {pipeline_mode = #tpu.pipeline_mode<synchronous>, transform_indices = @transform_1, window_bounds = array<i64: 32, 192>}, {pipeline_mode = #tpu.pipeline_mode<synchronous>, transform_indices = @transform_2, window_bounds = array<i64: 64, 192>}, {pipeline_mode = #tpu.pipeline_mode<synchronous>, transform_indices = @transform_3, window_bounds = array<i64: 1, 192>}, {pipeline_mode = #tpu.pipeline_mode<synchronous>, transform_indices = @transform_4, window_bounds = array<i64: 1, 64>}, {pipeline_mode = #tpu.pipeline_mode<synchronous>, transform_indices = @transform_5, window_bounds = array<i64: 32, 64>}, {pipeline_mode = #tpu.pipeline_mode<synchronous>, transform_indices = @transform_6, window_bounds = array<i64: 32, 64>}, {pipeline_mode = #tpu.pipeline_mode<synchronous>, transform_indices = @transform_7, window_bounds = array<i64: 1, 64>}, {pipeline_mode = #tpu.pipeline_mode<synchronous>, transform_indices = @transform_8, window_bounds = array<i64: 1, 64>}, {transform_indices = @transform_9, window_bounds = array<i64: 1, 4, 64>}]} {
    %c0_i32 = arith.constant 0 : i32
    %c8_i32 = arith.constant 8 : i32
    %0 = arith.muli %c0_i32, %c8_i32 : i32
    %1 = tpu.assume_multiple %0, 8 : i32
    %2 = arith.index_cast %1 : i32 to index
    %c0 = arith.constant 0 : index
    %c0_0 = arith.constant 0 : index
    %3 = vector.load %arg1[%2, %c0, %c0_0] : memref<8x4x32xbf16, #tpu.memory_space<vmem>>, vector<8x4x32xbf16>
    %4 = vector.shape_cast %3 : vector<8x4x32xbf16> to vector<32x32xbf16>
    %c0_1 = arith.constant 0 : index
    %c0_2 = arith.constant 0 : index
    %5 = vector.load %arg2[%c0_1, %c0_2] : memref<32x192xbf16, #tpu.memory_space<vmem>>, vector<32x192xbf16>
    %cst = arith.constant dense<0.000000e+00> : vector<32x192xf32>
    %6 = tpu.matmul %4, %5, %cst {dimension_numbers = #tpu.dot_dimension_numbers<[1], [0], [0], [1], [0, 0, 1, 1], [], []>} : vector<32x32xbf16>, vector<32x192xbf16>, vector<32x192xf32> -> vector<32x192xf32>
    %c0_3 = arith.constant 0 : index
    %c0_4 = arith.constant 0 : index
    %7 = vector.load %arg4[%c0_3, %c0_4] : memref<1x192xf32, #tpu.memory_space<vmem>>, vector<1x192xf32>
    %8 = vector.broadcast %7 : vector<1x192xf32> to vector<32x192xf32>
    %9 = arith.addf %6, %8 : vector<32x192xf32>
    %10 = vector.extract_strided_slice %9 {offsets = [0, 0], sizes = [32, 96], strides = [1, 1]} : vector<32x192xf32> to vector<32x96xf32>
    %11 = vector.shape_cast %10 : vector<32x96xf32> to vector<8x4x96xf32>
    %12 = arith.index_cast %1 : i32 to index
    %c0_5 = arith.constant 0 : index
    %c0_6 = arith.constant 0 : index
    %13 = vector.load %arg11[%12, %c0_5, %c0_6] : memref<8x4x96xf32, #tpu.memory_space<vmem>>, vector<8x4x96xf32>
    tpu.vector_store %arg11[%12, %c0_5, %c0_6], %11 {strides = array<i32>} : memref<8x4x96xf32, #tpu.memory_space<vmem>>, vector<8x4x96xf32>,
    %14 = vector.extract_strided_slice %9 {offsets = [0, 96], sizes = [32, 96], strides = [1, 1]} : vector<32x192xf32> to vector<32x96xf32>
    %15 = vector.shape_cast %14 : vector<32x96xf32> to vector<8x4x96xf32>
    %16 = arith.index_cast %1 : i32 to index
    %c0_7 = arith.constant 0 : index
    %c0_8 = arith.constant 0 : index
    %17 = vector.load %arg12[%16, %c0_7, %c0_8] : memref<8x4x96xf32, #tpu.memory_space<vmem>>, vector<8x4x96xf32>
    tpu.vector_store %arg12[%16, %c0_7, %c0_8], %15 {strides = array<i32>} : memref<8x4x96xf32, #tpu.memory_space<vmem>>, vector<8x4x96xf32>,
    %c1_i32 = arith.constant 1 : i32
    %c0_9 = arith.constant 0 : index
    %c0_10 = arith.constant 0 : index
    %18 = vector.load %arg5[%c0_9, %c0_10] : memref<1x64xf32, #tpu.memory_space<vmem>>, vector<1x64xf32>
    %19 = vector.extract_strided_slice %18 {offsets = [0, 0], sizes = [1, 32], strides = [1, 1]} : vector<1x64xf32> to vector<1x32xf32>
    %20 = vector.extract_strided_slice %18 {offsets = [0, 32], sizes = [1, 32], strides = [1, 1]} : vector<1x64xf32> to vector<1x32xf32>
    %cst_11 = arith.constant 0.000000e+00 : f32
    %21 = vector.broadcast %cst_11 : f32 to vector<4x64xf32>
    %c0_i32_12 = arith.constant 0 : i32
    %22 = arith.index_cast %c0_i32_12 : i32 to index
    %c0_13 = arith.constant 0 : index
    %c0_14 = arith.constant 0 : index
    %23 = vector.load %arg11[%22, %c0_13, %c0_14] : memref<8x4x96xf32, #tpu.memory_space<vmem>>, vector<1x4x96xf32>
    %24 = vector.shape_cast %23 : vector<1x4x96xf32> to vector<4x96xf32>
    %c7_i32 = arith.constant 7 : i32
    %25 = arith.subi %c7_i32, %c0_i32_12 : i32
    %26 = arith.index_cast %25 : i32 to index
    %c0_15 = arith.constant 0 : index
    %c0_16 = arith.constant 0 : index
    %27 = vector.load %arg12[%26, %c0_15, %c0_16] : memref<8x4x96xf32, #tpu.memory_space<vmem>>, vector<1x4x96xf32>
    %28 = vector.shape_cast %27 : vector<1x4x96xf32> to vector<4x96xf32>
    %29 = arith.truncf %21 : vector<4x64xf32> to vector<4x64xbf16>
    %c0_17 = arith.constant 0 : index
    %c0_18 = arith.constant 0 : index
    %30 = vector.load %arg3[%c0_17, %c0_18] : memref<64x192xbf16, #tpu.memory_space<vmem>>, vector<64x192xbf16>
    %cst_19 = arith.constant dense<0.000000e+00> : vector<4x192xf32>
    %31 = tpu.matmul %29, %30, %cst_19 {dimension_numbers = #tpu.dot_dimension_numbers<[1], [0], [0], [1], [0, 0, 1, 1], [], []>} : vector<4x64xbf16>, vector<64x192xbf16>, vector<4x192xf32> -> vector<4x192xf32>
    %32 = vector.extract_strided_slice %31 {offsets = [0, 0], sizes = [4, 96], strides = [1, 1]} : vector<4x192xf32> to vector<4x96xf32>
    %33 = vector.extract_strided_slice %31 {offsets = [0, 96], sizes = [4, 96], strides = [1, 1]} : vector<4x192xf32> to vector<4x96xf32>
    %34 = vector.extract_strided_slice %24 {offsets = [0, 0], sizes = [4, 64], strides = [1, 1]} : vector<4x96xf32> to vector<4x64xf32>
    %35 = vector.extract_strided_slice %32 {offsets = [0, 0], sizes = [4, 64], strides = [1, 1]} : vector<4x96xf32> to vector<4x64xf32>
    %36 = arith.addf %34, %35 : vector<4x64xf32>
    %37 = arith.negf %36 : vector<4x64xf32>
    %38 = math.exp %37 : vector<4x64xf32>
    %cst_20 = arith.constant 1.000000e+00 : f32
    %39 = vector.broadcast %cst_20 : f32 to vector<4x64xf32>
    %40 = arith.addf %39, %38 : vector<4x64xf32>
    %41 = arith.divf %39, %40 : vector<4x64xf32>
    %42 = vector.extract_strided_slice %28 {offsets = [0, 0], sizes = [4, 64], strides = [1, 1]} : vector<4x96xf32> to vector<4x64xf32>
    %43 = vector.extract_strided_slice %33 {offsets = [0, 0], sizes = [4, 64], strides = [1, 1]} : vector<4x96xf32> to vector<4x64xf32>
    %44 = arith.addf %42, %43 : vector<4x64xf32>
    %45 = arith.negf %44 : vector<4x64xf32>
    %46 = math.exp %45 : vector<4x64xf32>
    %cst_21 = arith.constant 1.000000e+00 : f32
    %47 = vector.broadcast %cst_21 : f32 to vector<4x64xf32>
    %48 = arith.addf %47, %46 : vector<4x64xf32>
    %49 = arith.divf %47, %48 : vector<4x64xf32>
    %50 = vector.extract_strided_slice %24 {offsets = [0, 64], sizes = [4, 32], strides = [1, 1]} : vector<4x96xf32> to vector<4x32xf32>
    %51 = vector.extract_strided_slice %41 {offsets = [0, 0], sizes = [4, 32], strides = [1, 1]} : vector<4x64xf32> to vector<4x32xf32>
    %52 = vector.extract_strided_slice %32 {offsets = [0, 64], sizes = [4, 32], strides = [1, 1]} : vector<4x96xf32> to vector<4x32xf32>
    %53 = vector.broadcast %19 : vector<1x32xf32> to vector<4x32xf32>
    %54 = arith.addf %52, %53 : vector<4x32xf32>
    %55 = arith.mulf %51, %54 : vector<4x32xf32>
    %56 = arith.addf %50, %55 : vector<4x32xf32>
    %57 = math.tanh %56 : vector<4x32xf32>
    %58 = vector.extract_strided_slice %28 {offsets = [0, 64], sizes = [4, 32], strides = [1, 1]} : vector<4x96xf32> to vector<4x32xf32>
    %59 = vector.extract_strided_slice %49 {offsets = [0, 0], sizes = [4, 32], strides = [1, 1]} : vector<4x64xf32> to vector<4x32xf32>
    %60 = vector.extract_strided_slice %33 {offsets = [0, 64], sizes = [4, 32], strides = [1, 1]} : vector<4x96xf32> to vector<4x32xf32>
    %61 = vector.broadcast %20 : vector<1x32xf32> to vector<4x32xf32>
    %62 = arith.addf %60, %61 : vector<4x32xf32>
    %63 = arith.mulf %59, %62 : vector<4x32xf32>
    %64 = arith.addf %58, %63 : vector<4x32xf32>
    %65 = math.tanh %64 : vector<4x32xf32>
    %66 = vector.extract_strided_slice %41 {offsets = [0, 32], sizes = [4, 32], strides = [1, 1]} : vector<4x64xf32> to vector<4x32xf32>
    %67 = vector.extract_strided_slice %49 {offsets = [0, 32], sizes = [4, 32], strides = [1, 1]} : vector<4x64xf32> to vector<4x32xf32>
    %cst_22 = arith.constant 1.000000e+00 : f32
    %68 = vector.broadcast %cst_22 : f32 to vector<4x32xf32>
    %69 = arith.subf %68, %66 : vector<4x32xf32>
    %70 = arith.mulf %69, %57 : vector<4x32xf32>
    %71 = vector.extract_strided_slice %21 {offsets = [0, 0], sizes = [4, 32], strides = [1, 1]} : vector<4x64xf32> to vector<4x32xf32>
    %72 = arith.mulf %66, %71 : vector<4x32xf32>
    %73 = arith.addf %70, %72 : vector<4x32xf32>
    %cst_23 = arith.constant 1.000000e+00 : f32
    %74 = vector.broadcast %cst_23 : f32 to vector<4x32xf32>
    %75 = arith.subf %74, %67 : vector<4x32xf32>
    %76 = arith.mulf %75, %65 : vector<4x32xf32>
    %77 = vector.extract_strided_slice %21 {offsets = [0, 32], sizes = [4, 32], strides = [1, 1]} : vector<4x64xf32> to vector<4x32xf32>
    %78 = arith.mulf %67, %77 : vector<4x32xf32>
    %79 = arith.addf %76, %78 : vector<4x32xf32>
    %80 = arith.truncf %73 : vector<4x32xf32> to vector<4x32xbf16>
    %81 = arith.index_cast %c0_i32_12 : i32 to index
    %c0_24 = arith.constant 0 : index
    %c0_25 = arith.constant 0 : index
    %82 = vector.load %arg13[%81, %c0_24, %c0_25] : memref<8x4x32xbf16, #tpu.memory_space<vmem>>, vector<1x4x32xbf16>
    %83 = vector.shape_cast %82 : vector<1x4x32xbf16> to vector<4x32xbf16>
    %84 = vector.shape_cast %80 : vector<4x32xbf16> to vector<1x4x32xbf16>
    tpu.vector_store %arg13[%81, %c0_24, %c0_25], %84 {strides = array<i32>} : memref<8x4x32xbf16, #tpu.memory_space<vmem>>, vector<1x4x32xbf16>,
    %85 = arith.truncf %79 : vector<4x32xf32> to vector<4x32xbf16>
    %c7_i32_26 = arith.constant 7 : i32
    %86 = arith.subi %c7_i32_26, %c0_i32_12 : i32
    %87 = arith.index_cast %86 : i32 to index
    %c0_27 = arith.constant 0 : index
    %c0_28 = arith.constant 0 : index
    %88 = vector.load %arg14[%87, %c0_27, %c0_28] : memref<8x4x32xbf16, #tpu.memory_space<vmem>>, vector<1x4x32xbf16>
    %89 = vector.shape_cast %88 : vector<1x4x32xbf16> to vector<4x32xbf16>
    %90 = vector.shape_cast %85 : vector<4x32xbf16> to vector<1x4x32xbf16>
    tpu.vector_store %arg14[%87, %c0_27, %c0_28], %90 {strides = array<i32>} : memref<8x4x32xbf16, #tpu.memory_space<vmem>>, vector<1x4x32xbf16>,
    %91 = tpu.concatenate %73, %79 in 1 : vector<4x32xf32>, vector<4x32xf32> -> vector<4x64xf32>
    %c1_i32_29 = arith.constant 1 : i32
    %92 = arith.index_cast %c1_i32_29 : i32 to index
    %c0_30 = arith.constant 0 : index
    %c0_31 = arith.constant 0 : index
    %93 = vector.load %arg11[%92, %c0_30, %c0_31] : memref<8x4x96xf32, #tpu.memory_space<vmem>>, vector<1x4x96xf32>
    %94 = vector.shape_cast %93 : vector<1x4x96xf32> to vector<4x96xf32>
    %c7_i32_32 = arith.constant 7 : i32
    %95 = arith.subi %c7_i32_32, %c1_i32_29 : i32
    %96 = arith.index_cast %95 : i32 to index
    %c0_33 = arith.constant 0 : index
    %c0_34 = arith.constant 0 : index
    %97 = vector.load %arg12[%96, %c0_33, %c0_34] : memref<8x4x96xf32, #tpu.memory_space<vmem>>, vector<1x4x96xf32>
    %98 = vector.shape_cast %97 : vector<1x4x96xf32> to vector<4x96xf32>
    %99 = arith.truncf %91 : vector<4x64xf32> to vector<4x64xbf16>
    %c0_35 = arith.constant 0 : index
    %c0_36 = arith.constant 0 : index
    %100 = vector.load %arg3[%c0_35, %c0_36] : memref<64x192xbf16, #tpu.memory_space<vmem>>, vector<64x192xbf16>
    %cst_37 = arith.constant dense<0.000000e+00> : vector<4x192xf32>
    %101 = tpu.matmul %99, %100, %cst_37 {dimension_numbers = #tpu.dot_dimension_numbers<[1], [0], [0], [1], [0, 0, 1, 1], [], []>} : vector<4x64xbf16>, vector<64x192xbf16>, vector<4x192xf32> -> vector<4x192xf32>
    %102 = vector.extract_strided_slice %101 {offsets = [0, 0], sizes = [4, 96], strides = [1, 1]} : vector<4x192xf32> to vector<4x96xf32>
    %103 = vector.extract_strided_slice %101 {offsets = [0, 96], sizes = [4, 96], strides = [1, 1]} : vector<4x192xf32> to vector<4x96xf32>
    %104 = vector.extract_strided_slice %94 {offsets = [0, 0], sizes = [4, 64], strides = [1, 1]} : vector<4x96xf32> to vector<4x64xf32>
    %105 = vector.extract_strided_slice %102 {offsets = [0, 0], sizes = [4, 64], strides = [1, 1]} : vector<4x96xf32> to vector<4x64xf32>
    %106 = arith.addf %104, %105 : vector<4x64xf32>
    %107 = arith.negf %106 : vector<4x64xf32>
    %108 = math.exp %107 : vector<4x64xf32>
    %cst_38 = arith.constant 1.000000e+00 : f32
    %109 = vector.broadcast %cst_38 : f32 to vector<4x64xf32>
    %110 = arith.addf %109, %108 : vector<4x64xf32>
    %111 = arith.divf %109, %110 : vector<4x64xf32>
    %112 = vector.extract_strided_slice %98 {offsets = [0, 0], sizes = [4, 64], strides = [1, 1]} : vector<4x96xf32> to vector<4x64xf32>
    %113 = vector.extract_strided_slice %103 {offsets = [0, 0], sizes = [4, 64], strides = [1, 1]} : vector<4x96xf32> to vector<4x64xf32>
    %114 = arith.addf %112, %113 : vector<4x64xf32>
    %115 = arith.negf %114 : vector<4x64xf32>
    %116 = math.exp %115 : vector<4x64xf32>
    %cst_39 = arith.constant 1.000000e+00 : f32
    %117 = vector.broadcast %cst_39 : f32 to vector<4x64xf32>
    %118 = arith.addf %117, %116 : vector<4x64xf32>
    %119 = arith.divf %117, %118 : vector<4x64xf32>
    %120 = vector.extract_strided_slice %94 {offsets = [0, 64], sizes = [4, 32], strides = [1, 1]} : vector<4x96xf32> to vector<4x32xf32>
    %121 = vector.extract_strided_slice %111 {offsets = [0, 0], sizes = [4, 32], strides = [1, 1]} : vector<4x64xf32> to vector<4x32xf32>
    %122 = vector.extract_strided_slice %102 {offsets = [0, 64], sizes = [4, 32], strides = [1, 1]} : vector<4x96xf32> to vector<4x32xf32>
    %123 = vector.broadcast %19 : vector<1x32xf32> to vector<4x32xf32>
    %124 = arith.addf %122, %123 : vector<4x32xf32>
    %125 = arith.mulf %121, %124 : vector<4x32xf32>
    %126 = arith.addf %120, %125 : vector<4x32xf32>
    %127 = math.tanh %126 : vector<4x32xf32>
    %128 = vector.extract_strided_slice %98 {offsets = [0, 64], sizes = [4, 32], strides = [1, 1]} : vector<4x96xf32> to vector<4x32xf32>
    %129 = vector.extract_strided_slice %119 {offsets = [0, 0], sizes = [4, 32], strides = [1, 1]} : vector<4x64xf32> to vector<4x32xf32>
    %130 = vector.extract_strided_slice %103 {offsets = [0, 64], sizes = [4, 32], strides = [1, 1]} : vector<4x96xf32> to vector<4x32xf32>
    %131 = vector.broadcast %20 : vector<1x32xf32> to vector<4x32xf32>
    %132 = arith.addf %130, %131 : vector<4x32xf32>
    %133 = arith.mulf %129, %132 : vector<4x32xf32>
    %134 = arith.addf %128, %133 : vector<4x32xf32>
    %135 = math.tanh %134 : vector<4x32xf32>
    %136 = vector.extract_strided_slice %111 {offsets = [0, 32], sizes = [4, 32], strides = [1, 1]} : vector<4x64xf32> to vector<4x32xf32>
    %137 = vector.extract_strided_slice %119 {offsets = [0, 32], sizes = [4, 32], strides = [1, 1]} : vector<4x64xf32> to vector<4x32xf32>
    %cst_40 = arith.constant 1.000000e+00 : f32
    %138 = vector.broadcast %cst_40 : f32 to vector<4x32xf32>
    %139 = arith.subf %138, %136 : vector<4x32xf32>
    %140 = arith.mulf %139, %127 : vector<4x32xf32>
    %141 = vector.extract_strided_slice %91 {offsets = [0, 0], sizes = [4, 32], strides = [1, 1]} : vector<4x64xf32> to vector<4x32xf32>
    %142 = arith.mulf %136, %141 : vector<4x32xf32>
    %143 = arith.addf %140, %142 : vector<4x32xf32>
    %cst_41 = arith.constant 1.000000e+00 : f32
    %144 = vector.broadcast %cst_41 : f32 to vector<4x32xf32>
    %145 = arith.subf %144, %137 : vector<4x32xf32>
    %146 = arith.mulf %145, %135 : vector<4x32xf32>
    %147 = vector.extract_strided_slice %91 {offsets = [0, 32], sizes = [4, 32], strides = [1, 1]} : vector<4x64xf32> to vector<4x32xf32>
    %148 = arith.mulf %137, %147 : vector<4x32xf32>
    %149 = arith.addf %146, %148 : vector<4x32xf32>
    %150 = arith.truncf %143 : vector<4x32xf32> to vector<4x32xbf16>
    %151 = arith.index_cast %c1_i32_29 : i32 to index
    %c0_42 = arith.constant 0 : index
    %c0_43 = arith.constant 0 : index
    %152 = vector.load %arg13[%151, %c0_42, %c0_43] : memref<8x4x32xbf16, #tpu.memory_space<vmem>>, vector<1x4x32xbf16>
    %153 = vector.shape_cast %152 : vector<1x4x32xbf16> to vector<4x32xbf16>
    %154 = vector.shape_cast %150 : vector<4x32xbf16> to vector<1x4x32xbf16>
    tpu.vector_store %arg13[%151, %c0_42, %c0_43], %154 {strides = array<i32>} : memref<8x4x32xbf16, #tpu.memory_space<vmem>>, vector<1x4x32xbf16>,
    %155 = arith.truncf %149 : vector<4x32xf32> to vector<4x32xbf16>
    %c7_i32_44 = arith.constant 7 : i32
    %156 = arith.subi %c7_i32_44, %c1_i32_29 : i32
    %157 = arith.index_cast %156 : i32 to index
    %c0_45 = arith.constant 0 : index
    %c0_46 = arith.constant 0 : index
    %158 = vector.load %arg14[%157, %c0_45, %c0_46] : memref<8x4x32xbf16, #tpu.memory_space<vmem>>, vector<1x4x32xbf16>
    %159 = vector.shape_cast %158 : vector<1x4x32xbf16> to vector<4x32xbf16>
    %160 = vector.shape_cast %155 : vector<4x32xbf16> to vector<1x4x32xbf16>
    tpu.vector_store %arg14[%157, %c0_45, %c0_46], %160 {strides = array<i32>} : memref<8x4x32xbf16, #tpu.memory_space<vmem>>, vector<1x4x32xbf16>,
    %161 = tpu.concatenate %143, %149 in 1 : vector<4x32xf32>, vector<4x32xf32> -> vector<4x64xf32>
    %c2_i32 = arith.constant 2 : i32
    %162 = arith.index_cast %c2_i32 : i32 to index
    %c0_47 = arith.constant 0 : index
    %c0_48 = arith.constant 0 : index
    %163 = vector.load %arg11[%162, %c0_47, %c0_48] : memref<8x4x96xf32, #tpu.memory_space<vmem>>, vector<1x4x96xf32>
    %164 = vector.shape_cast %163 : vector<1x4x96xf32> to vector<4x96xf32>
    %c7_i32_49 = arith.constant 7 : i32
    %165 = arith.subi %c7_i32_49, %c2_i32 : i32
    %166 = arith.index_cast %165 : i32 to index
    %c0_50 = arith.constant 0 : index
    %c0_51 = arith.constant 0 : index
    %167 = vector.load %arg12[%166, %c0_50, %c0_51] : memref<8x4x96xf32, #tpu.memory_space<vmem>>, vector<1x4x96xf32>
    %168 = vector.shape_cast %167 : vector<1x4x96xf32> to vector<4x96xf32>
    %169 = arith.truncf %161 : vector<4x64xf32> to vector<4x64xbf16>
    %c0_52 = arith.constant 0 : index
    %c0_53 = arith.constant 0 : index
    %170 = vector.load %arg3[%c0_52, %c0_53] : memref<64x192xbf16, #tpu.memory_space<vmem>>, vector<64x192xbf16>
    %cst_54 = arith.constant dense<0.000000e+00> : vector<4x192xf32>
    %171 = tpu.matmul %169, %170, %cst_54 {dimension_numbers = #tpu.dot_dimension_numbers<[1], [0], [0], [1], [0, 0, 1, 1], [], []>} : vector<4x64xbf16>, vector<64x192xbf16>, vector<4x192xf32> -> vector<4x192xf32>
    %172 = vector.extract_strided_slice %171 {offsets = [0, 0], sizes = [4, 96], strides = [1, 1]} : vector<4x192xf32> to vector<4x96xf32>
    %173 = vector.extract_strided_slice %171 {offsets = [0, 96], sizes = [4, 96], strides = [1, 1]} : vector<4x192xf32> to vector<4x96xf32>
    %174 = vector.extract_strided_slice %164 {offsets = [0, 0], sizes = [4, 64], strides = [1, 1]} : vector<4x96xf32> to vector<4x64xf32>
    %175 = vector.extract_strided_slice %172 {offsets = [0, 0], sizes = [4, 64], strides = [1, 1]} : vector<4x96xf32> to vector<4x64xf32>
    %176 = arith.addf %174, %175 : vector<4x64xf32>
    %177 = arith.negf %176 : vector<4x64xf32>
    %178 = math.exp %177 : vector<4x64xf32>
    %cst_55 = arith.constant 1.000000e+00 : f32
    %179 = vector.broadcast %cst_55 : f32 to vector<4x64xf32>
    %180 = arith.addf %179, %178 : vector<4x64xf32>
    %181 = arith.divf %179, %180 : vector<4x64xf32>
    %182 = vector.extract_strided_slice %168 {offsets = [0, 0], sizes = [4, 64], strides = [1, 1]} : vector<4x96xf32> to vector<4x64xf32>
    %183 = vector.extract_strided_slice %173 {offsets = [0, 0], sizes = [4, 64], strides = [1, 1]} : vector<4x96xf32> to vector<4x64xf32>
    %184 = arith.addf %182, %183 : vector<4x64xf32>
    %185 = arith.negf %184 : vector<4x64xf32>
    %186 = math.exp %185 : vector<4x64xf32>
    %cst_56 = arith.constant 1.000000e+00 : f32
    %187 = vector.broadcast %cst_56 : f32 to vector<4x64xf32>
    %188 = arith.addf %187, %186 : vector<4x64xf32>
    %189 = arith.divf %187, %188 : vector<4x64xf32>
    %190 = vector.extract_strided_slice %164 {offsets = [0, 64], sizes = [4, 32], strides = [1, 1]} : vector<4x96xf32> to vector<4x32xf32>
    %191 = vector.extract_strided_slice %181 {offsets = [0, 0], sizes = [4, 32], strides = [1, 1]} : vector<4x64xf32> to vector<4x32xf32>
    %192 = vector.extract_strided_slice %172 {offsets = [0, 64], sizes = [4, 32], strides = [1, 1]} : vector<4x96xf32> to vector<4x32xf32>
    %193 = vector.broadcast %19 : vector<1x32xf32> to vector<4x32xf32>
    %194 = arith.addf %192, %193 : vector<4x32xf32>
    %195 = arith.mulf %191, %194 : vector<4x32xf32>
    %196 = arith.addf %190, %195 : vector<4x32xf32>
    %197 = math.tanh %196 : vector<4x32xf32>
    %198 = vector.extract_strided_slice %168 {offsets = [0, 64], sizes = [4, 32], strides = [1, 1]} : vector<4x96xf32> to vector<4x32xf32>
    %199 = vector.extract_strided_slice %189 {offsets = [0, 0], sizes = [4, 32], strides = [1, 1]} : vector<4x64xf32> to vector<4x32xf32>
    %200 = vector.extract_strided_slice %173 {offsets = [0, 64], sizes = [4, 32], strides = [1, 1]} : vector<4x96xf32> to vector<4x32xf32>
    %201 = vector.broadcast %20 : vector<1x32xf32> to vector<4x32xf32>
    %202 = arith.addf %200, %201 : vector<4x32xf32>
    %203 = arith.mulf %199, %202 : vector<4x32xf32>
    %204 = arith.addf %198, %203 : vector<4x32xf32>
    %205 = math.tanh %204 : vector<4x32xf32>
    %206 = vector.extract_strided_slice %181 {offsets = [0, 32], sizes = [4, 32], strides = [1, 1]} : vector<4x64xf32> to vector<4x32xf32>
    %207 = vector.extract_strided_slice %189 {offsets = [0, 32], sizes = [4, 32], strides = [1, 1]} : vector<4x64xf32> to vector<4x32xf32>
    %cst_57 = arith.constant 1.000000e+00 : f32
    %208 = vector.broadcast %cst_57 : f32 to vector<4x32xf32>
    %209 = arith.subf %208, %206 : vector<4x32xf32>
    %210 = arith.mulf %209, %197 : vector<4x32xf32>
    %211 = vector.extract_strided_slice %161 {offsets = [0, 0], sizes = [4, 32], strides = [1, 1]} : vector<4x64xf32> to vector<4x32xf32>
    %212 = arith.mulf %206, %211 : vector<4x32xf32>
    %213 = arith.addf %210, %212 : vector<4x32xf32>
    %cst_58 = arith.constant 1.000000e+00 : f32
    %214 = vector.broadcast %cst_58 : f32 to vector<4x32xf32>
    %215 = arith.subf %214, %207 : vector<4x32xf32>
    %216 = arith.mulf %215, %205 : vector<4x32xf32>
    %217 = vector.extract_strided_slice %161 {offsets = [0, 32], sizes = [4, 32], strides = [1, 1]} : vector<4x64xf32> to vector<4x32xf32>
    %218 = arith.mulf %207, %217 : vector<4x32xf32>
    %219 = arith.addf %216, %218 : vector<4x32xf32>
    %220 = arith.truncf %213 : vector<4x32xf32> to vector<4x32xbf16>
    %221 = arith.index_cast %c2_i32 : i32 to index
    %c0_59 = arith.constant 0 : index
    %c0_60 = arith.constant 0 : index
    %222 = vector.load %arg13[%221, %c0_59, %c0_60] : memref<8x4x32xbf16, #tpu.memory_space<vmem>>, vector<1x4x32xbf16>
    %223 = vector.shape_cast %222 : vector<1x4x32xbf16> to vector<4x32xbf16>
    %224 = vector.shape_cast %220 : vector<4x32xbf16> to vector<1x4x32xbf16>
    tpu.vector_store %arg13[%221, %c0_59, %c0_60], %224 {strides = array<i32>} : memref<8x4x32xbf16, #tpu.memory_space<vmem>>, vector<1x4x32xbf16>,
    %225 = arith.truncf %219 : vector<4x32xf32> to vector<4x32xbf16>
    %c7_i32_61 = arith.constant 7 : i32
    %226 = arith.subi %c7_i32_61, %c2_i32 : i32
    %227 = arith.index_cast %226 : i32 to index
    %c0_62 = arith.constant 0 : index
    %c0_63 = arith.constant 0 : index
    %228 = vector.load %arg14[%227, %c0_62, %c0_63] : memref<8x4x32xbf16, #tpu.memory_space<vmem>>, vector<1x4x32xbf16>
    %229 = vector.shape_cast %228 : vector<1x4x32xbf16> to vector<4x32xbf16>
    %230 = vector.shape_cast %225 : vector<4x32xbf16> to vector<1x4x32xbf16>
    tpu.vector_store %arg14[%227, %c0_62, %c0_63], %230 {strides = array<i32>} : memref<8x4x32xbf16, #tpu.memory_space<vmem>>, vector<1x4x32xbf16>,
    %231 = tpu.concatenate %213, %219 in 1 : vector<4x32xf32>, vector<4x32xf32> -> vector<4x64xf32>
    %c3_i32 = arith.constant 3 : i32
    %232 = arith.index_cast %c3_i32 : i32 to index
    %c0_64 = arith.constant 0 : index
    %c0_65 = arith.constant 0 : index
    %233 = vector.load %arg11[%232, %c0_64, %c0_65] : memref<8x4x96xf32, #tpu.memory_space<vmem>>, vector<1x4x96xf32>
    %234 = vector.shape_cast %233 : vector<1x4x96xf32> to vector<4x96xf32>
    %c7_i32_66 = arith.constant 7 : i32
    %235 = arith.subi %c7_i32_66, %c3_i32 : i32
    %236 = arith.index_cast %235 : i32 to index
    %c0_67 = arith.constant 0 : index
    %c0_68 = arith.constant 0 : index
    %237 = vector.load %arg12[%236, %c0_67, %c0_68] : memref<8x4x96xf32, #tpu.memory_space<vmem>>, vector<1x4x96xf32>
    %238 = vector.shape_cast %237 : vector<1x4x96xf32> to vector<4x96xf32>
    %239 = arith.truncf %231 : vector<4x64xf32> to vector<4x64xbf16>
    %c0_69 = arith.constant 0 : index
    %c0_70 = arith.constant 0 : index
    %240 = vector.load %arg3[%c0_69, %c0_70] : memref<64x192xbf16, #tpu.memory_space<vmem>>, vector<64x192xbf16>
    %cst_71 = arith.constant dense<0.000000e+00> : vector<4x192xf32>
    %241 = tpu.matmul %239, %240, %cst_71 {dimension_numbers = #tpu.dot_dimension_numbers<[1], [0], [0], [1], [0, 0, 1, 1], [], []>} : vector<4x64xbf16>, vector<64x192xbf16>, vector<4x192xf32> -> vector<4x192xf32>
    %242 = vector.extract_strided_slice %241 {offsets = [0, 0], sizes = [4, 96], strides = [1, 1]} : vector<4x192xf32> to vector<4x96xf32>
    %243 = vector.extract_strided_slice %241 {offsets = [0, 96], sizes = [4, 96], strides = [1, 1]} : vector<4x192xf32> to vector<4x96xf32>
    %244 = vector.extract_strided_slice %234 {offsets = [0, 0], sizes = [4, 64], strides = [1, 1]} : vector<4x96xf32> to vector<4x64xf32>
    %245 = vector.extract_strided_slice %242 {offsets = [0, 0], sizes = [4, 64], strides = [1, 1]} : vector<4x96xf32> to vector<4x64xf32>
    %246 = arith.addf %244, %245 : vector<4x64xf32>
    %247 = arith.negf %246 : vector<4x64xf32>
    %248 = math.exp %247 : vector<4x64xf32>
    %cst_72 = arith.constant 1.000000e+00 : f32
    %249 = vector.broadcast %cst_72 : f32 to vector<4x64xf32>
    %250 = arith.addf %249, %248 : vector<4x64xf32>
    %251 = arith.divf %249, %250 : vector<4x64xf32>
    %252 = vector.extract_strided_slice %238 {offsets = [0, 0], sizes = [4, 64], strides = [1, 1]} : vector<4x96xf32> to vector<4x64xf32>
    %253 = vector.extract_strided_slice %243 {offsets = [0, 0], sizes = [4, 64], strides = [1, 1]} : vector<4x96xf32> to vector<4x64xf32>
    %254 = arith.addf %252, %253 : vector<4x64xf32>
    %255 = arith.negf %254 : vector<4x64xf32>
    %256 = math.exp %255 : vector<4x64xf32>
    %cst_73 = arith.constant 1.000000e+00 : f32
    %257 = vector.broadcast %cst_73 : f32 to vector<4x64xf32>
    %258 = arith.addf %257, %256 : vector<4x64xf32>
    %259 = arith.divf %257, %258 : vector<4x64xf32>
    %260 = vector.extract_strided_slice %234 {offsets = [0, 64], sizes = [4, 32], strides = [1, 1]} : vector<4x96xf32> to vector<4x32xf32>
    %261 = vector.extract_strided_slice %251 {offsets = [0, 0], sizes = [4, 32], strides = [1, 1]} : vector<4x64xf32> to vector<4x32xf32>
    %262 = vector.extract_strided_slice %242 {offsets = [0, 64], sizes = [4, 32], strides = [1, 1]} : vector<4x96xf32> to vector<4x32xf32>
    %263 = vector.broadcast %19 : vector<1x32xf32> to vector<4x32xf32>
    %264 = arith.addf %262, %263 : vector<4x32xf32>
    %265 = arith.mulf %261, %264 : vector<4x32xf32>
    %266 = arith.addf %260, %265 : vector<4x32xf32>
    %267 = math.tanh %266 : vector<4x32xf32>
    %268 = vector.extract_strided_slice %238 {offsets = [0, 64], sizes = [4, 32], strides = [1, 1]} : vector<4x96xf32> to vector<4x32xf32>
    %269 = vector.extract_strided_slice %259 {offsets = [0, 0], sizes = [4, 32], strides = [1, 1]} : vector<4x64xf32> to vector<4x32xf32>
    %270 = vector.extract_strided_slice %243 {offsets = [0, 64], sizes = [4, 32], strides = [1, 1]} : vector<4x96xf32> to vector<4x32xf32>
    %271 = vector.broadcast %20 : vector<1x32xf32> to vector<4x32xf32>
    %272 = arith.addf %270, %271 : vector<4x32xf32>
    %273 = arith.mulf %269, %272 : vector<4x32xf32>
    %274 = arith.addf %268, %273 : vector<4x32xf32>
    %275 = math.tanh %274 : vector<4x32xf32>
    %276 = vector.extract_strided_slice %251 {offsets = [0, 32], sizes = [4, 32], strides = [1, 1]} : vector<4x64xf32> to vector<4x32xf32>
    %277 = vector.extract_strided_slice %259 {offsets = [0, 32], sizes = [4, 32], strides = [1, 1]} : vector<4x64xf32> to vector<4x32xf32>
    %cst_74 = arith.constant 1.000000e+00 : f32
    %278 = vector.broadcast %cst_74 : f32 to vector<4x32xf32>
    %279 = arith.subf %278, %276 : vector<4x32xf32>
    %280 = arith.mulf %279, %267 : vector<4x32xf32>
    %281 = vector.extract_strided_slice %231 {offsets = [0, 0], sizes = [4, 32], strides = [1, 1]} : vector<4x64xf32> to vector<4x32xf32>
    %282 = arith.mulf %276, %281 : vector<4x32xf32>
    %283 = arith.addf %280, %282 : vector<4x32xf32>
    %cst_75 = arith.constant 1.000000e+00 : f32
    %284 = vector.broadcast %cst_75 : f32 to vector<4x32xf32>
    %285 = arith.subf %284, %277 : vector<4x32xf32>
    %286 = arith.mulf %285, %275 : vector<4x32xf32>
    %287 = vector.extract_strided_slice %231 {offsets = [0, 32], sizes = [4, 32], strides = [1, 1]} : vector<4x64xf32> to vector<4x32xf32>
    %288 = arith.mulf %277, %287 : vector<4x32xf32>
    %289 = arith.addf %286, %288 : vector<4x32xf32>
    %290 = arith.truncf %283 : vector<4x32xf32> to vector<4x32xbf16>
    %291 = arith.index_cast %c3_i32 : i32 to index
    %c0_76 = arith.constant 0 : index
    %c0_77 = arith.constant 0 : index
    %292 = vector.load %arg13[%291, %c0_76, %c0_77] : memref<8x4x32xbf16, #tpu.memory_space<vmem>>, vector<1x4x32xbf16>
    %293 = vector.shape_cast %292 : vector<1x4x32xbf16> to vector<4x32xbf16>
    %294 = vector.shape_cast %290 : vector<4x32xbf16> to vector<1x4x32xbf16>
    tpu.vector_store %arg13[%291, %c0_76, %c0_77], %294 {strides = array<i32>} : memref<8x4x32xbf16, #tpu.memory_space<vmem>>, vector<1x4x32xbf16>,
    %295 = arith.truncf %289 : vector<4x32xf32> to vector<4x32xbf16>
    %c7_i32_78 = arith.constant 7 : i32
    %296 = arith.subi %c7_i32_78, %c3_i32 : i32
    %297 = arith.index_cast %296 : i32 to index
    %c0_79 = arith.constant 0 : index
    %c0_80 = arith.constant 0 : index
    %298 = vector.load %arg14[%297, %c0_79, %c0_80] : memref<8x4x32xbf16, #tpu.memory_space<vmem>>, vector<1x4x32xbf16>
    %299 = vector.shape_cast %298 : vector<1x4x32xbf16> to vector<4x32xbf16>
    %300 = vector.shape_cast %295 : vector<4x32xbf16> to vector<1x4x32xbf16>
    tpu.vector_store %arg14[%297, %c0_79, %c0_80], %300 {strides = array<i32>} : memref<8x4x32xbf16, #tpu.memory_space<vmem>>, vector<1x4x32xbf16>,
    %301 = tpu.concatenate %283, %289 in 1 : vector<4x32xf32>, vector<4x32xf32> -> vector<4x64xf32>
    %c4_i32 = arith.constant 4 : i32
    %302 = arith.index_cast %c4_i32 : i32 to index
    %c0_81 = arith.constant 0 : index
    %c0_82 = arith.constant 0 : index
    %303 = vector.load %arg11[%302, %c0_81, %c0_82] : memref<8x4x96xf32, #tpu.memory_space<vmem>>, vector<1x4x96xf32>
    %304 = vector.shape_cast %303 : vector<1x4x96xf32> to vector<4x96xf32>
    %c7_i32_83 = arith.constant 7 : i32
    %305 = arith.subi %c7_i32_83, %c4_i32 : i32
    %306 = arith.index_cast %305 : i32 to index
    %c0_84 = arith.constant 0 : index
    %c0_85 = arith.constant 0 : index
    %307 = vector.load %arg12[%306, %c0_84, %c0_85] : memref<8x4x96xf32, #tpu.memory_space<vmem>>, vector<1x4x96xf32>
    %308 = vector.shape_cast %307 : vector<1x4x96xf32> to vector<4x96xf32>
    %309 = arith.truncf %301 : vector<4x64xf32> to vector<4x64xbf16>
    %c0_86 = arith.constant 0 : index
    %c0_87 = arith.constant 0 : index
    %310 = vector.load %arg3[%c0_86, %c0_87] : memref<64x192xbf16, #tpu.memory_space<vmem>>, vector<64x192xbf16>
    %cst_88 = arith.constant dense<0.000000e+00> : vector<4x192xf32>
    %311 = tpu.matmul %309, %310, %cst_88 {dimension_numbers = #tpu.dot_dimension_numbers<[1], [0], [0], [1], [0, 0, 1, 1], [], []>} : vector<4x64xbf16>, vector<64x192xbf16>, vector<4x192xf32> -> vector<4x192xf32>
    %312 = vector.extract_strided_slice %311 {offsets = [0, 0], sizes = [4, 96], strides = [1, 1]} : vector<4x192xf32> to vector<4x96xf32>
    %313 = vector.extract_strided_slice %311 {offsets = [0, 96], sizes = [4, 96], strides = [1, 1]} : vector<4x192xf32> to vector<4x96xf32>
    %314 = vector.extract_strided_slice %304 {offsets = [0, 0], sizes = [4, 64], strides = [1, 1]} : vector<4x96xf32> to vector<4x64xf32>
    %315 = vector.extract_strided_slice %312 {offsets = [0, 0], sizes = [4, 64], strides = [1, 1]} : vector<4x96xf32> to vector<4x64xf32>
    %316 = arith.addf %314, %315 : vector<4x64xf32>
    %317 = arith.negf %316 : vector<4x64xf32>
    %318 = math.exp %317 : vector<4x64xf32>
    %cst_89 = arith.constant 1.000000e+00 : f32
    %319 = vector.broadcast %cst_89 : f32 to vector<4x64xf32>
    %320 = arith.addf %319, %318 : vector<4x64xf32>
    %321 = arith.divf %319, %320 : vector<4x64xf32>
    %322 = vector.extract_strided_slice %308 {offsets = [0, 0], sizes = [4, 64], strides = [1, 1]} : vector<4x96xf32> to vector<4x64xf32>
    %323 = vector.extract_strided_slice %313 {offsets = [0, 0], sizes = [4, 64], strides = [1, 1]} : vector<4x96xf32> to vector<4x64xf32>
    %324 = arith.addf %322, %323 : vector<4x64xf32>
    %325 = arith.negf %324 : vector<4x64xf32>
    %326 = math.exp %325 : vector<4x64xf32>
    %cst_90 = arith.constant 1.000000e+00 : f32
    %327 = vector.broadcast %cst_90 : f32 to vector<4x64xf32>
    %328 = arith.addf %327, %326 : vector<4x64xf32>
    %329 = arith.divf %327, %328 : vector<4x64xf32>
    %330 = vector.extract_strided_slice %304 {offsets = [0, 64], sizes = [4, 32], strides = [1, 1]} : vector<4x96xf32> to vector<4x32xf32>
    %331 = vector.extract_strided_slice %321 {offsets = [0, 0], sizes = [4, 32], strides = [1, 1]} : vector<4x64xf32> to vector<4x32xf32>
    %332 = vector.extract_strided_slice %312 {offsets = [0, 64], sizes = [4, 32], strides = [1, 1]} : vector<4x96xf32> to vector<4x32xf32>
    %333 = vector.broadcast %19 : vector<1x32xf32> to vector<4x32xf32>
    %334 = arith.addf %332, %333 : vector<4x32xf32>
    %335 = arith.mulf %331, %334 : vector<4x32xf32>
    %336 = arith.addf %330, %335 : vector<4x32xf32>
    %337 = math.tanh %336 : vector<4x32xf32>
    %338 = vector.extract_strided_slice %308 {offsets = [0, 64], sizes = [4, 32], strides = [1, 1]} : vector<4x96xf32> to vector<4x32xf32>
    %339 = vector.extract_strided_slice %329 {offsets = [0, 0], sizes = [4, 32], strides = [1, 1]} : vector<4x64xf32> to vector<4x32xf32>
    %340 = vector.extract_strided_slice %313 {offsets = [0, 64], sizes = [4, 32], strides = [1, 1]} : vector<4x96xf32> to vector<4x32xf32>
    %341 = vector.broadcast %20 : vector<1x32xf32> to vector<4x32xf32>
    %342 = arith.addf %340, %341 : vector<4x32xf32>
    %343 = arith.mulf %339, %342 : vector<4x32xf32>
    %344 = arith.addf %338, %343 : vector<4x32xf32>
    %345 = math.tanh %344 : vector<4x32xf32>
    %346 = vector.extract_strided_slice %321 {offsets = [0, 32], sizes = [4, 32], strides = [1, 1]} : vector<4x64xf32> to vector<4x32xf32>
    %347 = vector.extract_strided_slice %329 {offsets = [0, 32], sizes = [4, 32], strides = [1, 1]} : vector<4x64xf32> to vector<4x32xf32>
    %cst_91 = arith.constant 1.000000e+00 : f32
    %348 = vector.broadcast %cst_91 : f32 to vector<4x32xf32>
    %349 = arith.subf %348, %346 : vector<4x32xf32>
    %350 = arith.mulf %349, %337 : vector<4x32xf32>
    %351 = vector.extract_strided_slice %301 {offsets = [0, 0], sizes = [4, 32], strides = [1, 1]} : vector<4x64xf32> to vector<4x32xf32>
    %352 = arith.mulf %346, %351 : vector<4x32xf32>
    %353 = arith.addf %350, %352 : vector<4x32xf32>
    %cst_92 = arith.constant 1.000000e+00 : f32
    %354 = vector.broadcast %cst_92 : f32 to vector<4x32xf32>
    %355 = arith.subf %354, %347 : vector<4x32xf32>
    %356 = arith.mulf %355, %345 : vector<4x32xf32>
    %357 = vector.extract_strided_slice %301 {offsets = [0, 32], sizes = [4, 32], strides = [1, 1]} : vector<4x64xf32> to vector<4x32xf32>
    %358 = arith.mulf %347, %357 : vector<4x32xf32>
    %359 = arith.addf %356, %358 : vector<4x32xf32>
    %360 = arith.truncf %353 : vector<4x32xf32> to vector<4x32xbf16>
    %361 = arith.index_cast %c4_i32 : i32 to index
    %c0_93 = arith.constant 0 : index
    %c0_94 = arith.constant 0 : index
    %362 = vector.load %arg13[%361, %c0_93, %c0_94] : memref<8x4x32xbf16, #tpu.memory_space<vmem>>, vector<1x4x32xbf16>
    %363 = vector.shape_cast %362 : vector<1x4x32xbf16> to vector<4x32xbf16>
    %364 = vector.shape_cast %360 : vector<4x32xbf16> to vector<1x4x32xbf16>
    tpu.vector_store %arg13[%361, %c0_93, %c0_94], %364 {strides = array<i32>} : memref<8x4x32xbf16, #tpu.memory_space<vmem>>, vector<1x4x32xbf16>,
    %365 = arith.truncf %359 : vector<4x32xf32> to vector<4x32xbf16>
    %c7_i32_95 = arith.constant 7 : i32
    %366 = arith.subi %c7_i32_95, %c4_i32 : i32
    %367 = arith.index_cast %366 : i32 to index
    %c0_96 = arith.constant 0 : index
    %c0_97 = arith.constant 0 : index
    %368 = vector.load %arg14[%367, %c0_96, %c0_97] : memref<8x4x32xbf16, #tpu.memory_space<vmem>>, vector<1x4x32xbf16>
    %369 = vector.shape_cast %368 : vector<1x4x32xbf16> to vector<4x32xbf16>
    %370 = vector.shape_cast %365 : vector<4x32xbf16> to vector<1x4x32xbf16>
    tpu.vector_store %arg14[%367, %c0_96, %c0_97], %370 {strides = array<i32>} : memref<8x4x32xbf16, #tpu.memory_space<vmem>>, vector<1x4x32xbf16>,
    %371 = tpu.concatenate %353, %359 in 1 : vector<4x32xf32>, vector<4x32xf32> -> vector<4x64xf32>
    %c5_i32 = arith.constant 5 : i32
    %372 = arith.index_cast %c5_i32 : i32 to index
    %c0_98 = arith.constant 0 : index
    %c0_99 = arith.constant 0 : index
    %373 = vector.load %arg11[%372, %c0_98, %c0_99] : memref<8x4x96xf32, #tpu.memory_space<vmem>>, vector<1x4x96xf32>
    %374 = vector.shape_cast %373 : vector<1x4x96xf32> to vector<4x96xf32>
    %c7_i32_100 = arith.constant 7 : i32
    %375 = arith.subi %c7_i32_100, %c5_i32 : i32
    %376 = arith.index_cast %375 : i32 to index
    %c0_101 = arith.constant 0 : index
    %c0_102 = arith.constant 0 : index
    %377 = vector.load %arg12[%376, %c0_101, %c0_102] : memref<8x4x96xf32, #tpu.memory_space<vmem>>, vector<1x4x96xf32>
    %378 = vector.shape_cast %377 : vector<1x4x96xf32> to vector<4x96xf32>
    %379 = arith.truncf %371 : vector<4x64xf32> to vector<4x64xbf16>
    %c0_103 = arith.constant 0 : index
    %c0_104 = arith.constant 0 : index
    %380 = vector.load %arg3[%c0_103, %c0_104] : memref<64x192xbf16, #tpu.memory_space<vmem>>, vector<64x192xbf16>
    %cst_105 = arith.constant dense<0.000000e+00> : vector<4x192xf32>
    %381 = tpu.matmul %379, %380, %cst_105 {dimension_numbers = #tpu.dot_dimension_numbers<[1], [0], [0], [1], [0, 0, 1, 1], [], []>} : vector<4x64xbf16>, vector<64x192xbf16>, vector<4x192xf32> -> vector<4x192xf32>
    %382 = vector.extract_strided_slice %381 {offsets = [0, 0], sizes = [4, 96], strides = [1, 1]} : vector<4x192xf32> to vector<4x96xf32>
    %383 = vector.extract_strided_slice %381 {offsets = [0, 96], sizes = [4, 96], strides = [1, 1]} : vector<4x192xf32> to vector<4x96xf32>
    %384 = vector.extract_strided_slice %374 {offsets = [0, 0], sizes = [4, 64], strides = [1, 1]} : vector<4x96xf32> to vector<4x64xf32>
    %385 = vector.extract_strided_slice %382 {offsets = [0, 0], sizes = [4, 64], strides = [1, 1]} : vector<4x96xf32> to vector<4x64xf32>
    %386 = arith.addf %384, %385 : vector<4x64xf32>
    %387 = arith.negf %386 : vector<4x64xf32>
    %388 = math.exp %387 : vector<4x64xf32>
    %cst_106 = arith.constant 1.000000e+00 : f32
    %389 = vector.broadcast %cst_106 : f32 to vector<4x64xf32>
    %390 = arith.addf %389, %388 : vector<4x64xf32>
    %391 = arith.divf %389, %390 : vector<4x64xf32>
    %392 = vector.extract_strided_slice %378 {offsets = [0, 0], sizes = [4, 64], strides = [1, 1]} : vector<4x96xf32> to vector<4x64xf32>
    %393 = vector.extract_strided_slice %383 {offsets = [0, 0], sizes = [4, 64], strides = [1, 1]} : vector<4x96xf32> to vector<4x64xf32>
    %394 = arith.addf %392, %393 : vector<4x64xf32>
    %395 = arith.negf %394 : vector<4x64xf32>
    %396 = math.exp %395 : vector<4x64xf32>
    %cst_107 = arith.constant 1.000000e+00 : f32
    %397 = vector.broadcast %cst_107 : f32 to vector<4x64xf32>
    %398 = arith.addf %397, %396 : vector<4x64xf32>
    %399 = arith.divf %397, %398 : vector<4x64xf32>
    %400 = vector.extract_strided_slice %374 {offsets = [0, 64], sizes = [4, 32], strides = [1, 1]} : vector<4x96xf32> to vector<4x32xf32>
    %401 = vector.extract_strided_slice %391 {offsets = [0, 0], sizes = [4, 32], strides = [1, 1]} : vector<4x64xf32> to vector<4x32xf32>
    %402 = vector.extract_strided_slice %382 {offsets = [0, 64], sizes = [4, 32], strides = [1, 1]} : vector<4x96xf32> to vector<4x32xf32>
    %403 = vector.broadcast %19 : vector<1x32xf32> to vector<4x32xf32>
    %404 = arith.addf %402, %403 : vector<4x32xf32>
    %405 = arith.mulf %401, %404 : vector<4x32xf32>
    %406 = arith.addf %400, %405 : vector<4x32xf32>
    %407 = math.tanh %406 : vector<4x32xf32>
    %408 = vector.extract_strided_slice %378 {offsets = [0, 64], sizes = [4, 32], strides = [1, 1]} : vector<4x96xf32> to vector<4x32xf32>
    %409 = vector.extract_strided_slice %399 {offsets = [0, 0], sizes = [4, 32], strides = [1, 1]} : vector<4x64xf32> to vector<4x32xf32>
    %410 = vector.extract_strided_slice %383 {offsets = [0, 64], sizes = [4, 32], strides = [1, 1]} : vector<4x96xf32> to vector<4x32xf32>
    %411 = vector.broadcast %20 : vector<1x32xf32> to vector<4x32xf32>
    %412 = arith.addf %410, %411 : vector<4x32xf32>
    %413 = arith.mulf %409, %412 : vector<4x32xf32>
    %414 = arith.addf %408, %413 : vector<4x32xf32>
    %415 = math.tanh %414 : vector<4x32xf32>
    %416 = vector.extract_strided_slice %391 {offsets = [0, 32], sizes = [4, 32], strides = [1, 1]} : vector<4x64xf32> to vector<4x32xf32>
    %417 = vector.extract_strided_slice %399 {offsets = [0, 32], sizes = [4, 32], strides = [1, 1]} : vector<4x64xf32> to vector<4x32xf32>
    %cst_108 = arith.constant 1.000000e+00 : f32
    %418 = vector.broadcast %cst_108 : f32 to vector<4x32xf32>
    %419 = arith.subf %418, %416 : vector<4x32xf32>
    %420 = arith.mulf %419, %407 : vector<4x32xf32>
    %421 = vector.extract_strided_slice %371 {offsets = [0, 0], sizes = [4, 32], strides = [1, 1]} : vector<4x64xf32> to vector<4x32xf32>
    %422 = arith.mulf %416, %421 : vector<4x32xf32>
    %423 = arith.addf %420, %422 : vector<4x32xf32>
    %cst_109 = arith.constant 1.000000e+00 : f32
    %424 = vector.broadcast %cst_109 : f32 to vector<4x32xf32>
    %425 = arith.subf %424, %417 : vector<4x32xf32>
    %426 = arith.mulf %425, %415 : vector<4x32xf32>
    %427 = vector.extract_strided_slice %371 {offsets = [0, 32], sizes = [4, 32], strides = [1, 1]} : vector<4x64xf32> to vector<4x32xf32>
    %428 = arith.mulf %417, %427 : vector<4x32xf32>
    %429 = arith.addf %426, %428 : vector<4x32xf32>
    %430 = arith.truncf %423 : vector<4x32xf32> to vector<4x32xbf16>
    %431 = arith.index_cast %c5_i32 : i32 to index
    %c0_110 = arith.constant 0 : index
    %c0_111 = arith.constant 0 : index
    %432 = vector.load %arg13[%431, %c0_110, %c0_111] : memref<8x4x32xbf16, #tpu.memory_space<vmem>>, vector<1x4x32xbf16>
    %433 = vector.shape_cast %432 : vector<1x4x32xbf16> to vector<4x32xbf16>
    %434 = vector.shape_cast %430 : vector<4x32xbf16> to vector<1x4x32xbf16>
    tpu.vector_store %arg13[%431, %c0_110, %c0_111], %434 {strides = array<i32>} : memref<8x4x32xbf16, #tpu.memory_space<vmem>>, vector<1x4x32xbf16>,
    %435 = arith.truncf %429 : vector<4x32xf32> to vector<4x32xbf16>
    %c7_i32_112 = arith.constant 7 : i32
    %436 = arith.subi %c7_i32_112, %c5_i32 : i32
    %437 = arith.index_cast %436 : i32 to index
    %c0_113 = arith.constant 0 : index
    %c0_114 = arith.constant 0 : index
    %438 = vector.load %arg14[%437, %c0_113, %c0_114] : memref<8x4x32xbf16, #tpu.memory_space<vmem>>, vector<1x4x32xbf16>
    %439 = vector.shape_cast %438 : vector<1x4x32xbf16> to vector<4x32xbf16>
    %440 = vector.shape_cast %435 : vector<4x32xbf16> to vector<1x4x32xbf16>
    tpu.vector_store %arg14[%437, %c0_113, %c0_114], %440 {strides = array<i32>} : memref<8x4x32xbf16, #tpu.memory_space<vmem>>, vector<1x4x32xbf16>,
    %441 = tpu.concatenate %423, %429 in 1 : vector<4x32xf32>, vector<4x32xf32> -> vector<4x64xf32>
    %c6_i32 = arith.constant 6 : i32
    %442 = arith.index_cast %c6_i32 : i32 to index
    %c0_115 = arith.constant 0 : index
    %c0_116 = arith.constant 0 : index
    %443 = vector.load %arg11[%442, %c0_115, %c0_116] : memref<8x4x96xf32, #tpu.memory_space<vmem>>, vector<1x4x96xf32>
    %444 = vector.shape_cast %443 : vector<1x4x96xf32> to vector<4x96xf32>
    %c7_i32_117 = arith.constant 7 : i32
    %445 = arith.subi %c7_i32_117, %c6_i32 : i32
    %446 = arith.index_cast %445 : i32 to index
    %c0_118 = arith.constant 0 : index
    %c0_119 = arith.constant 0 : index
    %447 = vector.load %arg12[%446, %c0_118, %c0_119] : memref<8x4x96xf32, #tpu.memory_space<vmem>>, vector<1x4x96xf32>
    %448 = vector.shape_cast %447 : vector<1x4x96xf32> to vector<4x96xf32>
    %449 = arith.truncf %441 : vector<4x64xf32> to vector<4x64xbf16>
    %c0_120 = arith.constant 0 : index
    %c0_121 = arith.constant 0 : index
    %450 = vector.load %arg3[%c0_120, %c0_121] : memref<64x192xbf16, #tpu.memory_space<vmem>>, vector<64x192xbf16>
    %cst_122 = arith.constant dense<0.000000e+00> : vector<4x192xf32>
    %451 = tpu.matmul %449, %450, %cst_122 {dimension_numbers = #tpu.dot_dimension_numbers<[1], [0], [0], [1], [0, 0, 1, 1], [], []>} : vector<4x64xbf16>, vector<64x192xbf16>, vector<4x192xf32> -> vector<4x192xf32>
    %452 = vector.extract_strided_slice %451 {offsets = [0, 0], sizes = [4, 96], strides = [1, 1]} : vector<4x192xf32> to vector<4x96xf32>
    %453 = vector.extract_strided_slice %451 {offsets = [0, 96], sizes = [4, 96], strides = [1, 1]} : vector<4x192xf32> to vector<4x96xf32>
    %454 = vector.extract_strided_slice %444 {offsets = [0, 0], sizes = [4, 64], strides = [1, 1]} : vector<4x96xf32> to vector<4x64xf32>
    %455 = vector.extract_strided_slice %452 {offsets = [0, 0], sizes = [4, 64], strides = [1, 1]} : vector<4x96xf32> to vector<4x64xf32>
    %456 = arith.addf %454, %455 : vector<4x64xf32>
    %457 = arith.negf %456 : vector<4x64xf32>
    %458 = math.exp %457 : vector<4x64xf32>
    %cst_123 = arith.constant 1.000000e+00 : f32
    %459 = vector.broadcast %cst_123 : f32 to vector<4x64xf32>
    %460 = arith.addf %459, %458 : vector<4x64xf32>
    %461 = arith.divf %459, %460 : vector<4x64xf32>
    %462 = vector.extract_strided_slice %448 {offsets = [0, 0], sizes = [4, 64], strides = [1, 1]} : vector<4x96xf32> to vector<4x64xf32>
    %463 = vector.extract_strided_slice %453 {offsets = [0, 0], sizes = [4, 64], strides = [1, 1]} : vector<4x96xf32> to vector<4x64xf32>
    %464 = arith.addf %462, %463 : vector<4x64xf32>
    %465 = arith.negf %464 : vector<4x64xf32>
    %466 = math.exp %465 : vector<4x64xf32>
    %cst_124 = arith.constant 1.000000e+00 : f32
    %467 = vector.broadcast %cst_124 : f32 to vector<4x64xf32>
    %468 = arith.addf %467, %466 : vector<4x64xf32>
    %469 = arith.divf %467, %468 : vector<4x64xf32>
    %470 = vector.extract_strided_slice %444 {offsets = [0, 64], sizes = [4, 32], strides = [1, 1]} : vector<4x96xf32> to vector<4x32xf32>
    %471 = vector.extract_strided_slice %461 {offsets = [0, 0], sizes = [4, 32], strides = [1, 1]} : vector<4x64xf32> to vector<4x32xf32>
    %472 = vector.extract_strided_slice %452 {offsets = [0, 64], sizes = [4, 32], strides = [1, 1]} : vector<4x96xf32> to vector<4x32xf32>
    %473 = vector.broadcast %19 : vector<1x32xf32> to vector<4x32xf32>
    %474 = arith.addf %472, %473 : vector<4x32xf32>
    %475 = arith.mulf %471, %474 : vector<4x32xf32>
    %476 = arith.addf %470, %475 : vector<4x32xf32>
    %477 = math.tanh %476 : vector<4x32xf32>
    %478 = vector.extract_strided_slice %448 {offsets = [0, 64], sizes = [4, 32], strides = [1, 1]} : vector<4x96xf32> to vector<4x32xf32>
    %479 = vector.extract_strided_slice %469 {offsets = [0, 0], sizes = [4, 32], strides = [1, 1]} : vector<4x64xf32> to vector<4x32xf32>
    %480 = vector.extract_strided_slice %453 {offsets = [0, 64], sizes = [4, 32], strides = [1, 1]} : vector<4x96xf32> to vector<4x32xf32>
    %481 = vector.broadcast %20 : vector<1x32xf32> to vector<4x32xf32>
    %482 = arith.addf %480, %481 : vector<4x32xf32>
    %483 = arith.mulf %479, %482 : vector<4x32xf32>
    %484 = arith.addf %478, %483 : vector<4x32xf32>
    %485 = math.tanh %484 : vector<4x32xf32>
    %486 = vector.extract_strided_slice %461 {offsets = [0, 32], sizes = [4, 32], strides = [1, 1]} : vector<4x64xf32> to vector<4x32xf32>
    %487 = vector.extract_strided_slice %469 {offsets = [0, 32], sizes = [4, 32], strides = [1, 1]} : vector<4x64xf32> to vector<4x32xf32>
    %cst_125 = arith.constant 1.000000e+00 : f32
    %488 = vector.broadcast %cst_125 : f32 to vector<4x32xf32>
    %489 = arith.subf %488, %486 : vector<4x32xf32>
    %490 = arith.mulf %489, %477 : vector<4x32xf32>
    %491 = vector.extract_strided_slice %441 {offsets = [0, 0], sizes = [4, 32], strides = [1, 1]} : vector<4x64xf32> to vector<4x32xf32>
    %492 = arith.mulf %486, %491 : vector<4x32xf32>
    %493 = arith.addf %490, %492 : vector<4x32xf32>
    %cst_126 = arith.constant 1.000000e+00 : f32
    %494 = vector.broadcast %cst_126 : f32 to vector<4x32xf32>
    %495 = arith.subf %494, %487 : vector<4x32xf32>
    %496 = arith.mulf %495, %485 : vector<4x32xf32>
    %497 = vector.extract_strided_slice %441 {offsets = [0, 32], sizes = [4, 32], strides = [1, 1]} : vector<4x64xf32> to vector<4x32xf32>
    %498 = arith.mulf %487, %497 : vector<4x32xf32>
    %499 = arith.addf %496, %498 : vector<4x32xf32>
    %500 = arith.truncf %493 : vector<4x32xf32> to vector<4x32xbf16>
    %501 = arith.index_cast %c6_i32 : i32 to index
    %c0_127 = arith.constant 0 : index
    %c0_128 = arith.constant 0 : index
    %502 = vector.load %arg13[%501, %c0_127, %c0_128] : memref<8x4x32xbf16, #tpu.memory_space<vmem>>, vector<1x4x32xbf16>
    %503 = vector.shape_cast %502 : vector<1x4x32xbf16> to vector<4x32xbf16>
    %504 = vector.shape_cast %500 : vector<4x32xbf16> to vector<1x4x32xbf16>
    tpu.vector_store %arg13[%501, %c0_127, %c0_128], %504 {strides = array<i32>} : memref<8x4x32xbf16, #tpu.memory_space<vmem>>, vector<1x4x32xbf16>,
    %505 = arith.truncf %499 : vector<4x32xf32> to vector<4x32xbf16>
    %c7_i32_129 = arith.constant 7 : i32
    %506 = arith.subi %c7_i32_129, %c6_i32 : i32
    %507 = arith.index_cast %506 : i32 to index
    %c0_130 = arith.constant 0 : index
    %c0_131 = arith.constant 0 : index
    %508 = vector.load %arg14[%507, %c0_130, %c0_131] : memref<8x4x32xbf16, #tpu.memory_space<vmem>>, vector<1x4x32xbf16>
    %509 = vector.shape_cast %508 : vector<1x4x32xbf16> to vector<4x32xbf16>
    %510 = vector.shape_cast %505 : vector<4x32xbf16> to vector<1x4x32xbf16>
    tpu.vector_store %arg14[%507, %c0_130, %c0_131], %510 {strides = array<i32>} : memref<8x4x32xbf16, #tpu.memory_space<vmem>>, vector<1x4x32xbf16>,
    %511 = tpu.concatenate %493, %499 in 1 : vector<4x32xf32>, vector<4x32xf32> -> vector<4x64xf32>
    %c7_i32_132 = arith.constant 7 : i32
    %512 = arith.index_cast %c7_i32_132 : i32 to index
    %c0_133 = arith.constant 0 : index
    %c0_134 = arith.constant 0 : index
    %513 = vector.load %arg11[%512, %c0_133, %c0_134] : memref<8x4x96xf32, #tpu.memory_space<vmem>>, vector<1x4x96xf32>
    %514 = vector.shape_cast %513 : vector<1x4x96xf32> to vector<4x96xf32>
    %c7_i32_135 = arith.constant 7 : i32
    %515 = arith.subi %c7_i32_135, %c7_i32_132 : i32
    %516 = arith.index_cast %515 : i32 to index
    %c0_136 = arith.constant 0 : index
    %c0_137 = arith.constant 0 : index
    %517 = vector.load %arg12[%516, %c0_136, %c0_137] : memref<8x4x96xf32, #tpu.memory_space<vmem>>, vector<1x4x96xf32>
    %518 = vector.shape_cast %517 : vector<1x4x96xf32> to vector<4x96xf32>
    %519 = arith.truncf %511 : vector<4x64xf32> to vector<4x64xbf16>
    %c0_138 = arith.constant 0 : index
    %c0_139 = arith.constant 0 : index
    %520 = vector.load %arg3[%c0_138, %c0_139] : memref<64x192xbf16, #tpu.memory_space<vmem>>, vector<64x192xbf16>
    %cst_140 = arith.constant dense<0.000000e+00> : vector<4x192xf32>
    %521 = tpu.matmul %519, %520, %cst_140 {dimension_numbers = #tpu.dot_dimension_numbers<[1], [0], [0], [1], [0, 0, 1, 1], [], []>} : vector<4x64xbf16>, vector<64x192xbf16>, vector<4x192xf32> -> vector<4x192xf32>
    %522 = vector.extract_strided_slice %521 {offsets = [0, 0], sizes = [4, 96], strides = [1, 1]} : vector<4x192xf32> to vector<4x96xf32>
    %523 = vector.extract_strided_slice %521 {offsets = [0, 96], sizes = [4, 96], strides = [1, 1]} : vector<4x192xf32> to vector<4x96xf32>
    %524 = vector.extract_strided_slice %514 {offsets = [0, 0], sizes = [4, 64], strides = [1, 1]} : vector<4x96xf32> to vector<4x64xf32>
    %525 = vector.extract_strided_slice %522 {offsets = [0, 0], sizes = [4, 64], strides = [1, 1]} : vector<4x96xf32> to vector<4x64xf32>
    %526 = arith.addf %524, %525 : vector<4x64xf32>
    %527 = arith.negf %526 : vector<4x64xf32>
    %528 = math.exp %527 : vector<4x64xf32>
    %cst_141 = arith.constant 1.000000e+00 : f32
    %529 = vector.broadcast %cst_141 : f32 to vector<4x64xf32>
    %530 = arith.addf %529, %528 : vector<4x64xf32>
    %531 = arith.divf %529, %530 : vector<4x64xf32>
    %532 = vector.extract_strided_slice %518 {offsets = [0, 0], sizes = [4, 64], strides = [1, 1]} : vector<4x96xf32> to vector<4x64xf32>
    %533 = vector.extract_strided_slice %523 {offsets = [0, 0], sizes = [4, 64], strides = [1, 1]} : vector<4x96xf32> to vector<4x64xf32>
    %534 = arith.addf %532, %533 : vector<4x64xf32>
    %535 = arith.negf %534 : vector<4x64xf32>
    %536 = math.exp %535 : vector<4x64xf32>
    %cst_142 = arith.constant 1.000000e+00 : f32
    %537 = vector.broadcast %cst_142 : f32 to vector<4x64xf32>
    %538 = arith.addf %537, %536 : vector<4x64xf32>
    %539 = arith.divf %537, %538 : vector<4x64xf32>
    %540 = vector.extract_strided_slice %514 {offsets = [0, 64], sizes = [4, 32], strides = [1, 1]} : vector<4x96xf32> to vector<4x32xf32>
    %541 = vector.extract_strided_slice %531 {offsets = [0, 0], sizes = [4, 32], strides = [1, 1]} : vector<4x64xf32> to vector<4x32xf32>
    %542 = vector.extract_strided_slice %522 {offsets = [0, 64], sizes = [4, 32], strides = [1, 1]} : vector<4x96xf32> to vector<4x32xf32>
    %543 = vector.broadcast %19 : vector<1x32xf32> to vector<4x32xf32>
    %544 = arith.addf %542, %543 : vector<4x32xf32>
    %545 = arith.mulf %541, %544 : vector<4x32xf32>
    %546 = arith.addf %540, %545 : vector<4x32xf32>
    %547 = math.tanh %546 : vector<4x32xf32>
    %548 = vector.extract_strided_slice %518 {offsets = [0, 64], sizes = [4, 32], strides = [1, 1]} : vector<4x96xf32> to vector<4x32xf32>
    %549 = vector.extract_strided_slice %539 {offsets = [0, 0], sizes = [4, 32], strides = [1, 1]} : vector<4x64xf32> to vector<4x32xf32>
    %550 = vector.extract_strided_slice %523 {offsets = [0, 64], sizes = [4, 32], strides = [1, 1]} : vector<4x96xf32> to vector<4x32xf32>
    %551 = vector.broadcast %20 : vector<1x32xf32> to vector<4x32xf32>
    %552 = arith.addf %550, %551 : vector<4x32xf32>
    %553 = arith.mulf %549, %552 : vector<4x32xf32>
    %554 = arith.addf %548, %553 : vector<4x32xf32>
    %555 = math.tanh %554 : vector<4x32xf32>
    %556 = vector.extract_strided_slice %531 {offsets = [0, 32], sizes = [4, 32], strides = [1, 1]} : vector<4x64xf32> to vector<4x32xf32>
    %557 = vector.extract_strided_slice %539 {offsets = [0, 32], sizes = [4, 32], strides = [1, 1]} : vector<4x64xf32> to vector<4x32xf32>
    %cst_143 = arith.constant 1.000000e+00 : f32
    %558 = vector.broadcast %cst_143 : f32 to vector<4x32xf32>
    %559 = arith.subf %558, %556 : vector<4x32xf32>
    %560 = arith.mulf %559, %547 : vector<4x32xf32>
    %561 = vector.extract_strided_slice %511 {offsets = [0, 0], sizes = [4, 32], strides = [1, 1]} : vector<4x64xf32> to vector<4x32xf32>
    %562 = arith.mulf %556, %561 : vector<4x32xf32>
    %563 = arith.addf %560, %562 : vector<4x32xf32>
    %cst_144 = arith.constant 1.000000e+00 : f32
    %564 = vector.broadcast %cst_144 : f32 to vector<4x32xf32>
    %565 = arith.subf %564, %557 : vector<4x32xf32>
    %566 = arith.mulf %565, %555 : vector<4x32xf32>
    %567 = vector.extract_strided_slice %511 {offsets = [0, 32], sizes = [4, 32], strides = [1, 1]} : vector<4x64xf32> to vector<4x32xf32>
    %568 = arith.mulf %557, %567 : vector<4x32xf32>
    %569 = arith.addf %566, %568 : vector<4x32xf32>
    %570 = arith.truncf %563 : vector<4x32xf32> to vector<4x32xbf16>
    %571 = arith.index_cast %c7_i32_132 : i32 to index
    %c0_145 = arith.constant 0 : index
    %c0_146 = arith.constant 0 : index
    %572 = vector.load %arg13[%571, %c0_145, %c0_146] : memref<8x4x32xbf16, #tpu.memory_space<vmem>>, vector<1x4x32xbf16>
    %573 = vector.shape_cast %572 : vector<1x4x32xbf16> to vector<4x32xbf16>
    %574 = vector.shape_cast %570 : vector<4x32xbf16> to vector<1x4x32xbf16>
    tpu.vector_store %arg13[%571, %c0_145, %c0_146], %574 {strides = array<i32>} : memref<8x4x32xbf16, #tpu.memory_space<vmem>>, vector<1x4x32xbf16>,
    %575 = arith.truncf %569 : vector<4x32xf32> to vector<4x32xbf16>
    %c7_i32_147 = arith.constant 7 : i32
    %576 = arith.subi %c7_i32_147, %c7_i32_132 : i32
    %577 = arith.index_cast %576 : i32 to index
    %c0_148 = arith.constant 0 : index
    %c0_149 = arith.constant 0 : index
    %578 = vector.load %arg14[%577, %c0_148, %c0_149] : memref<8x4x32xbf16, #tpu.memory_space<vmem>>, vector<1x4x32xbf16>
    %579 = vector.shape_cast %578 : vector<1x4x32xbf16> to vector<4x32xbf16>
    %580 = vector.shape_cast %575 : vector<4x32xbf16> to vector<1x4x32xbf16>
    tpu.vector_store %arg14[%577, %c0_148, %c0_149], %580 {strides = array<i32>} : memref<8x4x32xbf16, #tpu.memory_space<vmem>>, vector<1x4x32xbf16>,
    %581 = tpu.concatenate %563, %569 in 1 : vector<4x32xf32>, vector<4x32xf32> -> vector<4x64xf32>
    %c8_i32_150 = arith.constant 8 : i32
    %c0_i32_151 = arith.constant 0 : i32
    %c8_i32_152 = arith.constant 8 : i32
    %582 = arith.muli %c0_i32_151, %c8_i32_152 : i32
    %583 = tpu.assume_multiple %582, 8 : i32
    %584 = arith.index_cast %583 : i32 to index
    %c0_153 = arith.constant 0 : index
    %c0_154 = arith.constant 0 : index
    %585 = vector.load %arg13[%584, %c0_153, %c0_154] : memref<8x4x32xbf16, #tpu.memory_space<vmem>>, vector<8x4x32xbf16>
    %586 = vector.shape_cast %585 : vector<8x4x32xbf16> to vector<32x32xbf16>
    %587 = arith.index_cast %583 : i32 to index
    %c0_155 = arith.constant 0 : index
    %c0_156 = arith.constant 0 : index
    %588 = vector.load %arg14[%587, %c0_155, %c0_156] : memref<8x4x32xbf16, #tpu.memory_space<vmem>>, vector<8x4x32xbf16>
    %589 = vector.shape_cast %588 : vector<8x4x32xbf16> to vector<32x32xbf16>
    %c0_157 = arith.constant 0 : index
    %c0_158 = arith.constant 0 : index
    %590 = vector.load %arg6[%c0_157, %c0_158] : memref<32x64xbf16, #tpu.memory_space<vmem>>, vector<32x64xbf16>
    %cst_159 = arith.constant dense<0.000000e+00> : vector<32x64xf32>
    %591 = tpu.matmul %586, %590, %cst_159 {dimension_numbers = #tpu.dot_dimension_numbers<[1], [0], [0], [1], [0, 0, 1, 1], [], []>} : vector<32x32xbf16>, vector<32x64xbf16>, vector<32x64xf32> -> vector<32x64xf32>
    %c0_160 = arith.constant 0 : index
    %c0_161 = arith.constant 0 : index
    %592 = vector.load %arg7[%c0_160, %c0_161] : memref<32x64xbf16, #tpu.memory_space<vmem>>, vector<32x64xbf16>
    %cst_162 = arith.constant dense<0.000000e+00> : vector<32x64xf32>
    %593 = tpu.matmul %589, %592, %cst_162 {dimension_numbers = #tpu.dot_dimension_numbers<[1], [0], [0], [1], [0, 0, 1, 1], [], []>} : vector<32x32xbf16>, vector<32x64xbf16>, vector<32x64xf32> -> vector<32x64xf32>
    %594 = arith.addf %591, %593 : vector<32x64xf32>
    %c0_163 = arith.constant 0 : index
    %c0_164 = arith.constant 0 : index
    %595 = vector.load %arg8[%c0_163, %c0_164] : memref<1x64xf32, #tpu.memory_space<vmem>>, vector<1x64xf32>
    %596 = vector.broadcast %595 : vector<1x64xf32> to vector<32x64xf32>
    %597 = arith.addf %594, %596 : vector<32x64xf32>
    %598 = math.tanh %597 : vector<32x64xf32>
    %c0_165 = arith.constant 0 : index
    %c0_166 = arith.constant 0 : index
    %599 = vector.load %arg9[%c0_165, %c0_166] : memref<1x64xf32, #tpu.memory_space<vmem>>, vector<1x64xf32>
    %600 = vector.broadcast %599 : vector<1x64xf32> to vector<32x64xf32>
    %601 = arith.mulf %598, %600 : vector<32x64xf32>
    %cst_167 = arith.constant dense<0.000000e+00> : vector<32xf32>
    %602 = vector.multi_reduction <add>, %601, %cst_167 [1] : vector<32x64xf32> to vector<32xf32>
    %603 = vector.shape_cast %602 : vector<32xf32> to vector<8x4xf32>
    %604 = arith.index_cast %583 : i32 to index
    %c0_168 = arith.constant 0 : index
    %605 = vector.load %arg15[%604, %c0_168] : memref<8x4xf32, #tpu.memory_space<vmem>>, vector<8x4xf32>
    tpu.vector_store %arg15[%604, %c0_168], %603 {strides = array<i32>} : memref<8x4xf32, #tpu.memory_space<vmem>>, vector<8x4xf32>,
    %c1_i32_169 = arith.constant 1 : i32
    %c0_170 = arith.constant 0 : index
    %c0_171 = arith.constant 0 : index
    %606 = vector.load %arg15[%c0_170, %c0_171] : memref<8x4xf32, #tpu.memory_space<vmem>>, vector<8x4xf32>
    %cst_172 = arith.constant dense<0xFF800000> : vector<4xf32>
    %607 = vector.multi_reduction <maximumf>, %606, %cst_172 [0] : vector<8x4xf32> to vector<4xf32>
    %608 = vector.shape_cast %607 : vector<4xf32> to vector<1x4xf32>
    %609 = vector.broadcast %608 : vector<1x4xf32> to vector<8x4xf32>
    %610 = arith.subf %606, %609 : vector<8x4xf32>
    %611 = math.exp %610 : vector<8x4xf32>
    %cst_173 = arith.constant dense<0.000000e+00> : vector<4xf32>
    %612 = vector.multi_reduction <add>, %611, %cst_173 [0] : vector<8x4xf32> to vector<4xf32>
    %613 = vector.shape_cast %612 : vector<4xf32> to vector<1x4xf32>
    %614 = tpu.reciprocal %613 {approx = true} : vector<1x4xf32> -> vector<1x4xf32>
    %615 = vector.broadcast %614 : vector<1x4xf32> to vector<8x4xf32>
    %616 = arith.mulf %611, %615 : vector<8x4xf32>
    %c0_174 = arith.constant 0 : index
    %c0_175 = arith.constant 0 : index
    %617 = vector.load %arg15[%c0_174, %c0_175] : memref<8x4xf32, #tpu.memory_space<vmem>>, vector<8x4xf32>
    tpu.vector_store %arg15[%c0_174, %c0_175], %616 {strides = array<i32>} : memref<8x4xf32, #tpu.memory_space<vmem>>, vector<8x4xf32>,
    %cst_176 = arith.constant 0.000000e+00 : f32
    %618 = vector.broadcast %cst_176 : f32 to vector<4x32xf32>
    %c0_i32_177 = arith.constant 0 : i32
    %c8_i32_178 = arith.constant 8 : i32
    %619 = arith.muli %c0_i32_177, %c8_i32_178 : i32
    %620 = tpu.assume_multiple %619, 8 : i32
    %621 = arith.index_cast %620 : i32 to index
    %c0_179 = arith.constant 0 : index
    %622 = vector.load %arg15[%621, %c0_179] : memref<8x4xf32, #tpu.memory_space<vmem>>, vector<8x4xf32>
    %623 = vector.shape_cast %622 : vector<8x4xf32> to vector<8x4x1xf32>
    %624 = arith.index_cast %620 : i32 to index
    %c0_180 = arith.constant 0 : index
    %c0_181 = arith.constant 0 : index
    %625 = vector.load %arg13[%624, %c0_180, %c0_181] : memref<8x4x32xbf16, #tpu.memory_space<vmem>>, vector<8x4x32xbf16>
    %626 = arith.extf %625 : vector<8x4x32xbf16> to vector<8x4x32xf32>
    %627 = arith.index_cast %620 : i32 to index
    %c0_182 = arith.constant 0 : index
    %c0_183 = arith.constant 0 : index
    %628 = vector.load %arg14[%627, %c0_182, %c0_183] : memref<8x4x32xbf16, #tpu.memory_space<vmem>>, vector<8x4x32xbf16>
    %629 = arith.extf %628 : vector<8x4x32xbf16> to vector<8x4x32xf32>
    %630 = vector.broadcast %623 : vector<8x4x1xf32> to vector<8x4x32xf32>
    %631 = arith.mulf %626, %630 : vector<8x4x32xf32>
    %cst_184 = arith.constant dense<0.000000e+00> : vector<4x32xf32>
    %632 = vector.multi_reduction <add>, %631, %cst_184 [0] : vector<8x4x32xf32> to vector<4x32xf32>
    %633 = arith.addf %618, %632 : vector<4x32xf32>
    %634 = vector.broadcast %623 : vector<8x4x1xf32> to vector<8x4x32xf32>
    %635 = arith.mulf %629, %634 : vector<8x4x32xf32>
    %cst_185 = arith.constant dense<0.000000e+00> : vector<4x32xf32>
    %636 = vector.multi_reduction <add>, %635, %cst_185 [0] : vector<8x4x32xf32> to vector<4x32xf32>
    %637 = arith.addf %618, %636 : vector<4x32xf32>
    %c1_i32_186 = arith.constant 1 : i32
    %c0_187 = arith.constant 0 : index
    %c0_188 = arith.constant 0 : index
    %c0_189 = arith.constant 0 : index
    %638 = vector.load %arg10[%c0_187, %c0_188, %c0_189] : memref<1x4x64xf32, #tpu.memory_space<vmem>>, vector<1x4x32xf32>
    %639 = vector.shape_cast %638 : vector<1x4x32xf32> to vector<4x32xf32>
    %640 = vector.shape_cast %633 : vector<4x32xf32> to vector<1x4x32xf32>
    tpu.vector_store %arg10[%c0_187, %c0_188, %c0_189], %640 {strides = array<i32>} : memref<1x4x64xf32, #tpu.memory_space<vmem>>, vector<1x4x32xf32>,
    %c0_190 = arith.constant 0 : index
    %c0_191 = arith.constant 0 : index
    %c32 = arith.constant 32 : index
    %641 = vector.load %arg10[%c0_190, %c0_191, %c32] : memref<1x4x64xf32, #tpu.memory_space<vmem>>, vector<1x4x32xf32>
    %642 = vector.shape_cast %641 : vector<1x4x32xf32> to vector<4x32xf32>
    %643 = vector.shape_cast %637 : vector<4x32xf32> to vector<1x4x32xf32>
    tpu.vector_store %arg10[%c0_190, %c0_191, %c32], %643 {strides = array<i32>} : memref<1x4x64xf32, #tpu.memory_space<vmem>>, vector<1x4x32xf32>,
    return
  }
  func.func @transform_0(%arg0: i32) -> (i32, i32, i32) {
    %c0_i32 = arith.constant 0 : i32
    %c0_i32_0 = arith.constant 0 : i32
    %c0_i32_1 = arith.constant 0 : i32
    return %c0_i32, %arg0, %c0_i32_0 : i32, i32, i32
  }
  func.func @transform_1(%arg0: i32) -> (i32, i32) {
    %c0_i32 = arith.constant 0 : i32
    %c0_i32_0 = arith.constant 0 : i32
    %c0_i32_1 = arith.constant 0 : i32
    return %c0_i32, %c0_i32_0 : i32, i32
  }
  func.func @transform_2(%arg0: i32) -> (i32, i32) {
    %c0_i32 = arith.constant 0 : i32
    %c0_i32_0 = arith.constant 0 : i32
    %c0_i32_1 = arith.constant 0 : i32
    return %c0_i32, %c0_i32_0 : i32, i32
  }
  func.func @transform_3(%arg0: i32) -> (i32, i32) {
    %c0_i32 = arith.constant 0 : i32
    %c0_i32_0 = arith.constant 0 : i32
    %c0_i32_1 = arith.constant 0 : i32
    return %c0_i32, %c0_i32_0 : i32, i32
  }
  func.func @transform_4(%arg0: i32) -> (i32, i32) {
    %c0_i32 = arith.constant 0 : i32
    %c0_i32_0 = arith.constant 0 : i32
    %c0_i32_1 = arith.constant 0 : i32
    return %c0_i32, %c0_i32_0 : i32, i32
  }
  func.func @transform_5(%arg0: i32) -> (i32, i32) {
    %c0_i32 = arith.constant 0 : i32
    %c0_i32_0 = arith.constant 0 : i32
    %c0_i32_1 = arith.constant 0 : i32
    return %c0_i32, %c0_i32_0 : i32, i32
  }
  func.func @transform_6(%arg0: i32) -> (i32, i32) {
    %c0_i32 = arith.constant 0 : i32
    %c0_i32_0 = arith.constant 0 : i32
    %c0_i32_1 = arith.constant 0 : i32
    return %c0_i32, %c0_i32_0 : i32, i32
  }
  func.func @transform_7(%arg0: i32) -> (i32, i32) {
    %c0_i32 = arith.constant 0 : i32
    %c0_i32_0 = arith.constant 0 : i32
    %c0_i32_1 = arith.constant 0 : i32
    return %c0_i32, %c0_i32_0 : i32, i32
  }
  func.func @transform_8(%arg0: i32) -> (i32, i32) {
    %c0_i32 = arith.constant 0 : i32
    %c0_i32_0 = arith.constant 0 : i32
    %c0_i32_1 = arith.constant 0 : i32
    return %c0_i32, %c0_i32_0 : i32, i32
  }
  func.func @transform_9(%arg0: i32) -> (i32, i32, i32) {
    %c0_i32 = arith.constant 0 : i32
    %c0_i32_0 = arith.constant 0 : i32
    %c0_i32_1 = arith.constant 0 : i32
    return %c0_i32, %arg0, %c0_i32_0 : i32, i32, i32
  }
}

</mosaic_0001>

<llo_original>
// kernel: attention_word_rnn.1
$region0: #{attention_word_rnn.1}
  #allocation0 [shape = 'u32[]', space=smem, size = 0x4, offset = 0x4, fixed_abs, tag = 'smem constant byte address 0x4 - core index']
  #allocation1 [shape = 'u32[144,128]{1,0:T(1,128)}', space=vmem, size = 0x12000, scoped, tag = 'internal scratch']
  #allocation2 [shape = 'f32[8,4,96]{2,1,0:T(4,128)}', space=vmem, size = 0x4000, scoped, tag = 'scratch operand']
  #allocation3 [shape = 'f32[8,4,96]{2,1,0:T(4,128)}', space=vmem, size = 0x4000, scoped, tag = 'scratch operand']
  #allocation4 [shape = 'bf16[8,4,32]{2,1,0:T(4,128)(2,1)}', space=vmem, size = 0x2000, scoped, tag = 'scratch operand']
  #allocation5 [shape = 'bf16[8,4,32]{2,1,0:T(4,128)(2,1)}', space=vmem, size = 0x2000, scoped, tag = 'scratch operand']
  #allocation6 [shape = 'f32[8,4]{1,0:T(8,128)}', space=vmem, size = 0x1000, scoped, tag = 'scratch operand']
  %s0 = inlined_call_operand.vmem [shape: bf16[8,4,32], index: 0, kind: input, shape index: {}]
  %s1 = inlined_call_operand.vmem [shape: bf16[32,192], index: 1, kind: input, shape index: {}]
  %s2 = inlined_call_operand.vmem [shape: bf16[64,192], index: 2, kind: input, shape index: {}]
  %s3 = inlined_call_operand.vmem [shape: f32[1,192], index: 3, kind: input, shape index: {}]
  %s4 = inlined_call_operand.vmem [shape: f32[1,64], index: 4, kind: input, shape index: {}]
  %s5 = inlined_call_operand.vmem [shape: bf16[32,64], index: 5, kind: input, shape index: {}]
  %s6 = inlined_call_operand.vmem [shape: bf16[32,64], index: 6, kind: input, shape index: {}]
  %s7 = inlined_call_operand.vmem [shape: f32[1,64], index: 7, kind: input, shape index: {}]
  %s8 = inlined_call_operand.vmem [shape: f32[1,64], index: 8, kind: input, shape index: {}]
  %s9 = inlined_call_operand.hbm [shape: f32[1,4,64], index: 9, kind: output, shape index: {}]
  %s10 = sld [smem:[#allocation0]]
  $region46: #{attention_word_rnn.1} parent=0
    _
  %s12 = ssub.s32 1, %s10
  %s13 = scalar_select 0, %s12, %s10
  $region1: #{attention_word_rnn.1} parent=0
    #allocation7 [shape = 'u8[2048]{0}', space=vmem, size = 0x800, scoped, tag = 'output window, operand 0, single buffered']
    #allocation8 [shape = 's32[1]{0}', space=sflag, size = 0x4, scoped, tag = 'scoped memory for attention_word_rnn.1']
    %14 = vsyncpa [#allocation8], 0
    // Predicated region
    $region2: #{attention_word_rnn.1} parent=1 // pred_check
      _
    $region3: #{attention_word_rnn.1} parent=1 // pred_check_branch
      %16 = sbr.rel (0) target = $region5
    $region4: #{attention_word_rnn.1} parent=1 // pred_region
      _
    $region5: #{attention_word_rnn.1} parent=1 // pred_fallthru
      _
    // Predicated region
    $region6: #{attention_word_rnn.1} parent=1 // pred_check
      _
    $region7: #{attention_word_rnn.1} parent=1 // pred_check_branch
      %18 = sbr.rel (0) target = $region9
    $region8: #{attention_word_rnn.1} parent=1 // pred_region
      _
    $region9: #{attention_word_rnn.1} parent=1 // pred_fallthru
      _
    // Predicated region
    $region10: #{attention_word_rnn.1} parent=1 // pred_check
      _
    $region11: #{attention_word_rnn.1} parent=1 // pred_check_branch
      %20 = sbr.rel (0) target = $region13
    $region12: #{attention_word_rnn.1} parent=1 // pred_region
      _
    $region13: #{attention_word_rnn.1} parent=1 // pred_fallthru
      _
    // Predicated region
    $region14: #{attention_word_rnn.1} parent=1 // pred_check
      _
    $region15: #{attention_word_rnn.1} parent=1 // pred_check_branch
      %22 = sbr.rel (0) target = $region17
    $region16: #{attention_word_rnn.1} parent=1 // pred_region
      _
    $region17: #{attention_word_rnn.1} parent=1 // pred_fallthru
      _
    // Predicated region
    $region18: #{attention_word_rnn.1} parent=1 // pred_check
      _
    $region19: #{attention_word_rnn.1} parent=1 // pred_check_branch
      %24 = sbr.rel (0) target = $region21
    $region20: #{attention_word_rnn.1} parent=1 // pred_region
      _
    $region21: #{attention_word_rnn.1} parent=1 // pred_fallthru
      _
    // Predicated region
    $region22: #{attention_word_rnn.1} parent=1 // pred_check
      _
    $region23: #{attention_word_rnn.1} parent=1 // pred_check_branch
      %26 = sbr.rel (0) target = $region25
    $region24: #{attention_word_rnn.1} parent=1 // pred_region
      _
    $region25: #{attention_word_rnn.1} parent=1 // pred_fallthru
      _
    // Predicated region
    $region26: #{attention_word_rnn.1} parent=1 // pred_check
      _
    $region27: #{attention_word_rnn.1} parent=1 // pred_check_branch
      %28 = sbr.rel (0) target = $region29
    $region28: #{attention_word_rnn.1} parent=1 // pred_region
      _
    $region29: #{attention_word_rnn.1} parent=1 // pred_fallthru
      _
    // Predicated region
    $region30: #{attention_word_rnn.1} parent=1 // pred_check
      _
    $region31: #{attention_word_rnn.1} parent=1 // pred_check_branch
      %30 = sbr.rel (0) target = $region33
    $region32: #{attention_word_rnn.1} parent=1 // pred_region
      _
    $region33: #{attention_word_rnn.1} parent=1 // pred_fallthru
      _
    // Predicated region
    $region34: #{attention_word_rnn.1} parent=1 // pred_check
      _
    $region35: #{attention_word_rnn.1} parent=1 // pred_check_branch
      %32 = sbr.rel (0) target = $region37
    $region36: #{attention_word_rnn.1} parent=1 // pred_region
      _
    $region37: #{attention_word_rnn.1} parent=1 // pred_fallthru
      _
    %v34 = vld [vmem:[%s0] sm:$0x3]
    %v35 = vld [vmem:[%s0 + $0x2] sm:$0x3]
    %v36 = vld [vmem:[%s0 + $0x4] sm:$0x3]
    %v37 = vld [vmem:[%s0 + $0x6] sm:$0x3]
    %v38 = vld [vmem:[%s0 + $0x8] sm:$0x3]
    %v39 = vld [vmem:[%s0 + $0xa] sm:$0x3]
    %v40 = vld [vmem:[%s0 + $0xc] sm:$0x3]
    %v41 = vld [vmem:[%s0 + $0xe] sm:$0x3]
    %v42 = vld [vmem:[%s1] sm:$0xff]
    %v43 = vld [vmem:[%s1 + $0x8] sm:$0xff]
    %v44 = vld [vmem:[%s1 + $0x10] sm:$0xff]
    %v45 = vld [vmem:[%s1 + $0x18] sm:$0xff]
    %v46 = vld [vmem:[%s3] sm:$0x3]
    %v48 = vlaneseq
    %v49 = vshrl.u32 %v48, 7
    %v50 = vsub.s32 0, %v49
    %v51 = vrot.slane %v46, %v50
    %v52 = vlaneseq
    %v53 = vshrl.u32 %v52, 7
    %v54 = vsub.s32 1, %v53
    %v55 = vrot.slane %v46, %v54
    %v66 = vcombine.low %v34, %v35
    %v67 = vcombine.low %v36, %v37
    %v69 = vunpack.c.l.s4 1983009808
    %v70 = vunpack.c.0.s8 %v69
    %v71 = vlaneseq
    %v72 = vshrl.u32 %v71, 7
    %v73 = vsub.s32 %v70, %v72
    %v74 = vrot.slane %v66, %v73
    %v76 = vunpack.c.l.s4 1983009808
    %v77 = vunpack.c.0.s8 %v76
    %v78 = vlaneseq
    %v79 = vshrl.u32 %v78, 7
    %v80 = vsub.s32 %v77, %v79
    %v81 = vrot.slane %v67, %v80
    %v82 = vcombine.low %v74, %v81
    %v83 = vcombine.low %v38, %v39
    %v84 = vcombine.low %v40, %v41
    %v86 = vunpack.c.l.s4 1983009808
    %v87 = vunpack.c.0.s8 %v86
    %v88 = vlaneseq
    %v89 = vshrl.u32 %v88, 7
    %v90 = vsub.s32 %v87, %v89
    %v91 = vrot.slane %v83, %v90
    %v93 = vunpack.c.l.s4 1983009808
    %v94 = vunpack.c.0.s8 %v93
    %v95 = vlaneseq
    %v96 = vshrl.u32 %v95, 7
    %v97 = vsub.s32 %v94, %v96
    %v98 = vrot.slane %v84, %v97
    %v99 = vcombine.low %v91, %v98
    %v104 = vunpack.c.l.b16 %v42
    %v105 = vunpack.c.h.b16 %v42
    %v106 = vunpack.c.l.b16 %v43
    %v107 = vunpack.c.h.b16 %v43
    %v108 = vunpack.c.l.b16 %v44
    %v109 = vunpack.c.h.b16 %v44
    %v110 = vunpack.c.l.b16 %v45
    %v111 = vunpack.c.h.b16 %v45
    %v112 = vpack.c.b16 %v106, %v104
    %v113 = vpack.c.b16 %v107, %v105
    %v114 = vpack.c.b16 %v110, %v108
    %v115 = vpack.c.b16 %v111, %v109
    %vm120 = vcmask 261120
    %v122 = vsel %vm120, %v82, 0
    %v125 = vsel %vm120, %v99, 0
    %127 = vmatprep.subr.bf16.mxu0 %v113
    %128 = vmatpush1.bf16.msra.mxu0 %v112
    %129 = vmatprep.subr.bf16.mxu0 %v115
    %130 = vmatpush1.bf16.msra.mxu0 %v114
    %131 = vmatprep.subr.bf16.mxu0 0
    %132 = vmatpush1.bf16.msra.mxu0 0
    %133 = vmatprep.subr.bf16.mxu0 0
    %134 = vmatpush1.bf16.msra.mxu0 0
    %135 = vmatprep.subr.bf16.mxu0 0
    %136 = vmatpush1.bf16.msra.mxu0 0
    %137 = vmatprep.subr.bf16.mxu0 0
    %138 = vmatpush1.bf16.msra.mxu0 0
    %139 = vmatprep.subr.bf16.mxu0 0
    %140 = vmatpush1.bf16.msra.mxu0 0
    %141 = vmatprep.subr.bf16.mxu0 0
    %142 = vmatpush1.bf16.msra.mxu0 0
    %143 = vmatprep.subr.bf16.mxu0 0
    %144 = vmatpush1.bf16.msra.mxu0 0
    %145 = vmatprep.subr.bf16.mxu0 0
    %146 = vmatpush1.bf16.msra.mxu0 0
    %147 = vmatprep.subr.bf16.mxu0 0
    %148 = vmatpush1.bf16.msra.mxu0 0
    %149 = vmatprep.subr.bf16.mxu0 0
    %150 = vmatpush1.bf16.msra.mxu0 0
    %151 = vmatprep.subr.bf16.mxu0 0
    %152 = vmatpush1.bf16.msra.mxu0 0
    %153 = vmatprep.subr.bf16.mxu0 0
    %154 = vmatpush1.bf16.msra.mxu0 0
    %155 = vmatprep.subr.bf16.mxu0 0
    %156 = vmatpush1.bf16.msra.mxu0 0
    %157 = vmatprep.subr.bf16.mxu0 0
    %158 = vmatpush1.bf16.msra.mxu0 0
    %159 = vmatprep.mubr.bf16.mxu0 0
    %160 = vmatmul.mubr.bf16.gmra.mrb[0].mxu0 %v122
    %v161 = vpop.f32.mrb[0].mxu0
    %v162 = vadd.f32 %v51, %v161
    %v163 = vpop.f32.mrb[0].mxu0
    %v164 = vadd.f32 %v55, %v163
    %v165 = vpop.f32.mrb[0].mxu0
    %v166 = vadd.f32 %v51, %v165
    %v167 = vpop.f32.mrb[0].mxu0
    %v168 = vadd.f32 %v55, %v167
    %169 = vmatprep.mubr.bf16.mxu0 0
    %170 = vmatmul.mubr.bf16.gmra.mrb[0].mxu0 %v125
    %v171 = vpop.f32.mrb[0].mxu0
    %v172 = vadd.f32 %v51, %v171
    %v173 = vpop.f32.mrb[0].mxu0
    %v174 = vadd.f32 %v55, %v173
    %v175 = vpop.f32.mrb[0].mxu0
    %v176 = vadd.f32 %v51, %v175
    %v177 = vpop.f32.mrb[0].mxu0
    %v178 = vadd.f32 %v55, %v177
    %179 = vdwg.mxu0
    %v184 = vcombine.high %v162, %v162
    %v185 = vcombine.high %v166, %v166
    %v186 = vcombine.high %v172, %v172
    %v187 = vcombine.high %v176, %v176
    %s192 = smul.u32 0, 4
    %s193 = scalar_lea.vmem [#allocation2], %s192
    %vm194 = vcmask 781312
    %195 = vst.msk [vmem:[%s193] sm:$0xf] %vm194, %v162
    %196 = vst.msk [vmem:[%s193 + $0x4] sm:$0xf] %vm194, %v184
    %197 = vst.msk [vmem:[%s193 + $0x8] sm:$0xf] %vm194, %v166
    %198 = vst.msk [vmem:[%s193 + $0xc] sm:$0xf] %vm194, %v185
    %199 = vst.msk [vmem:[%s193 + $0x10] sm:$0xf] %vm194, %v172
    %200 = vst.msk [vmem:[%s193 + $0x14] sm:$0xf] %vm194, %v186
    %201 = vst.msk [vmem:[%s193 + $0x18] sm:$0xf] %vm194, %v176
    %202 = vst.msk [vmem:[%s193 + $0x1c] sm:$0xf] %vm194, %v187
    %v207 = vcombine.low %v162, %v164
    %v208 = vcombine.high %v162, %v164
    %v209 = vcombine.low %v166, %v168
    %v210 = vcombine.high %v166, %v168
    %v211 = vcombine.low %v172, %v174
    %v212 = vcombine.high %v172, %v174
    %v213 = vcombine.low %v176, %v178
    %v214 = vcombine.high %v176, %v178
    %v215 = vcombine.high %v207, %v207
    %v216 = vcombine.high %v208, %v208
    %v217 = vcombine.high %v209, %v209
    %v218 = vcombine.high %v210, %v210
    %v219 = vcombine.high %v211, %v211
    %v220 = vcombine.high %v212, %v212
    %v221 = vcombine.high %v213, %v213
    %v222 = vcombine.high %v214, %v214
    %223 = vrot.lane.b32.xlu0 %v207, 32
    %v224 = vpop.permute.xlu0 %223
    %225 = vrot.lane.b32.xlu0 %v215, 32
    %v226 = vpop.permute.xlu0 %225
    %227 = vrot.lane.b32.xlu0 %v208, 32
    %v228 = vpop.permute.xlu0 %227
    %229 = vrot.lane.b32.xlu0 %v216, 32
    %v230 = vpop.permute.xlu0 %229
    %231 = vrot.lane.b32.xlu0 %v209, 32
    %v232 = vpop.permute.xlu0 %231
    %233 = vrot.lane.b32.xlu0 %v217, 32
    %v234 = vpop.permute.xlu0 %233
    %235 = vrot.lane.b32.xlu0 %v210, 32
    %v236 = vpop.permute.xlu0 %235
    %237 = vrot.lane.b32.xlu0 %v218, 32
    %v238 = vpop.permute.xlu0 %237
    %239 = vrot.lane.b32.xlu0 %v211, 32
    %v240 = vpop.permute.xlu0 %239
    %241 = vrot.lane.b32.xlu0 %v219, 32
    %v242 = vpop.permute.xlu0 %241
    %243 = vrot.lane.b32.xlu0 %v212, 32
    %v244 = vpop.permute.xlu0 %243
    %245 = vrot.lane.b32.xlu0 %v220, 32
    %v246 = vpop.permute.xlu0 %245
    %247 = vrot.lane.b32.xlu0 %v213, 32
    %v248 = vpop.permute.xlu0 %247
    %249 = vrot.lane.b32.xlu0 %v221, 32
    %v250 = vpop.permute.xlu0 %249
    %251 = vrot.lane.b32.xlu0 %v214, 32
    %v252 = vpop.permute.xlu0 %251
    %253 = vrot.lane.b32.xlu0 %v222, 32
    %v254 = vpop.permute.xlu0 %253
    %v255 = vsel %vm120, %v224, %v226
    %v256 = vsel %vm120, %v228, %v230
    %v257 = vsel %vm120, %v232, %v234
    %v258 = vsel %vm120, %v236, %v238
    %v259 = vsel %vm120, %v240, %v242
    %v260 = vsel %vm120, %v244, %v246
    %v261 = vsel %vm120, %v248, %v250
    %v262 = vsel %vm120, %v252, %v254
    %s271 = scalar_lea.vmem [#allocation3], %s192
    %272 = vst.msk [vmem:[%s271] sm:$0xf] %vm194, %v255
    %273 = vst.msk [vmem:[%s271 + $0x4] sm:$0xf] %vm194, %v256
    %274 = vst.msk [vmem:[%s271 + $0x8] sm:$0xf] %vm194, %v257
    %275 = vst.msk [vmem:[%s271 + $0xc] sm:$0xf] %vm194, %v258
    %276 = vst.msk [vmem:[%s271 + $0x10] sm:$0xf] %vm194, %v259
    %277 = vst.msk [vmem:[%s271 + $0x14] sm:$0xf] %vm194, %v260
    %278 = vst.msk [vmem:[%s271 + $0x18] sm:$0xf] %vm194, %v261
    %279 = vst.msk [vmem:[%s271 + $0x1c] sm:$0xf] %vm194, %v262
    %v280 = vld [vmem:[%s4] sm:$0x1]
    %v281 = vld [vmem:[#allocation2] sm:$0xf]
    %s282 = scalar_lea.vmem [#allocation3], 28
    %v283 = vld [vmem:[%s282] sm:$0xf]
    %v284 = vld [vmem:[%s2] sm:$0xff]
    %v285 = vld [vmem:[%s2 + $0x8] sm:$0xff]
    %v286 = vld [vmem:[%s2 + $0x10] sm:$0xff]
    %v287 = vld [vmem:[%s2 + $0x18] sm:$0xff]
    %v288 = vld [vmem:[%s2 + $0x20] sm:$0xff]
    %v289 = vld [vmem:[%s2 + $0x28] sm:$0xff]
    %v290 = vld [vmem:[%s2 + $0x30] sm:$0xff]
    %v291 = vld [vmem:[%s2 + $0x38] sm:$0xff]
    %v300 = vunpack.c.l.b16 %v284
    %v301 = vunpack.c.h.b16 %v284
    %v302 = vunpack.c.l.b16 %v285
    %v303 = vunpack.c.h.b16 %v285
    %v304 = vunpack.c.l.b16 %v286
    %v305 = vunpack.c.h.b16 %v286
    %v306 = vunpack.c.l.b16 %v287
    %v307 = vunpack.c.h.b16 %v287
    %v308 = vunpack.c.l.b16 %v288
    %v309 = vunpack.c.h.b16 %v288
    %v310 = vunpack.c.l.b16 %v289
    %v311 = vunpack.c.h.b16 %v289
    %v312 = vunpack.c.l.b16 %v290
    %v313 = vunpack.c.h.b16 %v290
    %v314 = vunpack.c.l.b16 %v291
    %v315 = vunpack.c.h.b16 %v291
    %v316 = vpack.c.b16 %v302, %v300
    %v317 = vpack.c.b16 %v303, %v301
    %v318 = vpack.c.b16 %v306, %v304
    %v319 = vpack.c.b16 %v307, %v305
    %v320 = vpack.c.b16 %v310, %v308
    %v321 = vpack.c.b16 %v311, %v309
    %v322 = vpack.c.b16 %v314, %v312
    %v323 = vpack.c.b16 %v315, %v313
    %vm332 = vcmask 523264
    %v334 = vsel %vm332, 0, 0
    %336 = vmatprep.subr.bf16.mxu0 %v317
    %337 = vmatpush1.bf16.msra.mxu0 %v316
    %338 = vmatprep.subr.bf16.mxu0 %v319
    %339 = vmatpush1.bf16.msra.mxu0 %v318
    %340 = vmatprep.subr.bf16.mxu0 %v321
    %341 = vmatpush1.bf16.msra.mxu0 %v320
    %342 = vmatprep.subr.bf16.mxu0 %v323
    %343 = vmatpush1.bf16.msra.mxu0 %v322
    %344 = vmatprep.subr.bf16.mxu0 0
    %345 = vmatpush1.bf16.msra.mxu0 0
    %346 = vmatprep.subr.bf16.mxu0 0
    %347 = vmatpush1.bf16.msra.mxu0 0
    %348 = vmatprep.subr.bf16.mxu0 0
    %349 = vmatpush1.bf16.msra.mxu0 0
    %350 = vmatprep.subr.bf16.mxu0 0
    %351 = vmatpush1.bf16.msra.mxu0 0
    %352 = vmatprep.subr.bf16.mxu0 0
    %353 = vmatpush1.bf16.msra.mxu0 0
    %354 = vmatprep.subr.bf16.mxu0 0
    %355 = vmatpush1.bf16.msra.mxu0 0
    %356 = vmatprep.subr.bf16.mxu0 0
    %357 = vmatpush1.bf16.msra.mxu0 0
    %358 = vmatprep.subr.bf16.mxu0 0
    %359 = vmatpush1.bf16.msra.mxu0 0
    %360 = vmatprep.subr.bf16.mxu0 0
    %361 = vmatpush1.bf16.msra.mxu0 0
    %362 = vmatprep.subr.bf16.mxu0 0
    %363 = vmatpush1.bf16.msra.mxu0 0
    %364 = vmatprep.subr.bf16.mxu0 0
    %365 = vmatpush1.bf16.msra.mxu0 0
    %366 = vmatprep.subr.bf16.mxu0 0
    %367 = vmatpush1.bf16.msra.mxu0 0
    %368 = vmatprep.mubr.bf16.mxu0 0
    %369 = vmatmul.mubr.bf16.gmra.mrb[0].mxu0 %v334
    %v370 = vpop.f32.mrb[0].mxu0
    %v371 = vadd.f32 0.0, %v370
    %v372 = vpop.f32.mrb[0].mxu0
    %v373 = vadd.f32 0.0, %v372
    %v374 = vpop.f32.mrb[0].mxu0
    %v375 = vpop.f32.mrb[0].mxu0
    %376 = vdwg.mxu0
    %v377 = vadd.f32 %v281, %v371
    %v378 = vxor.u32 %v377, 2147483648
    %v379 = vmul.f32 %v378, 1.442695
    %v380 = vpow.pop %v379
    %v381 = vadd.f32 %v380, 1.0
    %v382 = vrcp.pop %v381
    %v383 = vmul.f32 1.0, %v382
    %386 = vrot.lane.b32.xlu0 %v371, 32
    %v387 = vpop.permute.xlu0 %386
    %388 = vrot.lane.b32.xlu0 %v373, 32
    %v389 = vpop.permute.xlu0 %388
    %v390 = vsel %vm120, %v387, %v389
    %v392 = vadd.f32 %v283, %v390
    %v393 = vxor.u32 %v392, 2147483648
    %v394 = vmul.f32 %v393, 1.442695
    %v395 = vpow.pop %v394
    %v396 = vadd.f32 %v395, 1.0
    %v397 = vrcp.pop %v396
    %v398 = vmul.f32 1.0, %v397
    %v400 = vlaneseq
    %v401 = vshrl.u32 %v400, 7
    %v402 = vsub.s32 0, %v401
    %v403 = vrot.slane %v280, %v402
    %404 = vrot.lane.b32.xlu0 %v403, 64
    %v405 = vpop.permute.xlu0 %404
    %v407 = vadd.f32 %v371, %v405
    %409 = vrot.lane.b32.xlu0 %v407, 64
    %v410 = vpop.permute.xlu0 %409
    %v412 = vmul.f32 %v383, %v410
    %414 = vrot.lane.b32.xlu0 %v412, 64
    %v415 = vpop.permute.xlu0 %414
    %v417 = vadd.f32 %v281, %v415
    %v418 = vtanh.pop %v417
    %v420 = vadd.f32 %v373, %v403
    %422 = vrot.lane.b32.xlu0 %v420, 96
    %v423 = vpop.permute.xlu0 %422
    %v425 = vmul.f32 %v398, %v423
    %427 = vrot.lane.b32.xlu0 %v425, 64
    %v428 = vpop.permute.xlu0 %427
    %v430 = vadd.f32 %v283, %v428
    %v431 = vtanh.pop %v430
    %v432 = vsub.f32 1.0, %v383
    %434 = vrot.lane.b32.xlu0 %v418, 96
    %v435 = vpop.permute.xlu0 %434
    %v437 = vmul.f32 %v432, %v435
    %v438 = vmul.f32 %v383, 0.0
    %v439 = vadd.f32 %v437, %v438
    %v440 = vsub.f32 1.0, %v398
    %442 = vrot.lane.b32.xlu0 %v431, 96
    %v443 = vpop.permute.xlu0 %442
    %v445 = vmul.f32 %v440, %v443
    %v446 = vmul.f32 %v398, 0.0
    %v447 = vadd.f32 %v445, %v446
    %v448 = vpack.c.bf16 %v439, %v439
    %v451 = vunpack.c.l.s4 1983009808
    %v452 = vunpack.c.0.s8 %v451
    %v453 = vlaneseq
    %v454 = vshrl.u32 %v453, 7
    %v455 = vsub.s32 %v452, %v454
    %v456 = vrot.slane %v448, %v455
    %457 = vrot.lane.b32.xlu0 %v456, 96
    %v458 = vpop.permute.xlu0 %457
    %vm460 = vcmask 254976
    %461 = vst.msk [vmem:[#allocation4] sm:$0x3] %vm460, %v458
    %v462 = vpack.c.bf16 %v447, %v447
    %v465 = vunpack.c.l.s4 1983009808
    %v466 = vunpack.c.0.s8 %v465
    %v467 = vlaneseq
    %v468 = vshrl.u32 %v467, 7
    %v469 = vsub.s32 %v466, %v468
    %v470 = vrot.slane %v462, %v469
    %471 = vrot.lane.b32.xlu0 %v470, 96
    %v472 = vpop.permute.xlu0 %471
    %s474 = scalar_lea.vmem [#allocation5], 14
    %475 = vst.msk [vmem:[%s474] sm:$0x3] %vm460, %v472
    %477 = vrot.lane.b32.xlu0 %v439, 96
    %v478 = vpop.permute.xlu0 %477
    %v480 = vsel %vm120, %v478, %v447
    %s481 = scalar_lea.vmem [#allocation2], 4
    %v482 = vld [vmem:[%s481] sm:$0xf]
    %s483 = scalar_lea.vmem [#allocation3], 24
    %v484 = vld [vmem:[%s483] sm:$0xf]
    %v485 = vpack.c.bf16 %v480, %v480
    %v486 = vld [vmem:[%s2] sm:$0xff]
    %v487 = vld [vmem:[%s2 + $0x8] sm:$0xff]
    %v488 = vld [vmem:[%s2 + $0x10] sm:$0xff]
    %v489 = vld [vmem:[%s2 + $0x18] sm:$0xff]
    %v490 = vld [vmem:[%s2 + $0x20] sm:$0xff]
    %v491 = vld [vmem:[%s2 + $0x28] sm:$0xff]
    %v492 = vld [vmem:[%s2 + $0x30] sm:$0xff]
    %v493 = vld [vmem:[%s2 + $0x38] sm:$0xff]
    %v502 = vunpack.c.l.b16 %v486
    %v503 = vunpack.c.h.b16 %v486
    %v504 = vunpack.c.l.b16 %v487
    %v505 = vunpack.c.h.b16 %v487
    %v506 = vunpack.c.l.b16 %v488
    %v507 = vunpack.c.h.b16 %v488
    %v508 = vunpack.c.l.b16 %v489
    %v509 = vunpack.c.h.b16 %v489
    %v510 = vunpack.c.l.b16 %v490
    %v511 = vunpack.c.h.b16 %v490
    %v512 = vunpack.c.l.b16 %v491
    %v513 = vunpack.c.h.b16 %v491
    %v514 = vunpack.c.l.b16 %v492
    %v515 = vunpack.c.h.b16 %v492
    %v516 = vunpack.c.l.b16 %v493
    %v517 = vunpack.c.h.b16 %v493
    %v518 = vpack.c.b16 %v504, %v502
    %v519 = vpack.c.b16 %v505, %v503
    %v520 = vpack.c.b16 %v508, %v506
    %v521 = vpack.c.b16 %v509, %v507
    %v522 = vpack.c.b16 %v512, %v510
    %v523 = vpack.c.b16 %v513, %v511
    %v524 = vpack.c.b16 %v516, %v514
    %v525 = vpack.c.b16 %v517, %v515
    %v535 = vsel %vm332, %v485, 0
    %537 = vmatprep.subr.bf16.mxu0 %v519
    %538 = vmatpush1.bf16.msra.mxu0 %v518
    %539 = vmatprep.subr.bf16.mxu0 %v521
    %540 = vmatpush1.bf16.msra.mxu0 %v520
    %541 = vmatprep.subr.bf16.mxu0 %v523
    %542 = vmatpush1.bf16.msra.mxu0 %v522
    %543 = vmatprep.subr.bf16.mxu0 %v525
    %544 = vmatpush1.bf16.msra.mxu0 %v524
    %545 = vmatprep.subr.bf16.mxu0 0
    %546 = vmatpush1.bf16.msra.mxu0 0
    %547 = vmatprep.subr.bf16.mxu0 0
    %548 = vmatpush1.bf16.msra.mxu0 0
    %549 = vmatprep.subr.bf16.mxu0 0
    %550 = vmatpush1.bf16.msra.mxu0 0
    %551 = vmatprep.subr.bf16.mxu0 0
    %552 = vmatpush1.bf16.msra.mxu0 0
    %553 = vmatprep.subr.bf16.mxu0 0
    %554 = vmatpush1.bf16.msra.mxu0 0
    %555 = vmatprep.subr.bf16.mxu0 0
    %556 = vmatpush1.bf16.msra.mxu0 0
    %557 = vmatprep.subr.bf16.mxu0 0
    %558 = vmatpush1.bf16.msra.mxu0 0
    %559 = vmatprep.subr.bf16.mxu0 0
    %560 = vmatpush1.bf16.msra.mxu0 0
    %561 = vmatprep.subr.bf16.mxu0 0
    %562 = vmatpush1.bf16.msra.mxu0 0
    %563 = vmatprep.subr.bf16.mxu0 0
    %564 = vmatpush1.bf16.msra.mxu0 0
    %565 = vmatprep.subr.bf16.mxu0 0
    %566 = vmatpush1.bf16.msra.mxu0 0
    %567 = vmatprep.subr.bf16.mxu0 0
    %568 = vmatpush1.bf16.msra.mxu0 0
    %569 = vmatprep.mubr.bf16.mxu0 0
    %570 = vmatmul.mubr.bf16.gmra.mrb[0].mxu0 %v535
    %v571 = vpop.f32.mrb[0].mxu0
    %v572 = vadd.f32 0.0, %v571
    %v573 = vpop.f32.mrb[0].mxu0
    %v574 = vadd.f32 0.0, %v573
    %v575 = vpop.f32.mrb[0].mxu0
    %v576 = vpop.f32.mrb[0].mxu0
    %577 = vdwg.mxu0
    %v578 = vadd.f32 %v482, %v572
    %v579 = vxor.u32 %v578, 2147483648
    %v580 = vmul.f32 %v579, 1.442695
    %v581 = vpow.pop %v580
    %v582 = vadd.f32 %v581, 1.0
    %v583 = vrcp.pop %v582
    %v584 = vmul.f32 1.0, %v583
    %587 = vrot.lane.b32.xlu0 %v572, 32
    %v588 = vpop.permute.xlu0 %587
    %589 = vrot.lane.b32.xlu0 %v574, 32
    %v590 = vpop.permute.xlu0 %589
    %v591 = vsel %vm120, %v588, %v590
    %v593 = vadd.f32 %v484, %v591
    %v594 = vxor.u32 %v593, 2147483648
    %v595 = vmul.f32 %v594, 1.442695
    %v596 = vpow.pop %v595
    %v597 = vadd.f32 %v596, 1.0
    %v598 = vrcp.pop %v597
    %v599 = vmul.f32 1.0, %v598
    %v600 = vadd.f32 %v572, %v405
    %602 = vrot.lane.b32.xlu0 %v600, 64
    %v603 = vpop.permute.xlu0 %602
    %v605 = vmul.f32 %v584, %v603
    %607 = vrot.lane.b32.xlu0 %v605, 64
    %v608 = vpop.permute.xlu0 %607
    %v610 = vadd.f32 %v482, %v608
    %v611 = vtanh.pop %v610
    %v612 = vadd.f32 %v574, %v403
    %614 = vrot.lane.b32.xlu0 %v612, 96
    %v615 = vpop.permute.xlu0 %614
    %v617 = vmul.f32 %v599, %v615
    %619 = vrot.lane.b32.xlu0 %v617, 64
    %v620 = vpop.permute.xlu0 %619
    %v622 = vadd.f32 %v484, %v620
    %v623 = vtanh.pop %v622
    %v624 = vsub.f32 1.0, %v584
    %626 = vrot.lane.b32.xlu0 %v611, 96
    %v627 = vpop.permute.xlu0 %626
    %v629 = vmul.f32 %v624, %v627
    %631 = vrot.lane.b32.xlu0 %v480, 32
    %v632 = vpop.permute.xlu0 %631
    %v634 = vmul.f32 %v584, %v632
    %v635 = vadd.f32 %v629, %v634
    %v636 = vsub.f32 1.0, %v599
    %638 = vrot.lane.b32.xlu0 %v623, 96
    %v639 = vpop.permute.xlu0 %638
    %v641 = vmul.f32 %v636, %v639
    %v642 = vmul.f32 %v599, %v480
    %v643 = vadd.f32 %v641, %v642
    %v644 = vpack.c.bf16 %v635, %v635
    %v647 = vunpack.c.l.s4 1983009808
    %v648 = vunpack.c.0.s8 %v647
    %v649 = vlaneseq
    %v650 = vshrl.u32 %v649, 7
    %v651 = vsub.s32 %v648, %v650
    %v652 = vrot.slane %v644, %v651
    %653 = vrot.lane.b32.xlu0 %v652, 96
    %v654 = vpop.permute.xlu0 %653
    %s656 = scalar_lea.vmem [#allocation4], 2
    %657 = vst.msk [vmem:[%s656] sm:$0x3] %vm460, %v654
    %v658 = vpack.c.bf16 %v643, %v643
    %v661 = vunpack.c.l.s4 1983009808
    %v662 = vunpack.c.0.s8 %v661
    %v663 = vlaneseq
    %v664 = vshrl.u32 %v663, 7
    %v665 = vsub.s32 %v662, %v664
    %v666 = vrot.slane %v658, %v665
    %667 = vrot.lane.b32.xlu0 %v666, 96
    %v668 = vpop.permute.xlu0 %667
    %s670 = scalar_lea.vmem [#allocation5], 12
    %671 = vst.msk [vmem:[%s670] sm:$0x3] %vm460, %v668
    %673 = vrot.lane.b32.xlu0 %v635, 96
    %v674 = vpop.permute.xlu0 %673
    %v676 = vsel %vm120, %v674, %v643
    %s677 = scalar_lea.vmem [#allocation2], 8
    %v678 = vld [vmem:[%s677] sm:$0xf]
    %s679 = scalar_lea.vmem [#allocation3], 20
    %v680 = vld [vmem:[%s679] sm:$0xf]
    %v681 = vpack.c.bf16 %v676, %v676
    %v682 = vld [vmem:[%s2] sm:$0xff]
    %v683 = vld [vmem:[%s2 + $0x8] sm:$0xff]
    %v684 = vld [vmem:[%s2 + $0x10] sm:$0xff]
    %v685 = vld [vmem:[%s2 + $0x18] sm:$0xff]
    %v686 = vld [vmem:[%s2 + $0x20] sm:$0xff]
    %v687 = vld [vmem:[%s2 + $0x28] sm:$0xff]
    %v688 = vld [vmem:[%s2 + $0x30] sm:$0xff]
    %v689 = vld [vmem:[%s2 + $0x38] sm:$0xff]
    %v698 = vunpack.c.l.b16 %v682
    %v699 = vunpack.c.h.b16 %v682
    %v700 = vunpack.c.l.b16 %v683
    %v701 = vunpack.c.h.b16 %v683
    %v702 = vunpack.c.l.b16 %v684
    %v703 = vunpack.c.h.b16 %v684
    %v704 = vunpack.c.l.b16 %v685
    %v705 = vunpack.c.h.b16 %v685
    %v706 = vunpack.c.l.b16 %v686
    %v707 = vunpack.c.h.b16 %v686
    %v708 = vunpack.c.l.b16 %v687
    %v709 = vunpack.c.h.b16 %v687
    %v710 = vunpack.c.l.b16 %v688
    %v711 = vunpack.c.h.b16 %v688
    %v712 = vunpack.c.l.b16 %v689
    %v713 = vunpack.c.h.b16 %v689
    %v714 = vpack.c.b16 %v700, %v698
    %v715 = vpack.c.b16 %v701, %v699
    %v716 = vpack.c.b16 %v704, %v702
    %v717 = vpack.c.b16 %v705, %v703
    %v718 = vpack.c.b16 %v708, %v706
    %v719 = vpack.c.b16 %v709, %v707
    %v720 = vpack.c.b16 %v712, %v710
    %v721 = vpack.c.b16 %v713, %v711
    %v731 = vsel %vm332, %v681, 0
    %733 = vmatprep.subr.bf16.mxu0 %v715
    %734 = vmatpush1.bf16.msra.mxu0 %v714
    %735 = vmatprep.subr.bf16.mxu0 %v717
    %736 = vmatpush1.bf16.msra.mxu0 %v716
    %737 = vmatprep.subr.bf16.mxu0 %v719
    %738 = vmatpush1.bf16.msra.mxu0 %v718
    %739 = vmatprep.subr.bf16.mxu0 %v721
    %740 = vmatpush1.bf16.msra.mxu0 %v720
    %741 = vmatprep.subr.bf16.mxu0 0
    %742 = vmatpush1.bf16.msra.mxu0 0
    %743 = vmatprep.subr.bf16.mxu0 0
    %744 = vmatpush1.bf16.msra.mxu0 0
    %745 = vmatprep.subr.bf16.mxu0 0
    %746 = vmatpush1.bf16.msra.mxu0 0
    %747 = vmatprep.subr.bf16.mxu0 0
    %748 = vmatpush1.bf16.msra.mxu0 0
    %749 = vmatprep.subr.bf16.mxu0 0
    %750 = vmatpush1.bf16.msra.mxu0 0
    %751 = vmatprep.subr.bf16.mxu0 0
    %752 = vmatpush1.bf16.msra.mxu0 0
    %753 = vmatprep.subr.bf16.mxu0 0
    %754 = vmatpush1.bf16.msra.mxu0 0
    %755 = vmatprep.subr.bf16.mxu0 0
    %756 = vmatpush1.bf16.msra.mxu0 0
    %757 = vmatprep.subr.bf16.mxu0 0
    %758 = vmatpush1.bf16.msra.mxu0 0
    %759 = vmatprep.subr.bf16.mxu0 0
    %760 = vmatpush1.bf16.msra.mxu0 0
    %761 = vmatprep.subr.bf16.mxu0 0
    %762 = vmatpush1.bf16.msra.mxu0 0
    %763 = vmatprep.subr.bf16.mxu0 0
    %764 = vmatpush1.bf16.msra.mxu0 0
    %765 = vmatprep.mubr.bf16.mxu0 0
    %766 = vmatmul.mubr.bf16.gmra.mrb[0].mxu0 %v731
    %v767 = vpop.f32.mrb[0].mxu0
    %v768 = vadd.f32 0.0, %v767
    %v769 = vpop.f32.mrb[0].mxu0
    %v770 = vadd.f32 0.0, %v769
    %v771 = vpop.f32.mrb[0].mxu0
    %v772 = vpop.f32.mrb[0].mxu0
    %773 = vdwg.mxu0
    %v774 = vadd.f32 %v678, %v768
    %v775 = vxor.u32 %v774, 2147483648
    %v776 = vmul.f32 %v775, 1.442695
    %v777 = vpow.pop %v776
    %v778 = vadd.f32 %v777, 1.0
    %v779 = vrcp.pop %v778
    %v780 = vmul.f32 1.0, %v779
    %783 = vrot.lane.b32.xlu0 %v768, 32
    %v784 = vpop.permute.xlu0 %783
    %785 = vrot.lane.b32.xlu0 %v770, 32
    %v786 = vpop.permute.xlu0 %785
    %v787 = vsel %vm120, %v784, %v786
    %v789 = vadd.f32 %v680, %v787
    %v790 = vxor.u32 %v789, 2147483648
    %v791 = vmul.f32 %v790, 1.442695
    %v792 = vpow.pop %v791
    %v793 = vadd.f32 %v792, 1.0
    %v794 = vrcp.pop %v793
    %v795 = vmul.f32 1.0, %v794
    %v796 = vadd.f32 %v768, %v405
    %798 = vrot.lane.b32.xlu0 %v796, 64
    %v799 = vpop.permute.xlu0 %798
    %v801 = vmul.f32 %v780, %v799
    %803 = vrot.lane.b32.xlu0 %v801, 64
    %v804 = vpop.permute.xlu0 %803
    %v806 = vadd.f32 %v678, %v804
    %v807 = vtanh.pop %v806
    %v808 = vadd.f32 %v770, %v403
    %810 = vrot.lane.b32.xlu0 %v808, 96
    %v811 = vpop.permute.xlu0 %810
    %v813 = vmul.f32 %v795, %v811
    %815 = vrot.lane.b32.xlu0 %v813, 64
    %v816 = vpop.permute.xlu0 %815
    %v818 = vadd.f32 %v680, %v816
    %v819 = vtanh.pop %v818
    %v820 = vsub.f32 1.0, %v780
    %822 = vrot.lane.b32.xlu0 %v807, 96
    %v823 = vpop.permute.xlu0 %822
    %v825 = vmul.f32 %v820, %v823
    %827 = vrot.lane.b32.xlu0 %v676, 32
    %v828 = vpop.permute.xlu0 %827
    %v830 = vmul.f32 %v780, %v828
    %v831 = vadd.f32 %v825, %v830
    %v832 = vsub.f32 1.0, %v795
    %834 = vrot.lane.b32.xlu0 %v819, 96
    %v835 = vpop.permute.xlu0 %834
    %v837 = vmul.f32 %v832, %v835
    %v838 = vmul.f32 %v795, %v676
    %v839 = vadd.f32 %v837, %v838
    %v840 = vpack.c.bf16 %v831, %v831
    %v843 = vunpack.c.l.s4 1983009808
    %v844 = vunpack.c.0.s8 %v843
    %v845 = vlaneseq
    %v846 = vshrl.u32 %v845, 7
    %v847 = vsub.s32 %v844, %v846
    %v848 = vrot.slane %v840, %v847
    %849 = vrot.lane.b32.xlu0 %v848, 96
    %v850 = vpop.permute.xlu0 %849
    %s852 = scalar_lea.vmem [#allocation4], 4
    %853 = vst.msk [vmem:[%s852] sm:$0x3] %vm460, %v850
    %v854 = vpack.c.bf16 %v839, %v839
    %v857 = vunpack.c.l.s4 1983009808
    %v858 = vunpack.c.0.s8 %v857
    %v859 = vlaneseq
    %v860 = vshrl.u32 %v859, 7
    %v861 = vsub.s32 %v858, %v860
    %v862 = vrot.slane %v854, %v861
    %863 = vrot.lane.b32.xlu0 %v862, 96
    %v864 = vpop.permute.xlu0 %863
    %s866 = scalar_lea.vmem [#allocation5], 10
    %867 = vst.msk [vmem:[%s866] sm:$0x3] %vm460, %v864
    %869 = vrot.lane.b32.xlu0 %v831, 96
    %v870 = vpop.permute.xlu0 %869
    %v872 = vsel %vm120, %v870, %v839
    %s873 = scalar_lea.vmem [#allocation2], 12
    %v874 = vld [vmem:[%s873] sm:$0xf]
    %s875 = scalar_lea.vmem [#allocation3], 16
    %v876 = vld [vmem:[%s875] sm:$0xf]
    %v877 = vpack.c.bf16 %v872, %v872
    %v878 = vld [vmem:[%s2] sm:$0xff]
    %v879 = vld [vmem:[%s2 + $0x8] sm:$0xff]
    %v880 = vld [vmem:[%s2 + $0x10] sm:$0xff]
    %v881 = vld [vmem:[%s2 + $0x18] sm:$0xff]
    %v882 = vld [vmem:[%s2 + $0x20] sm:$0xff]
    %v883 = vld [vmem:[%s2 + $0x28] sm:$0xff]
    %v884 = vld [vmem:[%s2 + $0x30] sm:$0xff]
    %v885 = vld [vmem:[%s2 + $0x38] sm:$0xff]
    %v894 = vunpack.c.l.b16 %v878
    %v895 = vunpack.c.h.b16 %v878
    %v896 = vunpack.c.l.b16 %v879
    %v897 = vunpack.c.h.b16 %v879
    %v898 = vunpack.c.l.b16 %v880
    %v899 = vunpack.c.h.b16 %v880
    %v900 = vunpack.c.l.b16 %v881
    %v901 = vunpack.c.h.b16 %v881
    %v902 = vunpack.c.l.b16 %v882
    %v903 = vunpack.c.h.b16 %v882
    %v904 = vunpack.c.l.b16 %v883
    %v905 = vunpack.c.h.b16 %v883
    %v906 = vunpack.c.l.b16 %v884
    %v907 = vunpack.c.h.b16 %v884
    %v908 = vunpack.c.l.b16 %v885
    %v909 = vunpack.c.h.b16 %v885
    %v910 = vpack.c.b16 %v896, %v894
    %v911 = vpack.c.b16 %v897, %v895
    %v912 = vpack.c.b16 %v900, %v898
    %v913 = vpack.c.b16 %v901, %v899
    %v914 = vpack.c.b16 %v904, %v902
    %v915 = vpack.c.b16 %v905, %v903
    %v916 = vpack.c.b16 %v908, %v906
    %v917 = vpack.c.b16 %v909, %v907
    %v927 = vsel %vm332, %v877, 0
    %929 = vmatprep.subr.bf16.mxu0 %v911
    %930 = vmatpush1.bf16.msra.mxu0 %v910
    %931 = vmatprep.subr.bf16.mxu0 %v913
    %932 = vmatpush1.bf16.msra.mxu0 %v912
    %933 = vmatprep.subr.bf16.mxu0 %v915
    %934 = vmatpush1.bf16.msra.mxu0 %v914
    %935 = vmatprep.subr.bf16.mxu0 %v917
    %936 = vmatpush1.bf16.msra.mxu0 %v916
    %937 = vmatprep.subr.bf16.mxu0 0
    %938 = vmatpush1.bf16.msra.mxu0 0
    %939 = vmatprep.subr.bf16.mxu0 0
    %940 = vmatpush1.bf16.msra.mxu0 0
    %941 = vmatprep.subr.bf16.mxu0 0
    %942 = vmatpush1.bf16.msra.mxu0 0
    %943 = vmatprep.subr.bf16.mxu0 0
    %944 = vmatpush1.bf16.msra.mxu0 0
    %945 = vmatprep.subr.bf16.mxu0 0
    %946 = vmatpush1.bf16.msra.mxu0 0
    %947 = vmatprep.subr.bf16.mxu0 0
    %948 = vmatpush1.bf16.msra.mxu0 0
    %949 = vmatprep.subr.bf16.mxu0 0
    %950 = vmatpush1.bf16.msra.mxu0 0
    %951 = vmatprep.subr.bf16.mxu0 0
    %952 = vmatpush1.bf16.msra.mxu0 0
    %953 = vmatprep.subr.bf16.mxu0 0
    %954 = vmatpush1.bf16.msra.mxu0 0
    %955 = vmatprep.subr.bf16.mxu0 0
    %956 = vmatpush1.bf16.msra.mxu0 0
    %957 = vmatprep.subr.bf16.mxu0 0
    %958 = vmatpush1.bf16.msra.mxu0 0
    %959 = vmatprep.subr.bf16.mxu0 0
    %960 = vmatpush1.bf16.msra.mxu0 0
    %961 = vmatprep.mubr.bf16.mxu0 0
    %962 = vmatmul.mubr.bf16.gmra.mrb[0].mxu0 %v927
    %v963 = vpop.f32.mrb[0].mxu0
    %v964 = vadd.f32 0.0, %v963
    %v965 = vpop.f32.mrb[0].mxu0
    %v966 = vadd.f32 0.0, %v965
    %v967 = vpop.f32.mrb[0].mxu0
    %v968 = vpop.f32.mrb[0].mxu0
    %969 = vdwg.mxu0
    %v970 = vadd.f32 %v874, %v964
    %v971 = vxor.u32 %v970, 2147483648
    %v972 = vmul.f32 %v971, 1.442695
    %v973 = vpow.pop %v972
    %v974 = vadd.f32 %v973, 1.0
    %v975 = vrcp.pop %v974
    %v976 = vmul.f32 1.0, %v975
    %979 = vrot.lane.b32.xlu0 %v964, 32
    %v980 = vpop.permute.xlu0 %979
    %981 = vrot.lane.b32.xlu0 %v966, 32
    %v982 = vpop.permute.xlu0 %981
    %v983 = vsel %vm120, %v980, %v982
    %v985 = vadd.f32 %v876, %v983
    %v986 = vxor.u32 %v985, 2147483648
    %v987 = vmul.f32 %v986, 1.442695
    %v988 = vpow.pop %v987
    %v989 = vadd.f32 %v988, 1.0
    %v990 = vrcp.pop %v989
    %v991 = vmul.f32 1.0, %v990
    %v992 = vadd.f32 %v964, %v405
    %994 = vrot.lane.b32.xlu0 %v992, 64
    %v995 = vpop.permute.xlu0 %994
    %v997 = vmul.f32 %v976, %v995
    %999 = vrot.lane.b32.xlu0 %v997, 64
    %v1000 = vpop.permute.xlu0 %999
    %v1002 = vadd.f32 %v874, %v1000
    %v1003 = vtanh.pop %v1002
    %v1004 = vadd.f32 %v966, %v403
    %1006 = vrot.lane.b32.xlu0 %v1004, 96
    %v1007 = vpop.permute.xlu0 %1006
    %v1009 = vmul.f32 %v991, %v1007
    %1011 = vrot.lane.b32.xlu0 %v1009, 64
    %v1012 = vpop.permute.xlu0 %1011
    %v1014 = vadd.f32 %v876, %v1012
    %v1015 = vtanh.pop %v1014
    %v1016 = vsub.f32 1.0, %v976
    %1018 = vrot.lane.b32.xlu0 %v1003, 96
    %v1019 = vpop.permute.xlu0 %1018
    %v1021 = vmul.f32 %v1016, %v1019
    %1023 = vrot.lane.b32.xlu0 %v872, 32
    %v1024 = vpop.permute.xlu0 %1023
    %v1026 = vmul.f32 %v976, %v1024
    %v1027 = vadd.f32 %v1021, %v1026
    %v1028 = vsub.f32 1.0, %v991
    %1030 = vrot.lane.b32.xlu0 %v1015, 96
    %v1031 = vpop.permute.xlu0 %1030
    %v1033 = vmul.f32 %v1028, %v1031
    %v1034 = vmul.f32 %v991, %v872
    %v1035 = vadd.f32 %v1033, %v1034
    %v1036 = vpack.c.bf16 %v1027, %v1027
    %v1039 = vunpack.c.l.s4 1983009808
    %v1040 = vunpack.c.0.s8 %v1039
    %v1041 = vlaneseq
    %v1042 = vshrl.u32 %v1041, 7
    %v1043 = vsub.s32 %v1040, %v1042
    %v1044 = vrot.slane %v1036, %v1043
    %1045 = vrot.lane.b32.xlu0 %v1044, 96
    %v1046 = vpop.permute.xlu0 %1045
    %s1048 = scalar_lea.vmem [#allocation4], 6
    %1049 = vst.msk [vmem:[%s1048] sm:$0x3] %vm460, %v1046
    %v1050 = vpack.c.bf16 %v1035, %v1035
    %v1053 = vunpack.c.l.s4 1983009808
    %v1054 = vunpack.c.0.s8 %v1053
    %v1055 = vlaneseq
    %v1056 = vshrl.u32 %v1055, 7
    %v1057 = vsub.s32 %v1054, %v1056
    %v1058 = vrot.slane %v1050, %v1057
    %1059 = vrot.lane.b32.xlu0 %v1058, 96
    %v1060 = vpop.permute.xlu0 %1059
    %s1062 = scalar_lea.vmem [#allocation5], 8
    %1063 = vst.msk [vmem:[%s1062] sm:$0x3] %vm460, %v1060
    %1065 = vrot.lane.b32.xlu0 %v1027, 96
    %v1066 = vpop.permute.xlu0 %1065
    %v1068 = vsel %vm120, %v1066, %v1035
    %s1069 = scalar_lea.vmem [#allocation2], 16
    %v1070 = vld [vmem:[%s1069] sm:$0xf]
    %s1071 = scalar_lea.vmem [#allocation3], 12
    %v1072 = vld [vmem:[%s1071] sm:$0xf]
    %v1073 = vpack.c.bf16 %v1068, %v1068
    %v1074 = vld [vmem:[%s2] sm:$0xff]
    %v1075 = vld [vmem:[%s2 + $0x8] sm:$0xff]
    %v1076 = vld [vmem:[%s2 + $0x10] sm:$0xff]
    %v1077 = vld [vmem:[%s2 + $0x18] sm:$0xff]
    %v1078 = vld [vmem:[%s2 + $0x20] sm:$0xff]
    %v1079 = vld [vmem:[%s2 + $0x28] sm:$0xff]
    %v1080 = vld [vmem:[%s2 + $0x30] sm:$0xff]
    %v1081 = vld [vmem:[%s2 + $0x38] sm:$0xff]
    %v1090 = vunpack.c.l.b16 %v1074
    %v1091 = vunpack.c.h.b16 %v1074
    %v1092 = vunpack.c.l.b16 %v1075
    %v1093 = vunpack.c.h.b16 %v1075
    %v1094 = vunpack.c.l.b16 %v1076
    %v1095 = vunpack.c.h.b16 %v1076
    %v1096 = vunpack.c.l.b16 %v1077
    %v1097 = vunpack.c.h.b16 %v1077
    %v1098 = vunpack.c.l.b16 %v1078
    %v1099 = vunpack.c.h.b16 %v1078
    %v1100 = vunpack.c.l.b16 %v1079
    %v1101 = vunpack.c.h.b16 %v1079
    %v1102 = vunpack.c.l.b16 %v1080
    %v1103 = vunpack.c.h.b16 %v1080
    %v1104 = vunpack.c.l.b16 %v1081
    %v1105 = vunpack.c.h.b16 %v1081
    %v1106 = vpack.c.b16 %v1092, %v1090
    %v1107 = vpack.c.b16 %v1093, %v1091
    %v1108 = vpack.c.b16 %v1096, %v1094
    %v1109 = vpack.c.b16 %v1097, %v1095
    %v1110 = vpack.c.b16 %v1100, %v1098
    %v1111 = vpack.c.b16 %v1101, %v1099
    %v1112 = vpack.c.b16 %v1104, %v1102
    %v1113 = vpack.c.b16 %v1105, %v1103
    %v1123 = vsel %vm332, %v1073, 0
    %1125 = vmatprep.subr.bf16.mxu0 %v1107
    %1126 = vmatpush1.bf16.msra.mxu0 %v1106
    %1127 = vmatprep.subr.bf16.mxu0 %v1109
    %1128 = vmatpush1.bf16.msra.mxu0 %v1108
    %1129 = vmatprep.subr.bf16.mxu0 %v1111
    %1130 = vmatpush1.bf16.msra.mxu0 %v1110
    %1131 = vmatprep.subr.bf16.mxu0 %v1113
    %1132 = vmatpush1.bf16.msra.mxu0 %v1112
    %1133 = vmatprep.subr.bf16.mxu0 0
    %1134 = vmatpush1.bf16.msra.mxu0 0
    %1135 = vmatprep.subr.bf16.mxu0 0
    %1136 = vmatpush1.bf16.msra.mxu0 0
    %1137 = vmatprep.subr.bf16.mxu0 0
    %1138 = vmatpush1.bf16.msra.mxu0 0
    %1139 = vmatprep.subr.bf16.mxu0 0
    %1140 = vmatpush1.bf16.msra.mxu0 0
    %1141 = vmatprep.subr.bf16.mxu0 0
    %1142 = vmatpush1.bf16.msra.mxu0 0
    %1143 = vmatprep.subr.bf16.mxu0 0
    %1144 = vmatpush1.bf16.msra.mxu0 0
    %1145 = vmatprep.subr.bf16.mxu0 0
    %1146 = vmatpush1.bf16.msra.mxu0 0
    %1147 = vmatprep.subr.bf16.mxu0 0
    %1148 = vmatpush1.bf16.msra.mxu0 0
    %1149 = vmatprep.subr.bf16.mxu0 0
    %1150 = vmatpush1.bf16.msra.mxu0 0
    %1151 = vmatprep.subr.bf16.mxu0 0
    %1152 = vmatpush1.bf16.msra.mxu0 0
    %1153 = vmatprep.subr.bf16.mxu0 0
    %1154 = vmatpush1.bf16.msra.mxu0 0
    %1155 = vmatprep.subr.bf16.mxu0 0
    %1156 = vmatpush1.bf16.msra.mxu0 0
    %1157 = vmatprep.mubr.bf16.mxu0 0
    %1158 = vmatmul.mubr.bf16.gmra.mrb[0].mxu0 %v1123
    %v1159 = vpop.f32.mrb[0].mxu0
    %v1160 = vadd.f32 0.0, %v1159
    %v1161 = vpop.f32.mrb[0].mxu0
    %v1162 = vadd.f32 0.0, %v1161
    %v1163 = vpop.f32.mrb[0].mxu0
    %v1164 = vpop.f32.mrb[0].mxu0
    %1165 = vdwg.mxu0
    %v1166 = vadd.f32 %v1070, %v1160
    %v1167 = vxor.u32 %v1166, 2147483648
    %v1168 = vmul.f32 %v1167, 1.442695
    %v1169 = vpow.pop %v1168
    %v1170 = vadd.f32 %v1169, 1.0
    %v1171 = vrcp.pop %v1170
    %v1172 = vmul.f32 1.0, %v1171
    %1175 = vrot.lane.b32.xlu0 %v1160, 32
    %v1176 = vpop.permute.xlu0 %1175
    %1177 = vrot.lane.b32.xlu0 %v1162, 32
    %v1178 = vpop.permute.xlu0 %1177
    %v1179 = vsel %vm120, %v1176, %v1178
    %v1181 = vadd.f32 %v1072, %v1179
    %v1182 = vxor.u32 %v1181, 2147483648
    %v1183 = vmul.f32 %v1182, 1.442695
    %v1184 = vpow.pop %v1183
    %v1185 = vadd.f32 %v1184, 1.0
    %v1186 = vrcp.pop %v1185
    %v1187 = vmul.f32 1.0, %v1186
    %v1188 = vadd.f32 %v1160, %v405
    %1190 = vrot.lane.b32.xlu0 %v1188, 64
    %v1191 = vpop.permute.xlu0 %1190
    %v1193 = vmul.f32 %v1172, %v1191
    %1195 = vrot.lane.b32.xlu0 %v1193, 64
    %v1196 = vpop.permute.xlu0 %1195
    %v1198 = vadd.f32 %v1070, %v1196
    %v1199 = vtanh.pop %v1198
    %v1200 = vadd.f32 %v1162, %v403
    %1202 = vrot.lane.b32.xlu0 %v1200, 96
    %v1203 = vpop.permute.xlu0 %1202
    %v1205 = vmul.f32 %v1187, %v1203
    %1207 = vrot.lane.b32.xlu0 %v1205, 64
    %v1208 = vpop.permute.xlu0 %1207
    %v1210 = vadd.f32 %v1072, %v1208
    %v1211 = vtanh.pop %v1210
    %v1212 = vsub.f32 1.0, %v1172
    %1214 = vrot.lane.b32.xlu0 %v1199, 96
    %v1215 = vpop.permute.xlu0 %1214
    %v1217 = vmul.f32 %v1212, %v1215
    %1219 = vrot.lane.b32.xlu0 %v1068, 32
    %v1220 = vpop.permute.xlu0 %1219
    %v1222 = vmul.f32 %v1172, %v1220
    %v1223 = vadd.f32 %v1217, %v1222
    %v1224 = vsub.f32 1.0, %v1187
    %1226 = vrot.lane.b32.xlu0 %v1211, 96
    %v1227 = vpop.permute.xlu0 %1226
    %v1229 = vmul.f32 %v1224, %v1227
    %v1230 = vmul.f32 %v1187, %v1068
    %v1231 = vadd.f32 %v1229, %v1230
    %v1232 = vpack.c.bf16 %v1223, %v1223
    %v1235 = vunpack.c.l.s4 1983009808
    %v1236 = vunpack.c.0.s8 %v1235
    %v1237 = vlaneseq
    %v1238 = vshrl.u32 %v1237, 7
    %v1239 = vsub.s32 %v1236, %v1238
    %v1240 = vrot.slane %v1232, %v1239
    %1241 = vrot.lane.b32.xlu0 %v1240, 96
    %v1242 = vpop.permute.xlu0 %1241
    %s1244 = scalar_lea.vmem [#allocation4], 8
    %1245 = vst.msk [vmem:[%s1244] sm:$0x3] %vm460, %v1242
    %v1246 = vpack.c.bf16 %v1231, %v1231
    %v1249 = vunpack.c.l.s4 1983009808
    %v1250 = vunpack.c.0.s8 %v1249
    %v1251 = vlaneseq
    %v1252 = vshrl.u32 %v1251, 7
    %v1253 = vsub.s32 %v1250, %v1252
    %v1254 = vrot.slane %v1246, %v1253
    %1255 = vrot.lane.b32.xlu0 %v1254, 96
    %v1256 = vpop.permute.xlu0 %1255
    %s1258 = scalar_lea.vmem [#allocation5], 6
    %1259 = vst.msk [vmem:[%s1258] sm:$0x3] %vm460, %v1256
    %1261 = vrot.lane.b32.xlu0 %v1223, 96
    %v1262 = vpop.permute.xlu0 %1261
    %v1264 = vsel %vm120, %v1262, %v1231
    %s1265 = scalar_lea.vmem [#allocation2], 20
    %v1266 = vld [vmem:[%s1265] sm:$0xf]
    %s1267 = scalar_lea.vmem [#allocation3], 8
    %v1268 = vld [vmem:[%s1267] sm:$0xf]
    %v1269 = vpack.c.bf16 %v1264, %v1264
    %v1270 = vld [vmem:[%s2] sm:$0xff]
    %v1271 = vld [vmem:[%s2 + $0x8] sm:$0xff]
    %v1272 = vld [vmem:[%s2 + $0x10] sm:$0xff]
    %v1273 = vld [vmem:[%s2 + $0x18] sm:$0xff]
    %v1274 = vld [vmem:[%s2 + $0x20] sm:$0xff]
    %v1275 = vld [vmem:[%s2 + $0x28] sm:$0xff]
    %v1276 = vld [vmem:[%s2 + $0x30] sm:$0xff]
    %v1277 = vld [vmem:[%s2 + $0x38] sm:$0xff]
    %v1286 = vunpack.c.l.b16 %v1270
    %v1287 = vunpack.c.h.b16 %v1270
    %v1288 = vunpack.c.l.b16 %v1271
    %v1289 = vunpack.c.h.b16 %v1271
    %v1290 = vunpack.c.l.b16 %v1272
    %v1291 = vunpack.c.h.b16 %v1272
    %v1292 = vunpack.c.l.b16 %v1273
    %v1293 = vunpack.c.h.b16 %v1273
    %v1294 = vunpack.c.l.b16 %v1274
    %v1295 = vunpack.c.h.b16 %v1274
    %v1296 = vunpack.c.l.b16 %v1275
    %v1297 = vunpack.c.h.b16 %v1275
    %v1298 = vunpack.c.l.b16 %v1276
    %v1299 = vunpack.c.h.b16 %v1276
    %v1300 = vunpack.c.l.b16 %v1277
    %v1301 = vunpack.c.h.b16 %v1277
    %v1302 = vpack.c.b16 %v1288, %v1286
    %v1303 = vpack.c.b16 %v1289, %v1287
    %v1304 = vpack.c.b16 %v1292, %v1290
    %v1305 = vpack.c.b16 %v1293, %v1291
    %v1306 = vpack.c.b16 %v1296, %v1294
    %v1307 = vpack.c.b16 %v1297, %v1295
    %v1308 = vpack.c.b16 %v1300, %v1298
    %v1309 = vpack.c.b16 %v1301, %v1299
    %v1319 = vsel %vm332, %v1269, 0
    %1321 = vmatprep.subr.bf16.mxu0 %v1303
    %1322 = vmatpush1.bf16.msra.mxu0 %v1302
    %1323 = vmatprep.subr.bf16.mxu0 %v1305
    %1324 = vmatpush1.bf16.msra.mxu0 %v1304
    %1325 = vmatprep.subr.bf16.mxu0 %v1307
    %1326 = vmatpush1.bf16.msra.mxu0 %v1306
    %1327 = vmatprep.subr.bf16.mxu0 %v1309
    %1328 = vmatpush1.bf16.msra.mxu0 %v1308
    %1329 = vmatprep.subr.bf16.mxu0 0
    %1330 = vmatpush1.bf16.msra.mxu0 0
    %1331 = vmatprep.subr.bf16.mxu0 0
    %1332 = vmatpush1.bf16.msra.mxu0 0
    %1333 = vmatprep.subr.bf16.mxu0 0
    %1334 = vmatpush1.bf16.msra.mxu0 0
    %1335 = vmatprep.subr.bf16.mxu0 0
    %1336 = vmatpush1.bf16.msra.mxu0 0
    %1337 = vmatprep.subr.bf16.mxu0 0
    %1338 = vmatpush1.bf16.msra.mxu0 0
    %1339 = vmatprep.subr.bf16.mxu0 0
    %1340 = vmatpush1.bf16.msra.mxu0 0
    %1341 = vmatprep.subr.bf16.mxu0 0
    %1342 = vmatpush1.bf16.msra.mxu0 0
    %1343 = vmatprep.subr.bf16.mxu0 0
    %1344 = vmatpush1.bf16.msra.mxu0 0
    %1345 = vmatprep.subr.bf16.mxu0 0
    %1346 = vmatpush1.bf16.msra.mxu0 0
    %1347 = vmatprep.subr.bf16.mxu0 0
    %1348 = vmatpush1.bf16.msra.mxu0 0
    %1349 = vmatprep.subr.bf16.mxu0 0
    %1350 = vmatpush1.bf16.msra.mxu0 0
    %1351 = vmatprep.subr.bf16.mxu0 0
    %1352 = vmatpush1.bf16.msra.mxu0 0
    %1353 = vmatprep.mubr.bf16.mxu0 0
    %1354 = vmatmul.mubr.bf16.gmra.mrb[0].mxu0 %v1319
    %v1355 = vpop.f32.mrb[0].mxu0
    %v1356 = vadd.f32 0.0, %v1355
    %v1357 = vpop.f32.mrb[0].mxu0
    %v1358 = vadd.f32 0.0, %v1357
    %v1359 = vpop.f32.mrb[0].mxu0
    %v1360 = vpop.f32.mrb[0].mxu0
    %1361 = vdwg.mxu0
    %v1362 = vadd.f32 %v1266, %v1356
    %v1363 = vxor.u32 %v1362, 2147483648
    %v1364 = vmul.f32 %v1363, 1.442695
    %v1365 = vpow.pop %v1364
    %v1366 = vadd.f32 %v1365, 1.0
    %v1367 = vrcp.pop %v1366
    %v1368 = vmul.f32 1.0, %v1367
    %1371 = vrot.lane.b32.xlu0 %v1356, 32
    %v1372 = vpop.permute.xlu0 %1371
    %1373 = vrot.lane.b32.xlu0 %v1358, 32
    %v1374 = vpop.permute.xlu0 %1373
    %v1375 = vsel %vm120, %v1372, %v1374
    %v1377 = vadd.f32 %v1268, %v1375
    %v1378 = vxor.u32 %v1377, 2147483648
    %v1379 = vmul.f32 %v1378, 1.442695
    %v1380 = vpow.pop %v1379
    %v1381 = vadd.f32 %v1380, 1.0
    %v1382 = vrcp.pop %v1381
    %v1383 = vmul.f32 1.0, %v1382
    %v1384 = vadd.f32 %v1356, %v405
    %1386 = vrot.lane.b32.xlu0 %v1384, 64
    %v1387 = vpop.permute.xlu0 %1386
    %v1389 = vmul.f32 %v1368, %v1387
    %1391 = vrot.lane.b32.xlu0 %v1389, 64
    %v1392 = vpop.permute.xlu0 %1391
    %v1394 = vadd.f32 %v1266, %v1392
    %v1395 = vtanh.pop %v1394
    %v1396 = vadd.f32 %v1358, %v403
    %1398 = vrot.lane.b32.xlu0 %v1396, 96
    %v1399 = vpop.permute.xlu0 %1398
    %v1401 = vmul.f32 %v1383, %v1399
    %1403 = vrot.lane.b32.xlu0 %v1401, 64
    %v1404 = vpop.permute.xlu0 %1403
    %v1406 = vadd.f32 %v1268, %v1404
    %v1407 = vtanh.pop %v1406
    %v1408 = vsub.f32 1.0, %v1368
    %1410 = vrot.lane.b32.xlu0 %v1395, 96
    %v1411 = vpop.permute.xlu0 %1410
    %v1413 = vmul.f32 %v1408, %v1411
    %1415 = vrot.lane.b32.xlu0 %v1264, 32
    %v1416 = vpop.permute.xlu0 %1415
    %v1418 = vmul.f32 %v1368, %v1416
    %v1419 = vadd.f32 %v1413, %v1418
    %v1420 = vsub.f32 1.0, %v1383
    %1422 = vrot.lane.b32.xlu0 %v1407, 96
    %v1423 = vpop.permute.xlu0 %1422
    %v1425 = vmul.f32 %v1420, %v1423
    %v1426 = vmul.f32 %v1383, %v1264
    %v1427 = vadd.f32 %v1425, %v1426
    %v1428 = vpack.c.bf16 %v1419, %v1419
    %v1431 = vunpack.c.l.s4 1983009808
    %v1432 = vunpack.c.0.s8 %v1431
    %v1433 = vlaneseq
    %v1434 = vshrl.u32 %v1433, 7
    %v1435 = vsub.s32 %v1432, %v1434
    %v1436 = vrot.slane %v1428, %v1435
    %1437 = vrot.lane.b32.xlu0 %v1436, 96
    %v1438 = vpop.permute.xlu0 %1437
    %s1440 = scalar_lea.vmem [#allocation4], 10
    %1441 = vst.msk [vmem:[%s1440] sm:$0x3] %vm460, %v1438
    %v1442 = vpack.c.bf16 %v1427, %v1427
    %v1445 = vunpack.c.l.s4 1983009808
    %v1446 = vunpack.c.0.s8 %v1445
    %v1447 = vlaneseq
    %v1448 = vshrl.u32 %v1447, 7
    %v1449 = vsub.s32 %v1446, %v1448
    %v1450 = vrot.slane %v1442, %v1449
    %1451 = vrot.lane.b32.xlu0 %v1450, 96
    %v1452 = vpop.permute.xlu0 %1451
    %s1454 = scalar_lea.vmem [#allocation5], 4
    %1455 = vst.msk [vmem:[%s1454] sm:$0x3] %vm460, %v1452
    %1457 = vrot.lane.b32.xlu0 %v1419, 96
    %v1458 = vpop.permute.xlu0 %1457
    %v1460 = vsel %vm120, %v1458, %v1427
    %s1461 = scalar_lea.vmem [#allocation2], 24
    %v1462 = vld [vmem:[%s1461] sm:$0xf]
    %s1463 = scalar_lea.vmem [#allocation3], 4
    %v1464 = vld [vmem:[%s1463] sm:$0xf]
    %v1465 = vpack.c.bf16 %v1460, %v1460
    %v1466 = vld [vmem:[%s2] sm:$0xff]
    %v1467 = vld [vmem:[%s2 + $0x8] sm:$0xff]
    %v1468 = vld [vmem:[%s2 + $0x10] sm:$0xff]
    %v1469 = vld [vmem:[%s2 + $0x18] sm:$0xff]
    %v1470 = vld [vmem:[%s2 + $0x20] sm:$0xff]
    %v1471 = vld [vmem:[%s2 + $0x28] sm:$0xff]
    %v1472 = vld [vmem:[%s2 + $0x30] sm:$0xff]
    %v1473 = vld [vmem:[%s2 + $0x38] sm:$0xff]
    %v1482 = vunpack.c.l.b16 %v1466
    %v1483 = vunpack.c.h.b16 %v1466
    %v1484 = vunpack.c.l.b16 %v1467
    %v1485 = vunpack.c.h.b16 %v1467
    %v1486 = vunpack.c.l.b16 %v1468
    %v1487 = vunpack.c.h.b16 %v1468
    %v1488 = vunpack.c.l.b16 %v1469
    %v1489 = vunpack.c.h.b16 %v1469
    %v1490 = vunpack.c.l.b16 %v1470
    %v1491 = vunpack.c.h.b16 %v1470
    %v1492 = vunpack.c.l.b16 %v1471
    %v1493 = vunpack.c.h.b16 %v1471
    %v1494 = vunpack.c.l.b16 %v1472
    %v1495 = vunpack.c.h.b16 %v1472
    %v1496 = vunpack.c.l.b16 %v1473
    %v1497 = vunpack.c.h.b16 %v1473
    %v1498 = vpack.c.b16 %v1484, %v1482
    %v1499 = vpack.c.b16 %v1485, %v1483
    %v1500 = vpack.c.b16 %v1488, %v1486
    %v1501 = vpack.c.b16 %v1489, %v1487
    %v1502 = vpack.c.b16 %v1492, %v1490
    %v1503 = vpack.c.b16 %v1493, %v1491
    %v1504 = vpack.c.b16 %v1496, %v1494
    %v1505 = vpack.c.b16 %v1497, %v1495
    %v1515 = vsel %vm332, %v1465, 0
    %1517 = vmatprep.subr.bf16.mxu0 %v1499
    %1518 = vmatpush1.bf16.msra.mxu0 %v1498
    %1519 = vmatprep.subr.bf16.mxu0 %v1501
    %1520 = vmatpush1.bf16.msra.mxu0 %v1500
    %1521 = vmatprep.subr.bf16.mxu0 %v1503
    %1522 = vmatpush1.bf16.msra.mxu0 %v1502
    %1523 = vmatprep.subr.bf16.mxu0 %v1505
    %1524 = vmatpush1.bf16.msra.mxu0 %v1504
    %1525 = vmatprep.subr.bf16.mxu0 0
    %1526 = vmatpush1.bf16.msra.mxu0 0
    %1527 = vmatprep.subr.bf16.mxu0 0
    %1528 = vmatpush1.bf16.msra.mxu0 0
    %1529 = vmatprep.subr.bf16.mxu0 0
    %1530 = vmatpush1.bf16.msra.mxu0 0
    %1531 = vmatprep.subr.bf16.mxu0 0
    %1532 = vmatpush1.bf16.msra.mxu0 0
    %1533 = vmatprep.subr.bf16.mxu0 0
    %1534 = vmatpush1.bf16.msra.mxu0 0
    %1535 = vmatprep.subr.bf16.mxu0 0
    %1536 = vmatpush1.bf16.msra.mxu0 0
    %1537 = vmatprep.subr.bf16.mxu0 0
    %1538 = vmatpush1.bf16.msra.mxu0 0
    %1539 = vmatprep.subr.bf16.mxu0 0
    %1540 = vmatpush1.bf16.msra.mxu0 0
    %1541 = vmatprep.subr.bf16.mxu0 0
    %1542 = vmatpush1.bf16.msra.mxu0 0
    %1543 = vmatprep.subr.bf16.mxu0 0
    %1544 = vmatpush1.bf16.msra.mxu0 0
    %1545 = vmatprep.subr.bf16.mxu0 0
    %1546 = vmatpush1.bf16.msra.mxu0 0
    %1547 = vmatprep.subr.bf16.mxu0 0
    %1548 = vmatpush1.bf16.msra.mxu0 0
    %1549 = vmatprep.mubr.bf16.mxu0 0
    %1550 = vmatmul.mubr.bf16.gmra.mrb[0].mxu0 %v1515
    %v1551 = vpop.f32.mrb[0].mxu0
    %v1552 = vadd.f32 0.0, %v1551
    %v1553 = vpop.f32.mrb[0].mxu0
    %v1554 = vadd.f32 0.0, %v1553
    %v1555 = vpop.f32.mrb[0].mxu0
    %v1556 = vpop.f32.mrb[0].mxu0
    %1557 = vdwg.mxu0
    %v1558 = vadd.f32 %v1462, %v1552
    %v1559 = vxor.u32 %v1558, 2147483648
    %v1560 = vmul.f32 %v1559, 1.442695
    %v1561 = vpow.pop %v1560
    %v1562 = vadd.f32 %v1561, 1.0
    %v1563 = vrcp.pop %v1562
    %v1564 = vmul.f32 1.0, %v1563
    %1567 = vrot.lane.b32.xlu0 %v1552, 32
    %v1568 = vpop.permute.xlu0 %1567
    %1569 = vrot.lane.b32.xlu0 %v1554, 32
    %v1570 = vpop.permute.xlu0 %1569
    %v1571 = vsel %vm120, %v1568, %v1570
    %v1573 = vadd.f32 %v1464, %v1571
    %v1574 = vxor.u32 %v1573, 2147483648
    %v1575 = vmul.f32 %v1574, 1.442695
    %v1576 = vpow.pop %v1575
    %v1577 = vadd.f32 %v1576, 1.0
    %v1578 = vrcp.pop %v1577
    %v1579 = vmul.f32 1.0, %v1578
    %v1580 = vadd.f32 %v1552, %v405
    %1582 = vrot.lane.b32.xlu0 %v1580, 64
    %v1583 = vpop.permute.xlu0 %1582
    %v1585 = vmul.f32 %v1564, %v1583
    %1587 = vrot.lane.b32.xlu0 %v1585, 64
    %v1588 = vpop.permute.xlu0 %1587
    %v1590 = vadd.f32 %v1462, %v1588
    %v1591 = vtanh.pop %v1590
    %v1592 = vadd.f32 %v1554, %v403
    %1594 = vrot.lane.b32.xlu0 %v1592, 96
    %v1595 = vpop.permute.xlu0 %1594
    %v1597 = vmul.f32 %v1579, %v1595
    %1599 = vrot.lane.b32.xlu0 %v1597, 64
    %v1600 = vpop.permute.xlu0 %1599
    %v1602 = vadd.f32 %v1464, %v1600
    %v1603 = vtanh.pop %v1602
    %v1604 = vsub.f32 1.0, %v1564
    %1606 = vrot.lane.b32.xlu0 %v1591, 96
    %v1607 = vpop.permute.xlu0 %1606
    %v1609 = vmul.f32 %v1604, %v1607
    %1611 = vrot.lane.b32.xlu0 %v1460, 32
    %v1612 = vpop.permute.xlu0 %1611
    %v1614 = vmul.f32 %v1564, %v1612
    %v1615 = vadd.f32 %v1609, %v1614
    %v1616 = vsub.f32 1.0, %v1579
    %1618 = vrot.lane.b32.xlu0 %v1603, 96
    %v1619 = vpop.permute.xlu0 %1618
    %v1621 = vmul.f32 %v1616, %v1619
    %v1622 = vmul.f32 %v1579, %v1460
    %v1623 = vadd.f32 %v1621, %v1622
    %v1624 = vpack.c.bf16 %v1615, %v1615
    %v1627 = vunpack.c.l.s4 1983009808
    %v1628 = vunpack.c.0.s8 %v1627
    %v1629 = vlaneseq
    %v1630 = vshrl.u32 %v1629, 7
    %v1631 = vsub.s32 %v1628, %v1630
    %v1632 = vrot.slane %v1624, %v1631
    %1633 = vrot.lane.b32.xlu0 %v1632, 96
    %v1634 = vpop.permute.xlu0 %1633
    %s1636 = scalar_lea.vmem [#allocation4], 12
    %1637 = vst.msk [vmem:[%s1636] sm:$0x3] %vm460, %v1634
    %v1638 = vpack.c.bf16 %v1623, %v1623
    %v1641 = vunpack.c.l.s4 1983009808
    %v1642 = vunpack.c.0.s8 %v1641
    %v1643 = vlaneseq
    %v1644 = vshrl.u32 %v1643, 7
    %v1645 = vsub.s32 %v1642, %v1644
    %v1646 = vrot.slane %v1638, %v1645
    %1647 = vrot.lane.b32.xlu0 %v1646, 96
    %v1648 = vpop.permute.xlu0 %1647
    %s1650 = scalar_lea.vmem [#allocation5], 2
    %1651 = vst.msk [vmem:[%s1650] sm:$0x3] %vm460, %v1648
    %1653 = vrot.lane.b32.xlu0 %v1615, 96
    %v1654 = vpop.permute.xlu0 %1653
    %v1656 = vsel %vm120, %v1654, %v1623
    %s1657 = scalar_lea.vmem [#allocation2], 28
    %v1658 = vld [vmem:[%s1657] sm:$0xf]
    %v1659 = vld [vmem:[#allocation3] sm:$0xf]
    %v1660 = vpack.c.bf16 %v1656, %v1656
    %v1661 = vld [vmem:[%s2] sm:$0xff]
    %v1662 = vld [vmem:[%s2 + $0x8] sm:$0xff]
    %v1663 = vld [vmem:[%s2 + $0x10] sm:$0xff]
    %v1664 = vld [vmem:[%s2 + $0x18] sm:$0xff]
    %v1665 = vld [vmem:[%s2 + $0x20] sm:$0xff]
    %v1666 = vld [vmem:[%s2 + $0x28] sm:$0xff]
    %v1667 = vld [vmem:[%s2 + $0x30] sm:$0xff]
    %v1668 = vld [vmem:[%s2 + $0x38] sm:$0xff]
    %v1677 = vunpack.c.l.b16 %v1661
    %v1678 = vunpack.c.h.b16 %v1661
    %v1679 = vunpack.c.l.b16 %v1662
    %v1680 = vunpack.c.h.b16 %v1662
    %v1681 = vunpack.c.l.b16 %v1663
    %v1682 = vunpack.c.h.b16 %v1663
    %v1683 = vunpack.c.l.b16 %v1664
    %v1684 = vunpack.c.h.b16 %v1664
    %v1685 = vunpack.c.l.b16 %v1665
    %v1686 = vunpack.c.h.b16 %v1665
    %v1687 = vunpack.c.l.b16 %v1666
    %v1688 = vunpack.c.h.b16 %v1666
    %v1689 = vunpack.c.l.b16 %v1667
    %v1690 = vunpack.c.h.b16 %v1667
    %v1691 = vunpack.c.l.b16 %v1668
    %v1692 = vunpack.c.h.b16 %v1668
    %v1693 = vpack.c.b16 %v1679, %v1677
    %v1694 = vpack.c.b16 %v1680, %v1678
    %v1695 = vpack.c.b16 %v1683, %v1681
    %v1696 = vpack.c.b16 %v1684, %v1682
    %v1697 = vpack.c.b16 %v1687, %v1685
    %v1698 = vpack.c.b16 %v1688, %v1686
    %v1699 = vpack.c.b16 %v1691, %v1689
    %v1700 = vpack.c.b16 %v1692, %v1690
    %v1710 = vsel %vm332, %v1660, 0
    %1712 = vmatprep.subr.bf16.mxu0 %v1694
    %1713 = vmatpush1.bf16.msra.mxu0 %v1693
    %1714 = vmatprep.subr.bf16.mxu0 %v1696
    %1715 = vmatpush1.bf16.msra.mxu0 %v1695
    %1716 = vmatprep.subr.bf16.mxu0 %v1698
    %1717 = vmatpush1.bf16.msra.mxu0 %v1697
    %1718 = vmatprep.subr.bf16.mxu0 %v1700
    %1719 = vmatpush1.bf16.msra.mxu0 %v1699
    %1720 = vmatprep.subr.bf16.mxu0 0
    %1721 = vmatpush1.bf16.msra.mxu0 0
    %1722 = vmatprep.subr.bf16.mxu0 0
    %1723 = vmatpush1.bf16.msra.mxu0 0
    %1724 = vmatprep.subr.bf16.mxu0 0
    %1725 = vmatpush1.bf16.msra.mxu0 0
    %1726 = vmatprep.subr.bf16.mxu0 0
    %1727 = vmatpush1.bf16.msra.mxu0 0
    %1728 = vmatprep.subr.bf16.mxu0 0
    %1729 = vmatpush1.bf16.msra.mxu0 0
    %1730 = vmatprep.subr.bf16.mxu0 0
    %1731 = vmatpush1.bf16.msra.mxu0 0
    %1732 = vmatprep.subr.bf16.mxu0 0
    %1733 = vmatpush1.bf16.msra.mxu0 0
    %1734 = vmatprep.subr.bf16.mxu0 0
    %1735 = vmatpush1.bf16.msra.mxu0 0
    %1736 = vmatprep.subr.bf16.mxu0 0
    %1737 = vmatpush1.bf16.msra.mxu0 0
    %1738 = vmatprep.subr.bf16.mxu0 0
    %1739 = vmatpush1.bf16.msra.mxu0 0
    %1740 = vmatprep.subr.bf16.mxu0 0
    %1741 = vmatpush1.bf16.msra.mxu0 0
    %1742 = vmatprep.subr.bf16.mxu0 0
    %1743 = vmatpush1.bf16.msra.mxu0 0
    %1744 = vmatprep.mubr.bf16.mxu0 0
    %1745 = vmatmul.mubr.bf16.gmra.mrb[0].mxu0 %v1710
    %v1746 = vpop.f32.mrb[0].mxu0
    %v1747 = vadd.f32 0.0, %v1746
    %v1748 = vpop.f32.mrb[0].mxu0
    %v1749 = vadd.f32 0.0, %v1748
    %v1750 = vpop.f32.mrb[0].mxu0
    %v1751 = vpop.f32.mrb[0].mxu0
    %1752 = vdwg.mxu0
    %v1753 = vadd.f32 %v1658, %v1747
    %v1754 = vxor.u32 %v1753, 2147483648
    %v1755 = vmul.f32 %v1754, 1.442695
    %v1756 = vpow.pop %v1755
    %v1757 = vadd.f32 %v1756, 1.0
    %v1758 = vrcp.pop %v1757
    %v1759 = vmul.f32 1.0, %v1758
    %1762 = vrot.lane.b32.xlu0 %v1747, 32
    %v1763 = vpop.permute.xlu0 %1762
    %1764 = vrot.lane.b32.xlu0 %v1749, 32
    %v1765 = vpop.permute.xlu0 %1764
    %v1766 = vsel %vm120, %v1763, %v1765
    %v1768 = vadd.f32 %v1659, %v1766
    %v1769 = vxor.u32 %v1768, 2147483648
    %v1770 = vmul.f32 %v1769, 1.442695
    %v1771 = vpow.pop %v1770
    %v1772 = vadd.f32 %v1771, 1.0
    %v1773 = vrcp.pop %v1772
    %v1774 = vmul.f32 1.0, %v1773
    %v1775 = vadd.f32 %v1747, %v405
    %1777 = vrot.lane.b32.xlu0 %v1775, 64
    %v1778 = vpop.permute.xlu0 %1777
    %v1780 = vmul.f32 %v1759, %v1778
    %1782 = vrot.lane.b32.xlu0 %v1780, 64
    %v1783 = vpop.permute.xlu0 %1782
    %v1785 = vadd.f32 %v1658, %v1783
    %v1786 = vtanh.pop %v1785
    %v1787 = vadd.f32 %v1749, %v403
    %1789 = vrot.lane.b32.xlu0 %v1787, 96
    %v1790 = vpop.permute.xlu0 %1789
    %v1792 = vmul.f32 %v1774, %v1790
    %1794 = vrot.lane.b32.xlu0 %v1792, 64
    %v1795 = vpop.permute.xlu0 %1794
    %v1797 = vadd.f32 %v1659, %v1795
    %v1798 = vtanh.pop %v1797
    %v1799 = vsub.f32 1.0, %v1759
    %1801 = vrot.lane.b32.xlu0 %v1786, 96
    %v1802 = vpop.permute.xlu0 %1801
    %v1804 = vmul.f32 %v1799, %v1802
    %1806 = vrot.lane.b32.xlu0 %v1656, 32
    %v1807 = vpop.permute.xlu0 %1806
    %v1809 = vmul.f32 %v1759, %v1807
    %v1810 = vadd.f32 %v1804, %v1809
    %v1811 = vsub.f32 1.0, %v1774
    %1813 = vrot.lane.b32.xlu0 %v1798, 96
    %v1814 = vpop.permute.xlu0 %1813
    %v1816 = vmul.f32 %v1811, %v1814
    %v1817 = vmul.f32 %v1774, %v1656
    %v1818 = vadd.f32 %v1816, %v1817
    %v1819 = vpack.c.bf16 %v1810, %v1810
    %v1822 = vunpack.c.l.s4 1983009808
    %v1823 = vunpack.c.0.s8 %v1822
    %v1824 = vlaneseq
    %v1825 = vshrl.u32 %v1824, 7
    %v1826 = vsub.s32 %v1823, %v1825
    %v1827 = vrot.slane %v1819, %v1826
    %1828 = vrot.lane.b32.xlu0 %v1827, 96
    %v1829 = vpop.permute.xlu0 %1828
    %s1831 = scalar_lea.vmem [#allocation4], 14
    %1832 = vst.msk [vmem:[%s1831] sm:$0x3] %vm460, %v1829
    %v1833 = vpack.c.bf16 %v1818, %v1818
    %v1836 = vunpack.c.l.s4 1983009808
    %v1837 = vunpack.c.0.s8 %v1836
    %v1838 = vlaneseq
    %v1839 = vshrl.u32 %v1838, 7
    %v1840 = vsub.s32 %v1837, %v1839
    %v1841 = vrot.slane %v1833, %v1840
    %1842 = vrot.lane.b32.xlu0 %v1841, 96
    %v1843 = vpop.permute.xlu0 %1842
    %1845 = vst.msk [vmem:[#allocation5] sm:$0x3] %vm460, %v1843
    %v1846 = vld [vmem:[#allocation4] sm:$0x3]
    %v1847 = vld [vmem:[#allocation4 + $0x2] sm:$0x3]
    %v1848 = vld [vmem:[#allocation4 + $0x4] sm:$0x3]
    %v1849 = vld [vmem:[#allocation4 + $0x6] sm:$0x3]
    %v1850 = vld [vmem:[#allocation4 + $0x8] sm:$0x3]
    %v1851 = vld [vmem:[#allocation4 + $0xa] sm:$0x3]
    %v1852 = vld [vmem:[#allocation4 + $0xc] sm:$0x3]
    %v1853 = vld [vmem:[#allocation4 + $0xe] sm:$0x3]
    %v1854 = vld [vmem:[#allocation5] sm:$0x3]
    %v1855 = vld [vmem:[#allocation5 + $0x2] sm:$0x3]
    %v1856 = vld [vmem:[#allocation5 + $0x4] sm:$0x3]
    %v1857 = vld [vmem:[#allocation5 + $0x6] sm:$0x3]
    %v1858 = vld [vmem:[#allocation5 + $0x8] sm:$0x3]
    %v1859 = vld [vmem:[#allocation5 + $0xa] sm:$0x3]
    %v1860 = vld [vmem:[#allocation5 + $0xc] sm:$0x3]
    %v1861 = vld [vmem:[#allocation5 + $0xe] sm:$0x3]
    %v1862 = vld [vmem:[%s5] sm:$0xf]
    %v1863 = vld [vmem:[%s5 + $0x4] sm:$0xf]
    %v1864 = vld [vmem:[%s5 + $0x8] sm:$0xf]
    %v1865 = vld [vmem:[%s5 + $0xc] sm:$0xf]
    %v1866 = vld [vmem:[%s6] sm:$0xf]
    %v1867 = vld [vmem:[%s6 + $0x4] sm:$0xf]
    %v1868 = vld [vmem:[%s6 + $0x8] sm:$0xf]
    %v1869 = vld [vmem:[%s6 + $0xc] sm:$0xf]
    %v1878 = vcombine.low %v1854, %v1855
    %v1879 = vcombine.low %v1856, %v1857
    %v1881 = vunpack.c.l.s4 1983009808
    %v1882 = vunpack.c.0.s8 %v1881
    %v1883 = vlaneseq
    %v1884 = vshrl.u32 %v1883, 7
    %v1885 = vsub.s32 %v1882, %v1884
    %v1886 = vrot.slane %v1878, %v1885
    %v1888 = vunpack.c.l.s4 1983009808
    %v1889 = vunpack.c.0.s8 %v1888
    %v1890 = vlaneseq
    %v1891 = vshrl.u32 %v1890, 7
    %v1892 = vsub.s32 %v1889, %v1891
    %v1893 = vrot.slane %v1879, %v1892
    %v1894 = vcombine.low %v1886, %v1893
    %v1895 = vcombine.low %v1858, %v1859
    %v1896 = vcombine.low %v1860, %v1861
    %v1898 = vunpack.c.l.s4 1983009808
    %v1899 = vunpack.c.0.s8 %v1898
    %v1900 = vlaneseq
    %v1901 = vshrl.u32 %v1900, 7
    %v1902 = vsub.s32 %v1899, %v1901
    %v1903 = vrot.slane %v1895, %v1902
    %v1905 = vunpack.c.l.s4 1983009808
    %v1906 = vunpack.c.0.s8 %v1905
    %v1907 = vlaneseq
    %v1908 = vshrl.u32 %v1907, 7
    %v1909 = vsub.s32 %v1906, %v1908
    %v1910 = vrot.slane %v1896, %v1909
    %v1911 = vcombine.low %v1903, %v1910
    %v1916 = vunpack.c.l.b16 %v1866
    %v1917 = vunpack.c.l.b16 %v1867
    %v1918 = vunpack.c.l.b16 %v1868
    %v1919 = vunpack.c.l.b16 %v1869
    %v1920 = vpack.c.b16 %v1917, %v1916
    %v1921 = vpack.c.b16 %v1919, %v1918
    %v1925 = vsel %vm120, %v1894, 0
    %v1928 = vsel %vm120, %v1911, 0
    %1930 = vmatprep.subr.bf16.mxu0 0
    %1931 = vmatpush1.bf16.msra.mxu0 %v1920
    %1932 = vmatprep.subr.bf16.mxu0 0
    %1933 = vmatpush1.bf16.msra.mxu0 %v1921
    %1934 = vmatprep.subr.bf16.mxu0 0
    %1935 = vmatpush1.bf16.msra.mxu0 0
    %1936 = vmatprep.subr.bf16.mxu0 0
    %1937 = vmatpush1.bf16.msra.mxu0 0
    %1938 = vmatprep.subr.bf16.mxu0 0
    %1939 = vmatpush1.bf16.msra.mxu0 0
    %1940 = vmatprep.subr.bf16.mxu0 0
    %1941 = vmatpush1.bf16.msra.mxu0 0
    %1942 = vmatprep.subr.bf16.mxu0 0
    %1943 = vmatpush1.bf16.msra.mxu0 0
    %1944 = vmatprep.subr.bf16.mxu0 0
    %1945 = vmatpush1.bf16.msra.mxu0 0
    %1946 = vmatprep.subr.bf16.mxu0 0
    %1947 = vmatpush1.bf16.msra.mxu0 0
    %1948 = vmatprep.subr.bf16.mxu0 0
    %1949 = vmatpush1.bf16.msra.mxu0 0
    %1950 = vmatprep.subr.bf16.mxu0 0
    %1951 = vmatpush1.bf16.msra.mxu0 0
    %1952 = vmatprep.subr.bf16.mxu0 0
    %1953 = vmatpush1.bf16.msra.mxu0 0
    %1954 = vmatprep.subr.bf16.mxu0 0
    %1955 = vmatpush1.bf16.msra.mxu0 0
    %1956 = vmatprep.subr.bf16.mxu0 0
    %1957 = vmatpush1.bf16.msra.mxu0 0
    %1958 = vmatprep.subr.bf16.mxu0 0
    %1959 = vmatpush1.bf16.msra.mxu0 0
    %1960 = vmatprep.subr.bf16.mxu0 0
    %1961 = vmatpush1.bf16.msra.mxu0 0
    %1962 = vmatprep.mubr.bf16.mxu0 0
    %1963 = vmatmul.mubr.bf16.gmra.mrb[0].mxu0 %v1925
    %v1964 = vpop.f32.mrb[0].mxu0
    %v1965 = vadd.f32 0.0, %v1964
    %v1966 = vpop.f32.mrb[0].mxu0
    %v1967 = vpop.f32.mrb[0].mxu0
    %v1968 = vadd.f32 0.0, %v1967
    %v1969 = vpop.f32.mrb[0].mxu0
    %1970 = vmatprep.mubr.bf16.mxu0 0
    %1971 = vmatmul.mubr.bf16.gmra.mrb[0].mxu0 %v1928
    %v1972 = vpop.f32.mrb[0].mxu0
    %v1973 = vadd.f32 0.0, %v1972
    %v1974 = vpop.f32.mrb[0].mxu0
    %v1975 = vpop.f32.mrb[0].mxu0
    %v1976 = vadd.f32 0.0, %v1975
    %v1977 = vpop.f32.mrb[0].mxu0
    %1978 = vdwg.mxu0
    %v1987 = vcombine.low %v1846, %v1847
    %v1988 = vcombine.low %v1848, %v1849
    %v1990 = vunpack.c.l.s4 1983009808
    %v1991 = vunpack.c.0.s8 %v1990
    %v1992 = vlaneseq
    %v1993 = vshrl.u32 %v1992, 7
    %v1994 = vsub.s32 %v1991, %v1993
    %v1995 = vrot.slane %v1987, %v1994
    %v1997 = vunpack.c.l.s4 1983009808
    %v1998 = vunpack.c.0.s8 %v1997
    %v1999 = vlaneseq
    %v2000 = vshrl.u32 %v1999, 7
    %v2001 = vsub.s32 %v1998, %v2000
    %v2002 = vrot.slane %v1988, %v2001
    %v2003 = vcombine.low %v1995, %v2002
    %v2004 = vcombine.low %v1850, %v1851
    %v2005 = vcombine.low %v1852, %v1853
    %v2007 = vunpack.c.l.s4 1983009808
    %v2008 = vunpack.c.0.s8 %v2007
    %v2009 = vlaneseq
    %v2010 = vshrl.u32 %v2009, 7
    %v2011 = vsub.s32 %v2008, %v2010
    %v2012 = vrot.slane %v2004, %v2011
    %v2014 = vunpack.c.l.s4 1983009808
    %v2015 = vunpack.c.0.s8 %v2014
    %v2016 = vlaneseq
    %v2017 = vshrl.u32 %v2016, 7
    %v2018 = vsub.s32 %v2015, %v2017
    %v2019 = vrot.slane %v2005, %v2018
    %v2020 = vcombine.low %v2012, %v2019
    %v2025 = vunpack.c.l.b16 %v1862
    %v2026 = vunpack.c.l.b16 %v1863
    %v2027 = vunpack.c.l.b16 %v1864
    %v2028 = vunpack.c.l.b16 %v1865
    %v2029 = vpack.c.b16 %v2026, %v2025
    %v2030 = vpack.c.b16 %v2028, %v2027
    %v2034 = vsel %vm120, %v2003, 0
    %v2037 = vsel %vm120, %v2020, 0
    %2039 = vmatprep.subr.bf16.mxu0 0
    %2040 = vmatpush1.bf16.msra.mxu0 %v2029
    %2041 = vmatprep.subr.bf16.mxu0 0
    %2042 = vmatpush1.bf16.msra.mxu0 %v2030
    %2043 = vmatprep.subr.bf16.mxu0 0
    %2044 = vmatpush1.bf16.msra.mxu0 0
    %2045 = vmatprep.subr.bf16.mxu0 0
    %2046 = vmatpush1.bf16.msra.mxu0 0
    %2047 = vmatprep.subr.bf16.mxu0 0
    %2048 = vmatpush1.bf16.msra.mxu0 0
    %2049 = vmatprep.subr.bf16.mxu0 0
    %2050 = vmatpush1.bf16.msra.mxu0 0
    %2051 = vmatprep.subr.bf16.mxu0 0
    %2052 = vmatpush1.bf16.msra.mxu0 0
    %2053 = vmatprep.subr.bf16.mxu0 0
    %2054 = vmatpush1.bf16.msra.mxu0 0
    %2055 = vmatprep.subr.bf16.mxu0 0
    %2056 = vmatpush1.bf16.msra.mxu0 0
    %2057 = vmatprep.subr.bf16.mxu0 0
    %2058 = vmatpush1.bf16.msra.mxu0 0
    %2059 = vmatprep.subr.bf16.mxu0 0
    %2060 = vmatpush1.bf16.msra.mxu0 0
    %2061 = vmatprep.subr.bf16.mxu0 0
    %2062 = vmatpush1.bf16.msra.mxu0 0
    %2063 = vmatprep.subr.bf16.mxu0 0
    %2064 = vmatpush1.bf16.msra.mxu0 0
    %2065 = vmatprep.subr.bf16.mxu0 0
    %2066 = vmatpush1.bf16.msra.mxu0 0
    %2067 = vmatprep.subr.bf16.mxu0 0
    %2068 = vmatpush1.bf16.msra.mxu0 0
    %2069 = vmatprep.subr.bf16.mxu0 0
    %2070 = vmatpush1.bf16.msra.mxu0 0
    %2071 = vmatprep.mubr.bf16.mxu0 0
    %2072 = vmatmul.mubr.bf16.gmra.mrb[0].mxu0 %v2034
    %v2073 = vpop.f32.mrb[0].mxu0
    %v2074 = vadd.f32 %v1965, %v2073
    %v2075 = vpop.f32.mrb[0].mxu0
    %v2076 = vpop.f32.mrb[0].mxu0
    %v2077 = vadd.f32 %v1968, %v2076
    %v2078 = vpop.f32.mrb[0].mxu0
    %2079 = vmatprep.mubr.bf16.mxu0 0
    %2080 = vmatmul.mubr.bf16.gmra.mrb[0].mxu0 %v2037
    %v2081 = vpop.f32.mrb[0].mxu0
    %v2082 = vadd.f32 %v1973, %v2081
    %v2083 = vpop.f32.mrb[0].mxu0
    %v2084 = vpop.f32.mrb[0].mxu0
    %v2085 = vadd.f32 %v1976, %v2084
    %v2086 = vpop.f32.mrb[0].mxu0
    %2087 = vdwg.mxu0
    %v2088 = vld [vmem:[%s7] sm:$0x1]
    %v2090 = vlaneseq
    %v2091 = vshrl.u32 %v2090, 7
    %v2092 = vsub.s32 0, %v2091
    %v2093 = vrot.slane %v2088, %v2092
    %v2095 = vadd.f32 %v2074, %v2093
    %v2096 = vadd.f32 %v2077, %v2093
    %v2097 = vadd.f32 %v2082, %v2093
    %v2098 = vadd.f32 %v2085, %v2093
    %v2099 = vtanh.pop %v2095
    %v2100 = vtanh.pop %v2096
    %v2101 = vtanh.pop %v2097
    %v2102 = vtanh.pop %v2098
    %v2103 = vld [vmem:[%s8] sm:$0x1]
    %v2105 = vlaneseq
    %v2106 = vshrl.u32 %v2105, 7
    %v2107 = vsub.s32 0, %v2106
    %v2108 = vrot.slane %v2103, %v2107
    %v2110 = vmul.f32 %v2099, %v2108
    %v2111 = vmul.f32 %v2100, %v2108
    %v2112 = vmul.f32 %v2101, %v2108
    %v2113 = vmul.f32 %v2102, %v2108
    %v2114 = vsel %vm332, %v2110, 0.0
    %2115 = vadd.xlane.f32.xlu0 %v2114
    %v2116 = vpop.xlane.xlu0 %2115
    %v2117 = vsel %vm332, %v2111, 0.0
    %2118 = vadd.xlane.f32.xlu0 %v2117
    %v2119 = vpop.xlane.xlu0 %2118
    %v2120 = vsel %vm332, %v2112, 0.0
    %2121 = vadd.xlane.f32.xlu0 %v2120
    %v2122 = vpop.xlane.xlu0 %2121
    %v2123 = vsel %vm332, %v2113, 0.0
    %2124 = vadd.xlane.f32.xlu0 %v2123
    %v2125 = vpop.xlane.xlu0 %2124
    %v2131 = vunpack.c.l.s4 839922192
    %v2132 = vunpack.c.0.s8 %v2131
    %v2133 = vlaneseq
    %v2134 = vshrl.u32 %v2133, 7
    %v2135 = vsub.s32 %v2132, %v2134
    %v2136 = vrot.slane %v2116, %v2135
    %v2138 = vunpack.c.l.s4 1985246804
    %v2139 = vunpack.c.0.s8 %v2138
    %v2140 = vlaneseq
    %v2141 = vshrl.u32 %v2140, 7
    %v2142 = vsub.s32 %v2139, %v2141
    %v2143 = vrot.slane %v2116, %v2142
    %v2145 = vunpack.c.l.s4 839922192
    %v2146 = vunpack.c.0.s8 %v2145
    %v2147 = vlaneseq
    %v2148 = vshrl.u32 %v2147, 7
    %v2149 = vsub.s32 %v2146, %v2148
    %v2150 = vrot.slane %v2119, %v2149
    %v2152 = vunpack.c.l.s4 1985246804
    %v2153 = vunpack.c.0.s8 %v2152
    %v2154 = vlaneseq
    %v2155 = vshrl.u32 %v2154, 7
    %v2156 = vsub.s32 %v2153, %v2155
    %v2157 = vrot.slane %v2119, %v2156
    %v2159 = vunpack.c.l.s4 839922192
    %v2160 = vunpack.c.0.s8 %v2159
    %v2161 = vlaneseq
    %v2162 = vshrl.u32 %v2161, 7
    %v2163 = vsub.s32 %v2160, %v2162
    %v2164 = vrot.slane %v2122, %v2163
    %v2166 = vunpack.c.l.s4 1985246804
    %v2167 = vunpack.c.0.s8 %v2166
    %v2168 = vlaneseq
    %v2169 = vshrl.u32 %v2168, 7
    %v2170 = vsub.s32 %v2167, %v2169
    %v2171 = vrot.slane %v2122, %v2170
    %v2173 = vunpack.c.l.s4 839922192
    %v2174 = vunpack.c.0.s8 %v2173
    %v2175 = vlaneseq
    %v2176 = vshrl.u32 %v2175, 7
    %v2177 = vsub.s32 %v2174, %v2176
    %v2178 = vrot.slane %v2125, %v2177
    %v2180 = vunpack.c.l.s4 1985246804
    %v2181 = vunpack.c.0.s8 %v2180
    %v2182 = vlaneseq
    %v2183 = vshrl.u32 %v2182, 7
    %v2184 = vsub.s32 %v2181, %v2183
    %v2185 = vrot.slane %v2125, %v2184
    %2186 = vset.pattern.permute.xlu0 0
    %2187 = vperm.xlu0 %2186, %v2136
    %v2188 = vpop.permute.xlu0 %2187
    %2189 = vset.pattern.permute.xlu0 0
    %2190 = vperm.xlu0 %2189, %v2143
    %v2191 = vpop.permute.xlu0 %2190
    %2192 = vset.pattern.permute.xlu0 0
    %2193 = vperm.xlu0 %2192, %v2150
    %v2194 = vpop.permute.xlu0 %2193
    %2195 = vset.pattern.permute.xlu0 0
    %2196 = vperm.xlu0 %2195, %v2157
    %v2197 = vpop.permute.xlu0 %2196
    %2198 = vset.pattern.permute.xlu0 0
    %2199 = vperm.xlu0 %2198, %v2164
    %v2200 = vpop.permute.xlu0 %2199
    %2201 = vset.pattern.permute.xlu0 0
    %2202 = vperm.xlu0 %2201, %v2171
    %v2203 = vpop.permute.xlu0 %2202
    %2204 = vset.pattern.permute.xlu0 0
    %2205 = vperm.xlu0 %2204, %v2178
    %v2206 = vpop.permute.xlu0 %2205
    %2207 = vset.pattern.permute.xlu0 0
    %2208 = vperm.xlu0 %2207, %v2185
    %v2209 = vpop.permute.xlu0 %2208
    %v2210 = vlaneseq
    %v2211 = vand.u32 %v2210, 127
    %v2212 = vlaneseq
    %v2213 = vshrl.u32 %v2212, 7
    %v2214 = vsub.s32 %v2211, %v2213
    %v2215 = vrot.slane %v2188, %v2214
    %v2216 = vlaneseq
    %v2217 = vshrl.u32 %v2216, 7
    %v2218 = vsub.s32 %v2211, %v2217
    %v2219 = vrot.slane %v2191, %v2218
    %v2220 = vlaneseq
    %v2221 = vshrl.u32 %v2220, 7
    %v2222 = vsub.s32 %v2211, %v2221
    %v2223 = vrot.slane %v2194, %v2222
    %v2224 = vlaneseq
    %v2225 = vshrl.u32 %v2224, 7
    %v2226 = vsub.s32 %v2211, %v2225
    %v2227 = vrot.slane %v2197, %v2226
    %v2228 = vlaneseq
    %v2229 = vshrl.u32 %v2228, 7
    %v2230 = vsub.s32 %v2211, %v2229
    %v2231 = vrot.slane %v2200, %v2230
    %v2232 = vlaneseq
    %v2233 = vshrl.u32 %v2232, 7
    %v2234 = vsub.s32 %v2211, %v2233
    %v2235 = vrot.slane %v2203, %v2234
    %v2236 = vlaneseq
    %v2237 = vshrl.u32 %v2236, 7
    %v2238 = vsub.s32 %v2211, %v2237
    %v2239 = vrot.slane %v2206, %v2238
    %v2240 = vlaneseq
    %v2241 = vshrl.u32 %v2240, 7
    %v2242 = vsub.s32 %v2211, %v2241
    %v2243 = vrot.slane %v2209, %v2242
    %vm2244 = vcmask 1041409
    %v2245 = vsel %vm2244, %v2219, %v2215
    %vm2246 = vcmask 1042434
    %v2247 = vsel %vm2246, %v2223, %v2245
    %vm2248 = vcmask 1043459
    %v2249 = vsel %vm2248, %v2227, %v2247
    %vm2250 = vcmask 1044484
    %v2251 = vsel %vm2250, %v2231, %v2249
    %vm2252 = vcmask 1045509
    %v2253 = vsel %vm2252, %v2235, %v2251
    %vm2254 = vcmask 1046534
    %v2255 = vsel %vm2254, %v2239, %v2253
    %vm2256 = vcmask 1047559
    %v2257 = vsel %vm2256, %v2243, %v2255
    %vm2259 = vcmask 31744
    %2260 = vst.msk [vmem:[#allocation6] sm:$0xff] %vm2259, %v2257
    %v2261 = vld [vmem:[#allocation6] sm:$0xff]
    %v2262 = vsel %vm2259, %v2261, -inf
    %v2263 = vrot.slane %v2262, 4
    %v2264 = vmax.f32 %v2262, %v2263
    %v2265 = vrot.slane %v2264, 2
    %v2266 = vmax.f32 %v2264, %v2265
    %v2267 = vrot.slane %v2266, 1
    %v2268 = vmax.f32 %v2266, %v2267
    %v2269 = vsub.f32 %v2261, %v2268
    %v2270 = vmul.f32 %v2269, 1.442695
    %v2271 = vpow.pop %v2270
    %v2272 = vsel %vm2259, %v2271, 0.0
    %v2273 = vrot.slane %v2272, 4
    %v2274 = vadd.f32 %v2272, %v2273
    %v2275 = vrot.slane %v2274, 2
    %v2276 = vadd.f32 %v2274, %v2275
    %v2277 = vrot.slane %v2276, 1
    %v2278 = vadd.f32 %v2276, %v2277
    %v2279 = vrcp.pop %v2278
    %v2280 = vmul.f32 %v2271, %v2279
    %2281 = vst.msk [vmem:[#allocation6] sm:$0xff] %vm2259, %v2280
    %v2282 = vld [vmem:[#allocation6] sm:$0xff]
    %v2283 = vlaneseq
    %v2284 = vshrl.u32 %v2283, 7
    %v2285 = vsub.s32 0, %v2284
    %v2286 = vrot.slane %v2282, %v2285
    %2288 = vbcast.lane.b32.xlu0 %v2286, 256
    %v2289 = vpop.permute.xlu0 %2288
    %v2290 = vlaneseq
    %v2291 = vshrl.u32 %v2290, 7
    %v2292 = vsub.s32 1, %v2291
    %v2293 = vrot.slane %v2282, %v2292
    %2295 = vbcast.lane.b32.xlu0 %v2293, 256
    %v2296 = vpop.permute.xlu0 %2295
    %v2297 = vlaneseq
    %v2298 = vshrl.u32 %v2297, 7
    %v2299 = vsub.s32 2, %v2298
    %v2300 = vrot.slane %v2282, %v2299
    %2302 = vbcast.lane.b32.xlu0 %v2300, 256
    %v2303 = vpop.permute.xlu0 %2302
    %v2304 = vlaneseq
    %v2305 = vshrl.u32 %v2304, 7
    %v2306 = vsub.s32 3, %v2305
    %v2307 = vrot.slane %v2282, %v2306
    %2309 = vbcast.lane.b32.xlu0 %v2307, 256
    %v2310 = vpop.permute.xlu0 %2309
    %v2311 = vlaneseq
    %v2312 = vshrl.u32 %v2311, 7
    %v2313 = vsub.s32 4, %v2312
    %v2314 = vrot.slane %v2282, %v2313
    %2316 = vbcast.lane.b32.xlu0 %v2314, 256
    %v2317 = vpop.permute.xlu0 %2316
    %v2318 = vlaneseq
    %v2319 = vshrl.u32 %v2318, 7
    %v2320 = vsub.s32 5, %v2319
    %v2321 = vrot.slane %v2282, %v2320
    %2323 = vbcast.lane.b32.xlu0 %v2321, 256
    %v2324 = vpop.permute.xlu0 %2323
    %v2325 = vlaneseq
    %v2326 = vshrl.u32 %v2325, 7
    %v2327 = vsub.s32 6, %v2326
    %v2328 = vrot.slane %v2282, %v2327
    %2330 = vbcast.lane.b32.xlu0 %v2328, 256
    %v2331 = vpop.permute.xlu0 %2330
    %v2332 = vlaneseq
    %v2333 = vshrl.u32 %v2332, 7
    %v2334 = vsub.s32 7, %v2333
    %v2335 = vrot.slane %v2282, %v2334
    %2337 = vbcast.lane.b32.xlu0 %v2335, 256
    %v2338 = vpop.permute.xlu0 %2337
    %v2339 = vld [vmem:[#allocation4] sm:$0x3]
    %v2340 = vld [vmem:[#allocation4 + $0x2] sm:$0x3]
    %v2341 = vld [vmem:[#allocation4 + $0x4] sm:$0x3]
    %v2342 = vld [vmem:[#allocation4 + $0x6] sm:$0x3]
    %v2343 = vld [vmem:[#allocation4 + $0x8] sm:$0x3]
    %v2344 = vld [vmem:[#allocation4 + $0xa] sm:$0x3]
    %v2345 = vld [vmem:[#allocation4 + $0xc] sm:$0x3]
    %v2346 = vld [vmem:[#allocation4 + $0xe] sm:$0x3]
    %v2347 = vunpack.c.l.bf16 %v2339
    %v2348 = vunpack.c.l.bf16 %v2340
    %v2349 = vunpack.c.l.bf16 %v2341
    %v2350 = vunpack.c.l.bf16 %v2342
    %v2351 = vunpack.c.l.bf16 %v2343
    %v2352 = vunpack.c.l.bf16 %v2344
    %v2353 = vunpack.c.l.bf16 %v2345
    %v2354 = vunpack.c.l.bf16 %v2346
    %v2355 = vld [vmem:[#allocation5] sm:$0x3]
    %v2356 = vld [vmem:[#allocation5 + $0x2] sm:$0x3]
    %v2357 = vld [vmem:[#allocation5 + $0x4] sm:$0x3]
    %v2358 = vld [vmem:[#allocation5 + $0x6] sm:$0x3]
    %v2359 = vld [vmem:[#allocation5 + $0x8] sm:$0x3]
    %v2360 = vld [vmem:[#allocation5 + $0xa] sm:$0x3]
    %v2361 = vld [vmem:[#allocation5 + $0xc] sm:$0x3]
    %v2362 = vld [vmem:[#allocation5 + $0xe] sm:$0x3]
    %v2363 = vunpack.c.l.bf16 %v2355
    %v2364 = vunpack.c.l.bf16 %v2356
    %v2365 = vunpack.c.l.bf16 %v2357
    %v2366 = vunpack.c.l.bf16 %v2358
    %v2367 = vunpack.c.l.bf16 %v2359
    %v2368 = vunpack.c.l.bf16 %v2360
    %v2369 = vunpack.c.l.bf16 %v2361
    %v2370 = vunpack.c.l.bf16 %v2362
    %v2371 = vmul.f32 %v2347, %v2289
    %v2372 = vmul.f32 %v2348, %v2296
    %v2373 = vmul.f32 %v2349, %v2303
    %v2374 = vmul.f32 %v2350, %v2310
    %v2375 = vmul.f32 %v2351, %v2317
    %v2376 = vmul.f32 %v2352, %v2324
    %v2377 = vmul.f32 %v2353, %v2331
    %v2378 = vmul.f32 %v2354, %v2338
    %vm2379 = vcmask 257024
    %v2380 = vsel %vm2379, %v2371, 0.0
    %v2381 = vsel %vm2379, %v2372, 0.0
    %v2382 = vadd.f32 %v2380, %v2381
    %v2383 = vsel %vm2379, %v2373, 0.0
    %v2384 = vadd.f32 %v2382, %v2383
    %v2385 = vsel %vm2379, %v2374, 0.0
    %v2386 = vadd.f32 %v2384, %v2385
    %v2387 = vsel %vm2379, %v2375, 0.0
    %v2388 = vadd.f32 %v2386, %v2387
    %v2389 = vsel %vm2379, %v2376, 0.0
    %v2390 = vadd.f32 %v2388, %v2389
    %v2391 = vsel %vm2379, %v2377, 0.0
    %v2392 = vadd.f32 %v2390, %v2391
    %v2393 = vsel %vm2379, %v2378, 0.0
    %v2394 = vadd.f32 %v2392, %v2393
    %v2395 = vadd.f32 %v2394, 0.0
    %v2396 = vmul.f32 %v2363, %v2289
    %v2397 = vmul.f32 %v2364, %v2296
    %v2398 = vmul.f32 %v2365, %v2303
    %v2399 = vmul.f32 %v2366, %v2310
    %v2400 = vmul.f32 %v2367, %v2317
    %v2401 = vmul.f32 %v2368, %v2324
    %v2402 = vmul.f32 %v2369, %v2331
    %v2403 = vmul.f32 %v2370, %v2338
    %v2404 = vsel %vm2379, %v2396, 0.0
    %v2405 = vsel %vm2379, %v2397, 0.0
    %v2406 = vadd.f32 %v2404, %v2405
    %v2407 = vsel %vm2379, %v2398, 0.0
    %v2408 = vadd.f32 %v2406, %v2407
    %v2409 = vsel %vm2379, %v2399, 0.0
    %v2410 = vadd.f32 %v2408, %v2409
    %v2411 = vsel %vm2379, %v2400, 0.0
    %v2412 = vadd.f32 %v2410, %v2411
    %v2413 = vsel %vm2379, %v2401, 0.0
    %v2414 = vadd.f32 %v2412, %v2413
    %v2415 = vsel %vm2379, %v2402, 0.0
    %v2416 = vadd.f32 %v2414, %v2415
    %v2417 = vsel %vm2379, %v2403, 0.0
    %v2418 = vadd.f32 %v2416, %v2417
    %v2419 = vadd.f32 %v2418, 0.0
    %2420 = vst.msk [vmem:[#allocation7] sm:$0xf] %vm2379, %v2395
    %2422 = vrot.lane.b32.xlu0 %v2419, 32
    %v2423 = vpop.permute.xlu0 %2422
    %vm2425 = vcmask 519424
    %2426 = vst.msk [vmem:[#allocation7] sm:$0xf] %vm2425, %v2423
    // Predicated region
    $region38: #{attention_word_rnn.1} parent=1 // pred_check
      _
    $region39: #{attention_word_rnn.1} parent=1 // pred_check_branch
      %2428 = sbr.rel (0) target = $region41
    $region40: #{attention_word_rnn.1} parent=1 // pred_region
      %s2430 = ssub.s32 64, 64
      %2431 = vsyncadd [#allocation8], %s2430
      %s2433 = sshll.u32 [#allocation7], 4
      %s2434 = int_to_ptr.vmem [resolvable:$true] %s2433
      %2436 = dma.vmem_to_hbm [thread:$0]  %s2434, 64, %s9, [#allocation8]
    $region41: #{attention_word_rnn.1} parent=1 // pred_fallthru
      _
    // Predicated region
    $region42: #{attention_word_rnn.1} parent=1 // pred_check
      _
    $region43: #{attention_word_rnn.1} parent=1 // pred_check_branch
      %2438 = sbr.rel (0) target = $region45
    $region44: #{attention_word_rnn.1} parent=1 // pred_region
      %2439 = dma.done [#allocation8], 64
    $region45: #{attention_word_rnn.1} parent=1 // pred_fallthru
      _
    %2440 = vsyncpa [#allocation8], 1

</llo_original>
